<compile_context>
chip_gen: v7x
topology: tpu7x:2x2x1
jax: 0.10.0
libtpu: 0.0.40
codegen_flags: <defaults>
</compile_context>

<pallas_src>
import functools

import jax
import jax.numpy as jnp
from jax.experimental import pallas as pl
from jax.experimental.pallas import tpu as pltpu


def _layernorm(h, w, b, eps=1e-5):
    # PyTorch nn.LayerNorm: biased variance over the last dim, eps inside sqrt.
    mu = jnp.mean(h, axis=-1, keepdims=True)
    var = jnp.mean(jnp.square(h - mu), axis=-1, keepdims=True)
    return (h - mu) * jax.lax.rsqrt(var + eps) * w + b


def _gelu_exact(x):
    # F.gelu default (exact, erf-based).
    return 0.5 * x * (1.0 + jax.lax.erf(x * (2.0 ** -0.5)))


def transformer_block_kernel(num_heads,
                             x_ref,
                             ln1w_ref, ln1b_ref,
                             wqkv_ref, bqkv_ref,
                             wo_ref, bo_ref,
                             ln2w_ref, ln2b_ref,
                             w1_ref, b1_ref,
                             w2_ref, b2_ref,
                             o_ref):
    f32 = jnp.float32
    bf16 = jnp.bfloat16

    x = x_ref[0]                                   # (N, D) f32
    N, D = x.shape
    H = num_heads
    hd = D // H

    # ---------------- attention branch ----------------
    h1 = _layernorm(x, ln1w_ref[0], ln1b_ref[0])

    # Fused QKV projection: one full-depth (N,D)x(D,3D) matmul, bf16 MXU
    # inputs, f32 accumulation.  1/sqrt(hd) is pre-folded into the Q third of
    # the weights/bias host-side; single lane-dense (1,3D) bias add.
    qkv = jnp.dot(h1.astype(bf16), wqkv_ref[...],
                  preferred_element_type=f32) + bqkv_ref[0]           # (N, 3D)

    # Head-major views: static lane slices + leading-axis stack (layout only,
    # guaranteed-lowerable; no extra matmul work, no activation broadcast).
    def _heads(t):
        return jnp.stack(
            [qkv[:, t * D + h * hd: t * D + (h + 1) * hd] for h in range(H)],
            axis=0)                                                    # (H, N, hd)

    q = _heads(0)
    k = _heads(1)
    v = _heads(2)

    # Scores, batched over heads.
    s = jnp.einsum('hqc,hkc->hqk', q.astype(bf16), k.astype(bf16),
                   preferred_element_type=f32)                         # (H, N, N)

    # Softmax with deferred normalization: unnormalized exp(s-m) feeds the p@v
    # matmul; the reciprocal of the row-sum scales the much smaller context.
    # NOTE: exp/erf kept in f32 for v5e; on v6e/v7x bf16 EUP would be faster.
    m = jnp.max(s, axis=-1, keepdims=True)
    e = jnp.exp(s - m)                                                 # (H, N, N)
    denom = jnp.sum(e, axis=-1, keepdims=True)                         # (H, N, 1)

    ctx = jnp.einsum('hqk,hkc->hqc', e.astype(bf16), v.astype(bf16),
                     preferred_element_type=f32)                       # (H, N, hd)
    ctx = ctx * pl.reciprocal(denom, approx=True)

    # Output projection: relayout ctx to (N, H*hd) = (N, D) (lane concat,
    # layout only) and do ONE full-depth (N,D)x(D,D) matmul against Wo.
    ctx_nd = jnp.concatenate([ctx[h] for h in range(H)], axis=-1)      # (N, D)
    x1 = x + jnp.dot(ctx_nd.astype(bf16), wo_ref[...],
                     preferred_element_type=f32) + bo_ref[0]

    # ---------------- feed-forward branch ----------------
    h2 = _layernorm(x1, ln2w_ref[0], ln2b_ref[0])
    f = jnp.dot(h2.astype(bf16), w1_ref[...],
                preferred_element_type=f32) + b1_ref[0]
    f = _gelu_exact(f)
    f = jnp.dot(f.astype(bf16), w2_ref[...],
                preferred_element_type=f32) + b2_ref[0]

    o_ref[0] = x1 + f


def transformer_block(x, params, num_heads):
    B, N, D = x.shape
    H = num_heads
    hd = D // H
    Hd = params["w1"].shape[1]
    scale = hd ** (-0.5)
    bf16 = jnp.bfloat16

    # Host-side prep (one-time):
    #   * fold 1/sqrt(hd) into the Q third of the fused QKV weight + bias,
    #   * cast matmul weights to bf16 (halves resident weight bytes / DMA),
    #   * biases / LN params stay f32.
    scale_vec = jnp.concatenate(
        [jnp.full((D,), scale, jnp.float32), jnp.ones((2 * D,), jnp.float32)])
    wqkv = (params["wqkv"] * scale_vec[None, :]).astype(bf16)           # (D, 3D)
    bqkv = params["bqkv"] * scale_vec[None, :]                           # (1, 3D) f32
    wo = params["wo"].astype(bf16)                                       # (D, D)
    w1 = params["w1"].astype(bf16)
    w2 = params["w2"].astype(bf16)

    # Advisory cost estimate for the XLA scheduler.
    flops = 2 * B * N * (3 * D * D + D * D + 2 * D * Hd) + 4 * B * H * N * N * hd
    transcendentals = B * H * N * N + B * N * Hd + 2 * B * N + B * H * N
    bytes_accessed = (2 * B * N * D * 4                                  # x in + out (f32)
                      + (4 * D * D + 2 * D * Hd) * 2                     # bf16 weights
                      + (3 * D + Hd + 6 * D) * 4)                        # f32 biases / LN

    def _call(weight_pipeline_mode):
        def const(shape):
            kwargs = {}
            if weight_pipeline_mode is not None:
                kwargs["pipeline_mode"] = weight_pipeline_mode
            n = len(shape)
            return pl.BlockSpec(shape, lambda b, _n=n: (0,) * _n, **kwargs)

        in_specs = [
            pl.BlockSpec((1, N, D), lambda b: (b, 0, 0)),                # x
            const((1, D)), const((1, D)),                                # ln1 gamma, beta
            const((D, 3 * D)), const((1, 3 * D)),                        # fused QKV W (bf16), b (f32)
            const((D, D)), const((1, D)),                                # wo (bf16), bo
            const((1, D)), const((1, D)),                                # ln2 gamma, beta
            const((D, Hd)), const((1, Hd)),                              # fc1 W (bf16), b
            const((Hd, D)), const((1, D)),                               # fc2 W (bf16), b
        ]

        # TODO(synk): for realistic ViT sizes on v7x (64 MiB VMEM, 2 TCs) add a
        # 'parallel' query-tile grid axis and K-tile the FFN hidden dim as an
        # 'arbitrary' reduction axis with an f32 accumulator scratch;
        # unnecessary at these shapes.
        return pl.pallas_call(
            functools.partial(transformer_block_kernel, num_heads),
            out_shape=jax.ShapeDtypeStruct((B, N, D), x.dtype),
            grid=(B,),
            in_specs=in_specs,
            out_specs=pl.BlockSpec((1, N, D), lambda b: (b, 0, 0)),
            compiler_params=pltpu.CompilerParams(
                dimension_semantics=("parallel",),
                vmem_limit_bytes=64 * 1024 * 1024),
            cost_estimate=pl.CostEstimate(flops=flops,
                                          transcendentals=transcendentals,
                                          bytes_accessed=bytes_accessed),
        )(x,
          params["ln1w"], params["ln1b"],
          wqkv, bqkv,
          wo, params["bo"],
          params["ln2w"], params["ln2b"],
          w1, params["b1"],
          w2, params["b2"])

    # Constant-index weight blocks only need a single VMEM buffer; fall back to
    # default double buffering if this JAX build rejects Buffered(1).
    try:
        out = _call(pl.Buffered(1))
        jax.block_until_ready(out)
        return out
    except Exception:
        return _call(None)


def reference_transformer_block(x, p, num_heads):
    """Pure-JAX reference mirroring the PyTorch forward exactly (f32 params)."""
    def ln(h, w, b):
        mu = jnp.mean(h, -1, keepdims=True)
        var = jnp.mean(jnp.square(h - mu), -1, keepdims=True)
        return (h - mu) / jnp.sqrt(var + 1e-5) * w + b

    B, N, D = x.shape
    hd = D // num_heads
    h1 = ln(x, p["ln1w"][0], p["ln1b"][0])
    qkv = h1 @ p["wqkv"] + p["bqkv"][0]
    qkv = qkv.reshape(B, N, 3, num_heads, hd).transpose(2, 0, 3, 1, 4)
    q, k, v = qkv[0], qkv[1], qkv[2]
    attn = jnp.einsum("bhqd,bhkd->bhqk", q, k) * hd ** (-0.5)
    attn = jax.nn.softmax(attn, axis=-1)
    out = jnp.einsum("bhqk,bhkd->bhqd", attn, v).transpose(0, 2, 1, 3).reshape(B, N, D)
    x1 = x + out @ p["wo"] + p["bo"][0]
    h2 = ln(x1, p["ln2w"][0], p["ln2b"][0])
    f = _gelu_exact(h2 @ p["w1"] + p["b1"][0]) @ p["w2"] + p["b2"][0]
    return x1 + f


if __name__ == "__main__":
    B, N, D = 2, 8, 32          # batch, seq_len, embed_dim
    num_heads = 4
    hidden_dim = 64

    key = jax.random.PRNGKey(0)
    ks = jax.random.split(key, 9)

    params = {
        # LayerNorm: gamma=1, beta=0 (PyTorch default init), stored as (1, D)
        "ln1w": jnp.ones((1, D), jnp.float32),
        "ln1b": jnp.zeros((1, D), jnp.float32),
        "ln2w": jnp.ones((1, D), jnp.float32),
        "ln2b": jnp.zeros((1, D), jnp.float32),
        # Linear weights, pre-transposed to (in, out)
        "wqkv": 0.05 * jax.random.normal(ks[0], (D, 3 * D), jnp.float32),
        "bqkv": 0.05 * jax.random.normal(ks[1], (1, 3 * D), jnp.float32),
        "wo":   0.05 * jax.random.normal(ks[2], (D, D), jnp.float32),
        "bo":   0.05 * jax.random.normal(ks[3], (1, D), jnp.float32),
        "w1":   0.05 * jax.random.normal(ks[4], (D, hidden_dim), jnp.float32),
        "b1":   0.05 * jax.random.normal(ks[5], (1, hidden_dim), jnp.float32),
        "w2":   0.05 * jax.random.normal(ks[6], (hidden_dim, D), jnp.float32),
        "b2":   0.05 * jax.random.normal(ks[7], (1, D), jnp.float32),
    }

    x = jax.random.normal(ks[8], (B, N, D), jnp.float32)

    out = jax.block_until_ready(transformer_block(x, params, num_heads))
    ref = jax.block_until_ready(reference_transformer_block(x, params, num_heads))

    assert out.shape == (B, N, D)
    max_err = float(jnp.max(jnp.abs(out - ref)))
    # bf16 MXU inputs + approx reciprocal -> ~1e-2 tolerance vs f32 reference
    assert jnp.allclose(out, ref, atol=1e-2, rtol=1e-2), f"max abs err = {max_err}"

    print("KERNEL_OK")
</pallas_src>

<mosaic_0001>
module attributes {stable_mosaic.version = 11 : i64} {
  func.func @transformer_block_kernel(%arg0: i32, %arg1: memref<1x8x32xf32, #tpu.memory_space<vmem>>, %arg2: memref<1x32xf32, #tpu.memory_space<vmem>>, %arg3: memref<1x32xf32, #tpu.memory_space<vmem>>, %arg4: memref<32x96xbf16, #tpu.memory_space<vmem>>, %arg5: memref<1x96xf32, #tpu.memory_space<vmem>>, %arg6: memref<32x32xbf16, #tpu.memory_space<vmem>>, %arg7: memref<1x32xf32, #tpu.memory_space<vmem>>, %arg8: memref<1x32xf32, #tpu.memory_space<vmem>>, %arg9: memref<1x32xf32, #tpu.memory_space<vmem>>, %arg10: memref<32x64xbf16, #tpu.memory_space<vmem>>, %arg11: memref<1x64xf32, #tpu.memory_space<vmem>>, %arg12: memref<64x32xbf16, #tpu.memory_space<vmem>>, %arg13: memref<1x32xf32, #tpu.memory_space<vmem>>, %arg14: memref<1x8x32xf32, #tpu.memory_space<vmem>>) attributes {dimension_semantics = [#tpu.dimension_semantics<parallel>], iteration_bounds = array<i64: 2>, scalar_prefetch = 0 : i64, scratch_operands = 0 : i64, tpu.core_type = #tpu.core_type<tc>, window_params = [{transform_indices = @transform_0, window_bounds = array<i64: 1, 8, 32>}, {pipeline_mode = #tpu.pipeline_mode<synchronous>, transform_indices = @transform_1, window_bounds = array<i64: 1, 32>}, {pipeline_mode = #tpu.pipeline_mode<synchronous>, transform_indices = @transform_2, window_bounds = array<i64: 1, 32>}, {pipeline_mode = #tpu.pipeline_mode<synchronous>, transform_indices = @transform_3, window_bounds = array<i64: 32, 96>}, {pipeline_mode = #tpu.pipeline_mode<synchronous>, transform_indices = @transform_4, window_bounds = array<i64: 1, 96>}, {pipeline_mode = #tpu.pipeline_mode<synchronous>, transform_indices = @transform_5, window_bounds = array<i64: 32, 32>}, {pipeline_mode = #tpu.pipeline_mode<synchronous>, transform_indices = @transform_6, window_bounds = array<i64: 1, 32>}, {pipeline_mode = #tpu.pipeline_mode<synchronous>, transform_indices = @transform_7, window_bounds = array<i64: 1, 32>}, {pipeline_mode = #tpu.pipeline_mode<synchronous>, transform_indices = @transform_8, window_bounds = array<i64: 1, 32>}, {pipeline_mode = #tpu.pipeline_mode<synchronous>, transform_indices = @transform_9, window_bounds = array<i64: 32, 64>}, {pipeline_mode = #tpu.pipeline_mode<synchronous>, transform_indices = @transform_10, window_bounds = array<i64: 1, 64>}, {pipeline_mode = #tpu.pipeline_mode<synchronous>, transform_indices = @transform_11, window_bounds = array<i64: 64, 32>}, {pipeline_mode = #tpu.pipeline_mode<synchronous>, transform_indices = @transform_12, window_bounds = array<i64: 1, 32>}, {transform_indices = @transform_13, window_bounds = array<i64: 1, 8, 32>}]} {
    %c0 = arith.constant 0 : index
    %c0_0 = arith.constant 0 : index
    %c0_1 = arith.constant 0 : index
    %0 = vector.load %arg1[%c0, %c0_0, %c0_1] : memref<1x8x32xf32, #tpu.memory_space<vmem>>, vector<1x8x32xf32>
    %1 = vector.shape_cast %0 : vector<1x8x32xf32> to vector<8x32xf32>
    %c0_2 = arith.constant 0 : index
    %c0_3 = arith.constant 0 : index
    %2 = vector.load %arg2[%c0_2, %c0_3] : memref<1x32xf32, #tpu.memory_space<vmem>>, vector<1x32xf32>
    %3 = vector.shape_cast %2 : vector<1x32xf32> to vector<32xf32>
    %c0_4 = arith.constant 0 : index
    %c0_5 = arith.constant 0 : index
    %4 = vector.load %arg3[%c0_4, %c0_5] : memref<1x32xf32, #tpu.memory_space<vmem>>, vector<1x32xf32>
    %5 = vector.shape_cast %4 : vector<1x32xf32> to vector<32xf32>
    %cst = arith.constant dense<0.000000e+00> : vector<8xf32>
    %6 = vector.multi_reduction <add>, %1, %cst [1] : vector<8x32xf32> to vector<8xf32>
    %7 = vector.shape_cast %6 : vector<8xf32> to vector<8x1xf32>
    %cst_6 = arith.constant 3.200000e+01 : f32
    %8 = vector.broadcast %cst_6 : f32 to vector<8x1xf32>
    %9 = arith.divf %7, %8 : vector<8x1xf32>
    %10 = vector.broadcast %9 : vector<8x1xf32> to vector<8x32xf32>
    %11 = arith.subf %1, %10 : vector<8x32xf32>
    %12 = arith.mulf %11, %11 : vector<8x32xf32>
    %cst_7 = arith.constant dense<0.000000e+00> : vector<8xf32>
    %13 = vector.multi_reduction <add>, %12, %cst_7 [1] : vector<8x32xf32> to vector<8xf32>
    %14 = vector.shape_cast %13 : vector<8xf32> to vector<8x1xf32>
    %cst_8 = arith.constant 3.200000e+01 : f32
    %15 = vector.broadcast %cst_8 : f32 to vector<8x1xf32>
    %16 = arith.divf %14, %15 : vector<8x1xf32>
    %17 = vector.broadcast %9 : vector<8x1xf32> to vector<8x32xf32>
    %18 = arith.subf %1, %17 : vector<8x32xf32>
    %cst_9 = arith.constant 9.99999974E-6 : f32
    %19 = vector.broadcast %cst_9 : f32 to vector<8x1xf32>
    %20 = arith.addf %16, %19 : vector<8x1xf32>
    %21 = math.rsqrt %20 : vector<8x1xf32>
    %22 = vector.broadcast %21 : vector<8x1xf32> to vector<8x32xf32>
    %23 = arith.mulf %18, %22 : vector<8x32xf32>
    %24 = vector.shape_cast %3 : vector<32xf32> to vector<1x32xf32>
    %25 = vector.broadcast %24 : vector<1x32xf32> to vector<8x32xf32>
    %26 = arith.mulf %23, %25 : vector<8x32xf32>
    %27 = vector.shape_cast %5 : vector<32xf32> to vector<1x32xf32>
    %28 = vector.broadcast %27 : vector<1x32xf32> to vector<8x32xf32>
    %29 = arith.addf %26, %28 : vector<8x32xf32>
    %30 = arith.truncf %29 : vector<8x32xf32> to vector<8x32xbf16>
    %c0_10 = arith.constant 0 : index
    %c0_11 = arith.constant 0 : index
    %31 = vector.load %arg4[%c0_10, %c0_11] : memref<32x96xbf16, #tpu.memory_space<vmem>>, vector<32x96xbf16>
    %cst_12 = arith.constant dense<0.000000e+00> : vector<8x96xf32>
    %32 = tpu.matmul %30, %31, %cst_12 {dimension_numbers = #tpu.dot_dimension_numbers<[1], [0], [0], [1], [0, 0, 1, 1], [], []>} : vector<8x32xbf16>, vector<32x96xbf16>, vector<8x96xf32> -> vector<8x96xf32>
    %c0_13 = arith.constant 0 : index
    %c0_14 = arith.constant 0 : index
    %33 = vector.load %arg5[%c0_13, %c0_14] : memref<1x96xf32, #tpu.memory_space<vmem>>, vector<1x96xf32>
    %34 = vector.shape_cast %33 : vector<1x96xf32> to vector<96xf32>
    %35 = vector.shape_cast %34 : vector<96xf32> to vector<1x96xf32>
    %36 = vector.broadcast %35 : vector<1x96xf32> to vector<8x96xf32>
    %37 = arith.addf %32, %36 : vector<8x96xf32>
    %38 = vector.extract_strided_slice %37 {offsets = [0, 0], sizes = [8, 8], strides = [1, 1]} : vector<8x96xf32> to vector<8x8xf32>
    %39 = vector.extract_strided_slice %37 {offsets = [0, 8], sizes = [8, 8], strides = [1, 1]} : vector<8x96xf32> to vector<8x8xf32>
    %40 = vector.extract_strided_slice %37 {offsets = [0, 16], sizes = [8, 8], strides = [1, 1]} : vector<8x96xf32> to vector<8x8xf32>
    %41 = vector.extract_strided_slice %37 {offsets = [0, 24], sizes = [8, 8], strides = [1, 1]} : vector<8x96xf32> to vector<8x8xf32>
    %42 = vector.shape_cast %38 : vector<8x8xf32> to vector<1x8x8xf32>
    %43 = vector.shape_cast %39 : vector<8x8xf32> to vector<1x8x8xf32>
    %44 = vector.shape_cast %40 : vector<8x8xf32> to vector<1x8x8xf32>
    %45 = vector.shape_cast %41 : vector<8x8xf32> to vector<1x8x8xf32>
    %46 = tpu.concatenate %42, %43, %44, %45 in 0 : vector<1x8x8xf32>, vector<1x8x8xf32>, vector<1x8x8xf32>, vector<1x8x8xf32> -> vector<4x8x8xf32>
    %47 = vector.extract_strided_slice %37 {offsets = [0, 32], sizes = [8, 8], strides = [1, 1]} : vector<8x96xf32> to vector<8x8xf32>
    %48 = vector.extract_strided_slice %37 {offsets = [0, 40], sizes = [8, 8], strides = [1, 1]} : vector<8x96xf32> to vector<8x8xf32>
    %49 = vector.extract_strided_slice %37 {offsets = [0, 48], sizes = [8, 8], strides = [1, 1]} : vector<8x96xf32> to vector<8x8xf32>
    %50 = vector.extract_strided_slice %37 {offsets = [0, 56], sizes = [8, 8], strides = [1, 1]} : vector<8x96xf32> to vector<8x8xf32>
    %51 = vector.shape_cast %47 : vector<8x8xf32> to vector<1x8x8xf32>
    %52 = vector.shape_cast %48 : vector<8x8xf32> to vector<1x8x8xf32>
    %53 = vector.shape_cast %49 : vector<8x8xf32> to vector<1x8x8xf32>
    %54 = vector.shape_cast %50 : vector<8x8xf32> to vector<1x8x8xf32>
    %55 = tpu.concatenate %51, %52, %53, %54 in 0 : vector<1x8x8xf32>, vector<1x8x8xf32>, vector<1x8x8xf32>, vector<1x8x8xf32> -> vector<4x8x8xf32>
    %56 = vector.extract_strided_slice %37 {offsets = [0, 64], sizes = [8, 8], strides = [1, 1]} : vector<8x96xf32> to vector<8x8xf32>
    %57 = vector.extract_strided_slice %37 {offsets = [0, 72], sizes = [8, 8], strides = [1, 1]} : vector<8x96xf32> to vector<8x8xf32>
    %58 = vector.extract_strided_slice %37 {offsets = [0, 80], sizes = [8, 8], strides = [1, 1]} : vector<8x96xf32> to vector<8x8xf32>
    %59 = vector.extract_strided_slice %37 {offsets = [0, 88], sizes = [8, 8], strides = [1, 1]} : vector<8x96xf32> to vector<8x8xf32>
    %60 = vector.shape_cast %56 : vector<8x8xf32> to vector<1x8x8xf32>
    %61 = vector.shape_cast %57 : vector<8x8xf32> to vector<1x8x8xf32>
    %62 = vector.shape_cast %58 : vector<8x8xf32> to vector<1x8x8xf32>
    %63 = vector.shape_cast %59 : vector<8x8xf32> to vector<1x8x8xf32>
    %64 = tpu.concatenate %60, %61, %62, %63 in 0 : vector<1x8x8xf32>, vector<1x8x8xf32>, vector<1x8x8xf32>, vector<1x8x8xf32> -> vector<4x8x8xf32>
    %65 = arith.truncf %46 : vector<4x8x8xf32> to vector<4x8x8xbf16>
    %66 = arith.truncf %55 : vector<4x8x8xf32> to vector<4x8x8xbf16>
    "tpu.trace_start"() <{level = 10 : i32, message = "hqc,hkc->hqk"}> : () -> ()
    %cst_15 = arith.constant dense<0.000000e+00> : vector<4x8x8xf32>
    %67 = tpu.matmul %65, %66, %cst_15 {dimension_numbers = #tpu.dot_dimension_numbers<[2], [2], [1], [1], [0, 0, 0, 1, 1, 1], [0], [0]>} : vector<4x8x8xbf16>, vector<4x8x8xbf16>, vector<4x8x8xf32> -> vector<4x8x8xf32>
    "tpu.trace_stop"() : () -> ()
    %cst_16 = arith.constant dense<0xFF800000> : vector<4x8xf32>
    %68 = vector.multi_reduction <maximumf>, %67, %cst_16 [2] : vector<4x8x8xf32> to vector<4x8xf32>
    %69 = vector.shape_cast %68 : vector<4x8xf32> to vector<4x8x1xf32>
    %70 = vector.broadcast %69 : vector<4x8x1xf32> to vector<4x8x8xf32>
    %71 = arith.subf %67, %70 : vector<4x8x8xf32>
    %72 = math.exp %71 : vector<4x8x8xf32>
    %cst_17 = arith.constant dense<0.000000e+00> : vector<4x8xf32>
    %73 = vector.multi_reduction <add>, %72, %cst_17 [2] : vector<4x8x8xf32> to vector<4x8xf32>
    %74 = vector.shape_cast %73 : vector<4x8xf32> to vector<4x8x1xf32>
    %75 = arith.truncf %72 : vector<4x8x8xf32> to vector<4x8x8xbf16>
    %76 = arith.truncf %64 : vector<4x8x8xf32> to vector<4x8x8xbf16>
    "tpu.trace_start"() <{level = 10 : i32, message = "hqk,hkc->hqc"}> : () -> ()
    %cst_18 = arith.constant dense<0.000000e+00> : vector<4x8x8xf32>
    %77 = tpu.matmul %75, %76, %cst_18 {dimension_numbers = #tpu.dot_dimension_numbers<[2], [1], [1], [2], [0, 0, 0, 1, 1, 2], [0], [0]>} : vector<4x8x8xbf16>, vector<4x8x8xbf16>, vector<4x8x8xf32> -> vector<4x8x8xf32>
    "tpu.trace_stop"() : () -> ()
    %78 = tpu.reciprocal %74 {approx = true} : vector<4x8x1xf32> -> vector<4x8x1xf32>
    %79 = vector.broadcast %78 : vector<4x8x1xf32> to vector<4x8x8xf32>
    %80 = arith.mulf %77, %79 : vector<4x8x8xf32>
    %81 = vector.extract_strided_slice %80 {offsets = [0, 0, 0], sizes = [1, 8, 8], strides = [1, 1, 1]} : vector<4x8x8xf32> to vector<1x8x8xf32>
    %82 = vector.shape_cast %81 : vector<1x8x8xf32> to vector<8x8xf32>
    %83 = vector.extract_strided_slice %80 {offsets = [1, 0, 0], sizes = [1, 8, 8], strides = [1, 1, 1]} : vector<4x8x8xf32> to vector<1x8x8xf32>
    %84 = vector.shape_cast %83 : vector<1x8x8xf32> to vector<8x8xf32>
    %85 = vector.extract_strided_slice %80 {offsets = [2, 0, 0], sizes = [1, 8, 8], strides = [1, 1, 1]} : vector<4x8x8xf32> to vector<1x8x8xf32>
    %86 = vector.shape_cast %85 : vector<1x8x8xf32> to vector<8x8xf32>
    %87 = vector.extract_strided_slice %80 {offsets = [3, 0, 0], sizes = [1, 8, 8], strides = [1, 1, 1]} : vector<4x8x8xf32> to vector<1x8x8xf32>
    %88 = vector.shape_cast %87 : vector<1x8x8xf32> to vector<8x8xf32>
    %89 = tpu.concatenate %82, %84, %86, %88 in 1 : vector<8x8xf32>, vector<8x8xf32>, vector<8x8xf32>, vector<8x8xf32> -> vector<8x32xf32>
    %90 = arith.truncf %89 : vector<8x32xf32> to vector<8x32xbf16>
    %c0_19 = arith.constant 0 : index
    %c0_20 = arith.constant 0 : index
    %91 = vector.load %arg6[%c0_19, %c0_20] : memref<32x32xbf16, #tpu.memory_space<vmem>>, vector<32x32xbf16>
    %cst_21 = arith.constant dense<0.000000e+00> : vector<8x32xf32>
    %92 = tpu.matmul %90, %91, %cst_21 {dimension_numbers = #tpu.dot_dimension_numbers<[1], [0], [0], [1], [0, 0, 1, 1], [], []>} : vector<8x32xbf16>, vector<32x32xbf16>, vector<8x32xf32> -> vector<8x32xf32>
    %93 = arith.addf %1, %92 : vector<8x32xf32>
    %c0_22 = arith.constant 0 : index
    %c0_23 = arith.constant 0 : index
    %94 = vector.load %arg7[%c0_22, %c0_23] : memref<1x32xf32, #tpu.memory_space<vmem>>, vector<1x32xf32>
    %95 = vector.shape_cast %94 : vector<1x32xf32> to vector<32xf32>
    %96 = vector.shape_cast %95 : vector<32xf32> to vector<1x32xf32>
    %97 = vector.broadcast %96 : vector<1x32xf32> to vector<8x32xf32>
    %98 = arith.addf %93, %97 : vector<8x32xf32>
    %c0_24 = arith.constant 0 : index
    %c0_25 = arith.constant 0 : index
    %99 = vector.load %arg8[%c0_24, %c0_25] : memref<1x32xf32, #tpu.memory_space<vmem>>, vector<1x32xf32>
    %100 = vector.shape_cast %99 : vector<1x32xf32> to vector<32xf32>
    %c0_26 = arith.constant 0 : index
    %c0_27 = arith.constant 0 : index
    %101 = vector.load %arg9[%c0_26, %c0_27] : memref<1x32xf32, #tpu.memory_space<vmem>>, vector<1x32xf32>
    %102 = vector.shape_cast %101 : vector<1x32xf32> to vector<32xf32>
    %cst_28 = arith.constant dense<0.000000e+00> : vector<8xf32>
    %103 = vector.multi_reduction <add>, %98, %cst_28 [1] : vector<8x32xf32> to vector<8xf32>
    %104 = vector.shape_cast %103 : vector<8xf32> to vector<8x1xf32>
    %cst_29 = arith.constant 3.200000e+01 : f32
    %105 = vector.broadcast %cst_29 : f32 to vector<8x1xf32>
    %106 = arith.divf %104, %105 : vector<8x1xf32>
    %107 = vector.broadcast %106 : vector<8x1xf32> to vector<8x32xf32>
    %108 = arith.subf %98, %107 : vector<8x32xf32>
    %109 = arith.mulf %108, %108 : vector<8x32xf32>
    %cst_30 = arith.constant dense<0.000000e+00> : vector<8xf32>
    %110 = vector.multi_reduction <add>, %109, %cst_30 [1] : vector<8x32xf32> to vector<8xf32>
    %111 = vector.shape_cast %110 : vector<8xf32> to vector<8x1xf32>
    %cst_31 = arith.constant 3.200000e+01 : f32
    %112 = vector.broadcast %cst_31 : f32 to vector<8x1xf32>
    %113 = arith.divf %111, %112 : vector<8x1xf32>
    %114 = vector.broadcast %106 : vector<8x1xf32> to vector<8x32xf32>
    %115 = arith.subf %98, %114 : vector<8x32xf32>
    %cst_32 = arith.constant 9.99999974E-6 : f32
    %116 = vector.broadcast %cst_32 : f32 to vector<8x1xf32>
    %117 = arith.addf %113, %116 : vector<8x1xf32>
    %118 = math.rsqrt %117 : vector<8x1xf32>
    %119 = vector.broadcast %118 : vector<8x1xf32> to vector<8x32xf32>
    %120 = arith.mulf %115, %119 : vector<8x32xf32>
    %121 = vector.shape_cast %100 : vector<32xf32> to vector<1x32xf32>
    %122 = vector.broadcast %121 : vector<1x32xf32> to vector<8x32xf32>
    %123 = arith.mulf %120, %122 : vector<8x32xf32>
    %124 = vector.shape_cast %102 : vector<32xf32> to vector<1x32xf32>
    %125 = vector.broadcast %124 : vector<1x32xf32> to vector<8x32xf32>
    %126 = arith.addf %123, %125 : vector<8x32xf32>
    %127 = arith.truncf %126 : vector<8x32xf32> to vector<8x32xbf16>
    %c0_33 = arith.constant 0 : index
    %c0_34 = arith.constant 0 : index
    %128 = vector.load %arg10[%c0_33, %c0_34] : memref<32x64xbf16, #tpu.memory_space<vmem>>, vector<32x64xbf16>
    %cst_35 = arith.constant dense<0.000000e+00> : vector<8x64xf32>
    %129 = tpu.matmul %127, %128, %cst_35 {dimension_numbers = #tpu.dot_dimension_numbers<[1], [0], [0], [1], [0, 0, 1, 1], [], []>} : vector<8x32xbf16>, vector<32x64xbf16>, vector<8x64xf32> -> vector<8x64xf32>
    %c0_36 = arith.constant 0 : index
    %c0_37 = arith.constant 0 : index
    %130 = vector.load %arg11[%c0_36, %c0_37] : memref<1x64xf32, #tpu.memory_space<vmem>>, vector<1x64xf32>
    %131 = vector.shape_cast %130 : vector<1x64xf32> to vector<64xf32>
    %132 = vector.shape_cast %131 : vector<64xf32> to vector<1x64xf32>
    %133 = vector.broadcast %132 : vector<1x64xf32> to vector<8x64xf32>
    %134 = arith.addf %129, %133 : vector<8x64xf32>
    %cst_38 = arith.constant 5.000000e-01 : f32
    %135 = vector.broadcast %cst_38 : f32 to vector<8x64xf32>
    %136 = arith.mulf %135, %134 : vector<8x64xf32>
    %cst_39 = arith.constant 0.707106769 : f32
    %137 = vector.broadcast %cst_39 : f32 to vector<8x64xf32>
    %138 = arith.mulf %134, %137 : vector<8x64xf32>
    %139 = math.erf %138 : vector<8x64xf32>
    %cst_40 = arith.constant 1.000000e+00 : f32
    %140 = vector.broadcast %cst_40 : f32 to vector<8x64xf32>
    %141 = arith.addf %140, %139 : vector<8x64xf32>
    %142 = arith.mulf %136, %141 : vector<8x64xf32>
    %143 = arith.truncf %142 : vector<8x64xf32> to vector<8x64xbf16>
    %c0_41 = arith.constant 0 : index
    %c0_42 = arith.constant 0 : index
    %144 = vector.load %arg12[%c0_41, %c0_42] : memref<64x32xbf16, #tpu.memory_space<vmem>>, vector<64x32xbf16>
    %cst_43 = arith.constant dense<0.000000e+00> : vector<8x32xf32>
    %145 = tpu.matmul %143, %144, %cst_43 {dimension_numbers = #tpu.dot_dimension_numbers<[1], [0], [0], [1], [0, 0, 1, 1], [], []>} : vector<8x64xbf16>, vector<64x32xbf16>, vector<8x32xf32> -> vector<8x32xf32>
    %c0_44 = arith.constant 0 : index
    %c0_45 = arith.constant 0 : index
    %146 = vector.load %arg13[%c0_44, %c0_45] : memref<1x32xf32, #tpu.memory_space<vmem>>, vector<1x32xf32>
    %147 = vector.shape_cast %146 : vector<1x32xf32> to vector<32xf32>
    %148 = vector.shape_cast %147 : vector<32xf32> to vector<1x32xf32>
    %149 = vector.broadcast %148 : vector<1x32xf32> to vector<8x32xf32>
    %150 = arith.addf %145, %149 : vector<8x32xf32>
    %151 = arith.addf %98, %150 : vector<8x32xf32>
    %c0_46 = arith.constant 0 : index
    %c0_47 = arith.constant 0 : index
    %c0_48 = arith.constant 0 : index
    %152 = vector.load %arg14[%c0_46, %c0_47, %c0_48] : memref<1x8x32xf32, #tpu.memory_space<vmem>>, vector<1x8x32xf32>
    %153 = vector.shape_cast %152 : vector<1x8x32xf32> to vector<8x32xf32>
    %154 = vector.shape_cast %151 : vector<8x32xf32> to vector<1x8x32xf32>
    tpu.vector_store %arg14[%c0_46, %c0_47, %c0_48], %154 {strides = array<i32>} : memref<1x8x32xf32, #tpu.memory_space<vmem>>, vector<1x8x32xf32>,
    return
  }
  func.func @transform_0(%arg0: i32) -> (i32, i32, i32) {
    %c0_i32 = arith.constant 0 : i32
    %c0_i32_0 = arith.constant 0 : i32
    %c0_i32_1 = arith.constant 0 : i32
    return %arg0, %c0_i32, %c0_i32_0 : i32, i32, i32
  }
  func.func @transform_1(%arg0: i32) -> (i32, i32) {
    %c0_i32 = arith.constant 0 : i32
    %c0_i32_0 = arith.constant 0 : i32
    %c0_i32_1 = arith.constant 0 : i32
    return %c0_i32, %c0_i32_0 : i32, i32
  }
  func.func @transform_2(%arg0: i32) -> (i32, i32) {
    %c0_i32 = arith.constant 0 : i32
    %c0_i32_0 = arith.constant 0 : i32
    %c0_i32_1 = arith.constant 0 : i32
    return %c0_i32, %c0_i32_0 : i32, i32
  }
  func.func @transform_3(%arg0: i32) -> (i32, i32) {
    %c0_i32 = arith.constant 0 : i32
    %c0_i32_0 = arith.constant 0 : i32
    %c0_i32_1 = arith.constant 0 : i32
    return %c0_i32, %c0_i32_0 : i32, i32
  }
  func.func @transform_4(%arg0: i32) -> (i32, i32) {
    %c0_i32 = arith.constant 0 : i32
    %c0_i32_0 = arith.constant 0 : i32
    %c0_i32_1 = arith.constant 0 : i32
    return %c0_i32, %c0_i32_0 : i32, i32
  }
  func.func @transform_5(%arg0: i32) -> (i32, i32) {
    %c0_i32 = arith.constant 0 : i32
    %c0_i32_0 = arith.constant 0 : i32
    %c0_i32_1 = arith.constant 0 : i32
    return %c0_i32, %c0_i32_0 : i32, i32
  }
  func.func @transform_6(%arg0: i32) -> (i32, i32) {
    %c0_i32 = arith.constant 0 : i32
    %c0_i32_0 = arith.constant 0 : i32
    %c0_i32_1 = arith.constant 0 : i32
    return %c0_i32, %c0_i32_0 : i32, i32
  }
  func.func @transform_7(%arg0: i32) -> (i32, i32) {
    %c0_i32 = arith.constant 0 : i32
    %c0_i32_0 = arith.constant 0 : i32
    %c0_i32_1 = arith.constant 0 : i32
    return %c0_i32, %c0_i32_0 : i32, i32
  }
  func.func @transform_8(%arg0: i32) -> (i32, i32) {
    %c0_i32 = arith.constant 0 : i32
    %c0_i32_0 = arith.constant 0 : i32
    %c0_i32_1 = arith.constant 0 : i32
    return %c0_i32, %c0_i32_0 : i32, i32
  }
  func.func @transform_9(%arg0: i32) -> (i32, i32) {
    %c0_i32 = arith.constant 0 : i32
    %c0_i32_0 = arith.constant 0 : i32
    %c0_i32_1 = arith.constant 0 : i32
    return %c0_i32, %c0_i32_0 : i32, i32
  }
  func.func @transform_10(%arg0: i32) -> (i32, i32) {
    %c0_i32 = arith.constant 0 : i32
    %c0_i32_0 = arith.constant 0 : i32
    %c0_i32_1 = arith.constant 0 : i32
    return %c0_i32, %c0_i32_0 : i32, i32
  }
  func.func @transform_11(%arg0: i32) -> (i32, i32) {
    %c0_i32 = arith.constant 0 : i32
    %c0_i32_0 = arith.constant 0 : i32
    %c0_i32_1 = arith.constant 0 : i32
    return %c0_i32, %c0_i32_0 : i32, i32
  }
  func.func @transform_12(%arg0: i32) -> (i32, i32) {
    %c0_i32 = arith.constant 0 : i32
    %c0_i32_0 = arith.constant 0 : i32
    %c0_i32_1 = arith.constant 0 : i32
    return %c0_i32, %c0_i32_0 : i32, i32
  }
  func.func @transform_13(%arg0: i32) -> (i32, i32, i32) {
    %c0_i32 = arith.constant 0 : i32
    %c0_i32_0 = arith.constant 0 : i32
    %c0_i32_1 = arith.constant 0 : i32
    return %arg0, %c0_i32, %c0_i32_0 : i32, i32, i32
  }
}

module attributes {stable_mosaic.version = 11 : i64} {
  func.func @transformer_block_kernel(%arg0: i32, %arg1: memref<1x8x32xf32, #tpu.memory_space<vmem>>, %arg2: memref<1x32xf32, #tpu.memory_space<vmem>>, %arg3: memref<1x32xf32, #tpu.memory_space<vmem>>, %arg4: memref<32x96xbf16, #tpu.memory_space<vmem>>, %arg5: memref<1x96xf32, #tpu.memory_space<vmem>>, %arg6: memref<32x32xbf16, #tpu.memory_space<vmem>>, %arg7: memref<1x32xf32, #tpu.memory_space<vmem>>, %arg8: memref<1x32xf32, #tpu.memory_space<vmem>>, %arg9: memref<1x32xf32, #tpu.memory_space<vmem>>, %arg10: memref<32x64xbf16, #tpu.memory_space<vmem>>, %arg11: memref<1x64xf32, #tpu.memory_space<vmem>>, %arg12: memref<64x32xbf16, #tpu.memory_space<vmem>>, %arg13: memref<1x32xf32, #tpu.memory_space<vmem>>, %arg14: memref<1x8x32xf32, #tpu.memory_space<vmem>>) attributes {dimension_semantics = [#tpu.dimension_semantics<parallel>], iteration_bounds = array<i64: 2>, scalar_prefetch = 0 : i64, scratch_operands = 0 : i64, tpu.core_type = #tpu.core_type<tc>, window_params = [{transform_indices = @transform_0, window_bounds = array<i64: 1, 8, 32>}, {pipeline_mode = #tpu.pipeline_mode<synchronous>, transform_indices = @transform_1, window_bounds = array<i64: 1, 32>}, {pipeline_mode = #tpu.pipeline_mode<synchronous>, transform_indices = @transform_2, window_bounds = array<i64: 1, 32>}, {pipeline_mode = #tpu.pipeline_mode<synchronous>, transform_indices = @transform_3, window_bounds = array<i64: 32, 96>}, {pipeline_mode = #tpu.pipeline_mode<synchronous>, transform_indices = @transform_4, window_bounds = array<i64: 1, 96>}, {pipeline_mode = #tpu.pipeline_mode<synchronous>, transform_indices = @transform_5, window_bounds = array<i64: 32, 32>}, {pipeline_mode = #tpu.pipeline_mode<synchronous>, transform_indices = @transform_6, window_bounds = array<i64: 1, 32>}, {pipeline_mode = #tpu.pipeline_mode<synchronous>, transform_indices = @transform_7, window_bounds = array<i64: 1, 32>}, {pipeline_mode = #tpu.pipeline_mode<synchronous>, transform_indices = @transform_8, window_bounds = array<i64: 1, 32>}, {pipeline_mode = #tpu.pipeline_mode<synchronous>, transform_indices = @transform_9, window_bounds = array<i64: 32, 64>}, {pipeline_mode = #tpu.pipeline_mode<synchronous>, transform_indices = @transform_10, window_bounds = array<i64: 1, 64>}, {pipeline_mode = #tpu.pipeline_mode<synchronous>, transform_indices = @transform_11, window_bounds = array<i64: 64, 32>}, {pipeline_mode = #tpu.pipeline_mode<synchronous>, transform_indices = @transform_12, window_bounds = array<i64: 1, 32>}, {transform_indices = @transform_13, window_bounds = array<i64: 1, 8, 32>}]} {
    %c0 = arith.constant 0 : index
    %c0_0 = arith.constant 0 : index
    %c0_1 = arith.constant 0 : index
    %0 = vector.load %arg1[%c0, %c0_0, %c0_1] : memref<1x8x32xf32, #tpu.memory_space<vmem>>, vector<1x8x32xf32>
    %1 = vector.shape_cast %0 : vector<1x8x32xf32> to vector<8x32xf32>
    %c0_2 = arith.constant 0 : index
    %c0_3 = arith.constant 0 : index
    %2 = vector.load %arg2[%c0_2, %c0_3] : memref<1x32xf32, #tpu.memory_space<vmem>>, vector<1x32xf32>
    %3 = vector.shape_cast %2 : vector<1x32xf32> to vector<32xf32>
    %c0_4 = arith.constant 0 : index
    %c0_5 = arith.constant 0 : index
    %4 = vector.load %arg3[%c0_4, %c0_5] : memref<1x32xf32, #tpu.memory_space<vmem>>, vector<1x32xf32>
    %5 = vector.shape_cast %4 : vector<1x32xf32> to vector<32xf32>
    %cst = arith.constant dense<0.000000e+00> : vector<8xf32>
    %6 = vector.multi_reduction <add>, %1, %cst [1] : vector<8x32xf32> to vector<8xf32>
    %7 = vector.shape_cast %6 : vector<8xf32> to vector<8x1xf32>
    %cst_6 = arith.constant 3.200000e+01 : f32
    %8 = vector.broadcast %cst_6 : f32 to vector<8x1xf32>
    %9 = arith.divf %7, %8 : vector<8x1xf32>
    %10 = vector.broadcast %9 : vector<8x1xf32> to vector<8x32xf32>
    %11 = arith.subf %1, %10 : vector<8x32xf32>
    %12 = arith.mulf %11, %11 : vector<8x32xf32>
    %cst_7 = arith.constant dense<0.000000e+00> : vector<8xf32>
    %13 = vector.multi_reduction <add>, %12, %cst_7 [1] : vector<8x32xf32> to vector<8xf32>
    %14 = vector.shape_cast %13 : vector<8xf32> to vector<8x1xf32>
    %cst_8 = arith.constant 3.200000e+01 : f32
    %15 = vector.broadcast %cst_8 : f32 to vector<8x1xf32>
    %16 = arith.divf %14, %15 : vector<8x1xf32>
    %17 = vector.broadcast %9 : vector<8x1xf32> to vector<8x32xf32>
    %18 = arith.subf %1, %17 : vector<8x32xf32>
    %cst_9 = arith.constant 9.99999974E-6 : f32
    %19 = vector.broadcast %cst_9 : f32 to vector<8x1xf32>
    %20 = arith.addf %16, %19 : vector<8x1xf32>
    %21 = math.rsqrt %20 : vector<8x1xf32>
    %22 = vector.broadcast %21 : vector<8x1xf32> to vector<8x32xf32>
    %23 = arith.mulf %18, %22 : vector<8x32xf32>
    %24 = vector.shape_cast %3 : vector<32xf32> to vector<1x32xf32>
    %25 = vector.broadcast %24 : vector<1x32xf32> to vector<8x32xf32>
    %26 = arith.mulf %23, %25 : vector<8x32xf32>
    %27 = vector.shape_cast %5 : vector<32xf32> to vector<1x32xf32>
    %28 = vector.broadcast %27 : vector<1x32xf32> to vector<8x32xf32>
    %29 = arith.addf %26, %28 : vector<8x32xf32>
    %30 = arith.truncf %29 : vector<8x32xf32> to vector<8x32xbf16>
    %c0_10 = arith.constant 0 : index
    %c0_11 = arith.constant 0 : index
    %31 = vector.load %arg4[%c0_10, %c0_11] : memref<32x96xbf16, #tpu.memory_space<vmem>>, vector<32x96xbf16>
    %cst_12 = arith.constant dense<0.000000e+00> : vector<8x96xf32>
    %32 = tpu.matmul %30, %31, %cst_12 {dimension_numbers = #tpu.dot_dimension_numbers<[1], [0], [0], [1], [0, 0, 1, 1], [], []>} : vector<8x32xbf16>, vector<32x96xbf16>, vector<8x96xf32> -> vector<8x96xf32>
    %c0_13 = arith.constant 0 : index
    %c0_14 = arith.constant 0 : index
    %33 = vector.load %arg5[%c0_13, %c0_14] : memref<1x96xf32, #tpu.memory_space<vmem>>, vector<1x96xf32>
    %34 = vector.shape_cast %33 : vector<1x96xf32> to vector<96xf32>
    %35 = vector.shape_cast %34 : vector<96xf32> to vector<1x96xf32>
    %36 = vector.broadcast %35 : vector<1x96xf32> to vector<8x96xf32>
    %37 = arith.addf %32, %36 : vector<8x96xf32>
    %38 = vector.extract_strided_slice %37 {offsets = [0, 0], sizes = [8, 8], strides = [1, 1]} : vector<8x96xf32> to vector<8x8xf32>
    %39 = vector.extract_strided_slice %37 {offsets = [0, 8], sizes = [8, 8], strides = [1, 1]} : vector<8x96xf32> to vector<8x8xf32>
    %40 = vector.extract_strided_slice %37 {offsets = [0, 16], sizes = [8, 8], strides = [1, 1]} : vector<8x96xf32> to vector<8x8xf32>
    %41 = vector.extract_strided_slice %37 {offsets = [0, 24], sizes = [8, 8], strides = [1, 1]} : vector<8x96xf32> to vector<8x8xf32>
    %42 = vector.shape_cast %38 : vector<8x8xf32> to vector<1x8x8xf32>
    %43 = vector.shape_cast %39 : vector<8x8xf32> to vector<1x8x8xf32>
    %44 = vector.shape_cast %40 : vector<8x8xf32> to vector<1x8x8xf32>
    %45 = vector.shape_cast %41 : vector<8x8xf32> to vector<1x8x8xf32>
    %46 = tpu.concatenate %42, %43, %44, %45 in 0 : vector<1x8x8xf32>, vector<1x8x8xf32>, vector<1x8x8xf32>, vector<1x8x8xf32> -> vector<4x8x8xf32>
    %47 = vector.extract_strided_slice %37 {offsets = [0, 32], sizes = [8, 8], strides = [1, 1]} : vector<8x96xf32> to vector<8x8xf32>
    %48 = vector.extract_strided_slice %37 {offsets = [0, 40], sizes = [8, 8], strides = [1, 1]} : vector<8x96xf32> to vector<8x8xf32>
    %49 = vector.extract_strided_slice %37 {offsets = [0, 48], sizes = [8, 8], strides = [1, 1]} : vector<8x96xf32> to vector<8x8xf32>
    %50 = vector.extract_strided_slice %37 {offsets = [0, 56], sizes = [8, 8], strides = [1, 1]} : vector<8x96xf32> to vector<8x8xf32>
    %51 = vector.shape_cast %47 : vector<8x8xf32> to vector<1x8x8xf32>
    %52 = vector.shape_cast %48 : vector<8x8xf32> to vector<1x8x8xf32>
    %53 = vector.shape_cast %49 : vector<8x8xf32> to vector<1x8x8xf32>
    %54 = vector.shape_cast %50 : vector<8x8xf32> to vector<1x8x8xf32>
    %55 = tpu.concatenate %51, %52, %53, %54 in 0 : vector<1x8x8xf32>, vector<1x8x8xf32>, vector<1x8x8xf32>, vector<1x8x8xf32> -> vector<4x8x8xf32>
    %56 = vector.extract_strided_slice %37 {offsets = [0, 64], sizes = [8, 8], strides = [1, 1]} : vector<8x96xf32> to vector<8x8xf32>
    %57 = vector.extract_strided_slice %37 {offsets = [0, 72], sizes = [8, 8], strides = [1, 1]} : vector<8x96xf32> to vector<8x8xf32>
    %58 = vector.extract_strided_slice %37 {offsets = [0, 80], sizes = [8, 8], strides = [1, 1]} : vector<8x96xf32> to vector<8x8xf32>
    %59 = vector.extract_strided_slice %37 {offsets = [0, 88], sizes = [8, 8], strides = [1, 1]} : vector<8x96xf32> to vector<8x8xf32>
    %60 = vector.shape_cast %56 : vector<8x8xf32> to vector<1x8x8xf32>
    %61 = vector.shape_cast %57 : vector<8x8xf32> to vector<1x8x8xf32>
    %62 = vector.shape_cast %58 : vector<8x8xf32> to vector<1x8x8xf32>
    %63 = vector.shape_cast %59 : vector<8x8xf32> to vector<1x8x8xf32>
    %64 = tpu.concatenate %60, %61, %62, %63 in 0 : vector<1x8x8xf32>, vector<1x8x8xf32>, vector<1x8x8xf32>, vector<1x8x8xf32> -> vector<4x8x8xf32>
    %65 = arith.truncf %46 : vector<4x8x8xf32> to vector<4x8x8xbf16>
    %66 = arith.truncf %55 : vector<4x8x8xf32> to vector<4x8x8xbf16>
    "tpu.trace_start"() <{level = 10 : i32, message = "hqc,hkc->hqk"}> : () -> ()
    %cst_15 = arith.constant dense<0.000000e+00> : vector<4x8x8xf32>
    %67 = tpu.matmul %65, %66, %cst_15 {dimension_numbers = #tpu.dot_dimension_numbers<[2], [2], [1], [1], [0, 0, 0, 1, 1, 1], [0], [0]>} : vector<4x8x8xbf16>, vector<4x8x8xbf16>, vector<4x8x8xf32> -> vector<4x8x8xf32>
    "tpu.trace_stop"() : () -> ()
    %cst_16 = arith.constant dense<0xFF800000> : vector<4x8xf32>
    %68 = vector.multi_reduction <maximumf>, %67, %cst_16 [2] : vector<4x8x8xf32> to vector<4x8xf32>
    %69 = vector.shape_cast %68 : vector<4x8xf32> to vector<4x8x1xf32>
    %70 = vector.broadcast %69 : vector<4x8x1xf32> to vector<4x8x8xf32>
    %71 = arith.subf %67, %70 : vector<4x8x8xf32>
    %72 = math.exp %71 : vector<4x8x8xf32>
    %cst_17 = arith.constant dense<0.000000e+00> : vector<4x8xf32>
    %73 = vector.multi_reduction <add>, %72, %cst_17 [2] : vector<4x8x8xf32> to vector<4x8xf32>
    %74 = vector.shape_cast %73 : vector<4x8xf32> to vector<4x8x1xf32>
    %75 = arith.truncf %72 : vector<4x8x8xf32> to vector<4x8x8xbf16>
    %76 = arith.truncf %64 : vector<4x8x8xf32> to vector<4x8x8xbf16>
    "tpu.trace_start"() <{level = 10 : i32, message = "hqk,hkc->hqc"}> : () -> ()
    %cst_18 = arith.constant dense<0.000000e+00> : vector<4x8x8xf32>
    %77 = tpu.matmul %75, %76, %cst_18 {dimension_numbers = #tpu.dot_dimension_numbers<[2], [1], [1], [2], [0, 0, 0, 1, 1, 2], [0], [0]>} : vector<4x8x8xbf16>, vector<4x8x8xbf16>, vector<4x8x8xf32> -> vector<4x8x8xf32>
    "tpu.trace_stop"() : () -> ()
    %78 = tpu.reciprocal %74 {approx = true} : vector<4x8x1xf32> -> vector<4x8x1xf32>
    %79 = vector.broadcast %78 : vector<4x8x1xf32> to vector<4x8x8xf32>
    %80 = arith.mulf %77, %79 : vector<4x8x8xf32>
    %81 = vector.extract_strided_slice %80 {offsets = [0, 0, 0], sizes = [1, 8, 8], strides = [1, 1, 1]} : vector<4x8x8xf32> to vector<1x8x8xf32>
    %82 = vector.shape_cast %81 : vector<1x8x8xf32> to vector<8x8xf32>
    %83 = vector.extract_strided_slice %80 {offsets = [1, 0, 0], sizes = [1, 8, 8], strides = [1, 1, 1]} : vector<4x8x8xf32> to vector<1x8x8xf32>
    %84 = vector.shape_cast %83 : vector<1x8x8xf32> to vector<8x8xf32>
    %85 = vector.extract_strided_slice %80 {offsets = [2, 0, 0], sizes = [1, 8, 8], strides = [1, 1, 1]} : vector<4x8x8xf32> to vector<1x8x8xf32>
    %86 = vector.shape_cast %85 : vector<1x8x8xf32> to vector<8x8xf32>
    %87 = vector.extract_strided_slice %80 {offsets = [3, 0, 0], sizes = [1, 8, 8], strides = [1, 1, 1]} : vector<4x8x8xf32> to vector<1x8x8xf32>
    %88 = vector.shape_cast %87 : vector<1x8x8xf32> to vector<8x8xf32>
    %89 = tpu.concatenate %82, %84, %86, %88 in 1 : vector<8x8xf32>, vector<8x8xf32>, vector<8x8xf32>, vector<8x8xf32> -> vector<8x32xf32>
    %90 = arith.truncf %89 : vector<8x32xf32> to vector<8x32xbf16>
    %c0_19 = arith.constant 0 : index
    %c0_20 = arith.constant 0 : index
    %91 = vector.load %arg6[%c0_19, %c0_20] : memref<32x32xbf16, #tpu.memory_space<vmem>>, vector<32x32xbf16>
    %cst_21 = arith.constant dense<0.000000e+00> : vector<8x32xf32>
    %92 = tpu.matmul %90, %91, %cst_21 {dimension_numbers = #tpu.dot_dimension_numbers<[1], [0], [0], [1], [0, 0, 1, 1], [], []>} : vector<8x32xbf16>, vector<32x32xbf16>, vector<8x32xf32> -> vector<8x32xf32>
    %93 = arith.addf %1, %92 : vector<8x32xf32>
    %c0_22 = arith.constant 0 : index
    %c0_23 = arith.constant 0 : index
    %94 = vector.load %arg7[%c0_22, %c0_23] : memref<1x32xf32, #tpu.memory_space<vmem>>, vector<1x32xf32>
    %95 = vector.shape_cast %94 : vector<1x32xf32> to vector<32xf32>
    %96 = vector.shape_cast %95 : vector<32xf32> to vector<1x32xf32>
    %97 = vector.broadcast %96 : vector<1x32xf32> to vector<8x32xf32>
    %98 = arith.addf %93, %97 : vector<8x32xf32>
    %c0_24 = arith.constant 0 : index
    %c0_25 = arith.constant 0 : index
    %99 = vector.load %arg8[%c0_24, %c0_25] : memref<1x32xf32, #tpu.memory_space<vmem>>, vector<1x32xf32>
    %100 = vector.shape_cast %99 : vector<1x32xf32> to vector<32xf32>
    %c0_26 = arith.constant 0 : index
    %c0_27 = arith.constant 0 : index
    %101 = vector.load %arg9[%c0_26, %c0_27] : memref<1x32xf32, #tpu.memory_space<vmem>>, vector<1x32xf32>
    %102 = vector.shape_cast %101 : vector<1x32xf32> to vector<32xf32>
    %cst_28 = arith.constant dense<0.000000e+00> : vector<8xf32>
    %103 = vector.multi_reduction <add>, %98, %cst_28 [1] : vector<8x32xf32> to vector<8xf32>
    %104 = vector.shape_cast %103 : vector<8xf32> to vector<8x1xf32>
    %cst_29 = arith.constant 3.200000e+01 : f32
    %105 = vector.broadcast %cst_29 : f32 to vector<8x1xf32>
    %106 = arith.divf %104, %105 : vector<8x1xf32>
    %107 = vector.broadcast %106 : vector<8x1xf32> to vector<8x32xf32>
    %108 = arith.subf %98, %107 : vector<8x32xf32>
    %109 = arith.mulf %108, %108 : vector<8x32xf32>
    %cst_30 = arith.constant dense<0.000000e+00> : vector<8xf32>
    %110 = vector.multi_reduction <add>, %109, %cst_30 [1] : vector<8x32xf32> to vector<8xf32>
    %111 = vector.shape_cast %110 : vector<8xf32> to vector<8x1xf32>
    %cst_31 = arith.constant 3.200000e+01 : f32
    %112 = vector.broadcast %cst_31 : f32 to vector<8x1xf32>
    %113 = arith.divf %111, %112 : vector<8x1xf32>
    %114 = vector.broadcast %106 : vector<8x1xf32> to vector<8x32xf32>
    %115 = arith.subf %98, %114 : vector<8x32xf32>
    %cst_32 = arith.constant 9.99999974E-6 : f32
    %116 = vector.broadcast %cst_32 : f32 to vector<8x1xf32>
    %117 = arith.addf %113, %116 : vector<8x1xf32>
    %118 = math.rsqrt %117 : vector<8x1xf32>
    %119 = vector.broadcast %118 : vector<8x1xf32> to vector<8x32xf32>
    %120 = arith.mulf %115, %119 : vector<8x32xf32>
    %121 = vector.shape_cast %100 : vector<32xf32> to vector<1x32xf32>
    %122 = vector.broadcast %121 : vector<1x32xf32> to vector<8x32xf32>
    %123 = arith.mulf %120, %122 : vector<8x32xf32>
    %124 = vector.shape_cast %102 : vector<32xf32> to vector<1x32xf32>
    %125 = vector.broadcast %124 : vector<1x32xf32> to vector<8x32xf32>
    %126 = arith.addf %123, %125 : vector<8x32xf32>
    %127 = arith.truncf %126 : vector<8x32xf32> to vector<8x32xbf16>
    %c0_33 = arith.constant 0 : index
    %c0_34 = arith.constant 0 : index
    %128 = vector.load %arg10[%c0_33, %c0_34] : memref<32x64xbf16, #tpu.memory_space<vmem>>, vector<32x64xbf16>
    %cst_35 = arith.constant dense<0.000000e+00> : vector<8x64xf32>
    %129 = tpu.matmul %127, %128, %cst_35 {dimension_numbers = #tpu.dot_dimension_numbers<[1], [0], [0], [1], [0, 0, 1, 1], [], []>} : vector<8x32xbf16>, vector<32x64xbf16>, vector<8x64xf32> -> vector<8x64xf32>
    %c0_36 = arith.constant 0 : index
    %c0_37 = arith.constant 0 : index
    %130 = vector.load %arg11[%c0_36, %c0_37] : memref<1x64xf32, #tpu.memory_space<vmem>>, vector<1x64xf32>
    %131 = vector.shape_cast %130 : vector<1x64xf32> to vector<64xf32>
    %132 = vector.shape_cast %131 : vector<64xf32> to vector<1x64xf32>
    %133 = vector.broadcast %132 : vector<1x64xf32> to vector<8x64xf32>
    %134 = arith.addf %129, %133 : vector<8x64xf32>
    %cst_38 = arith.constant 5.000000e-01 : f32
    %135 = vector.broadcast %cst_38 : f32 to vector<8x64xf32>
    %136 = arith.mulf %135, %134 : vector<8x64xf32>
    %cst_39 = arith.constant 0.707106769 : f32
    %137 = vector.broadcast %cst_39 : f32 to vector<8x64xf32>
    %138 = arith.mulf %134, %137 : vector<8x64xf32>
    %139 = math.erf %138 : vector<8x64xf32>
    %cst_40 = arith.constant 1.000000e+00 : f32
    %140 = vector.broadcast %cst_40 : f32 to vector<8x64xf32>
    %141 = arith.addf %140, %139 : vector<8x64xf32>
    %142 = arith.mulf %136, %141 : vector<8x64xf32>
    %143 = arith.truncf %142 : vector<8x64xf32> to vector<8x64xbf16>
    %c0_41 = arith.constant 0 : index
    %c0_42 = arith.constant 0 : index
    %144 = vector.load %arg12[%c0_41, %c0_42] : memref<64x32xbf16, #tpu.memory_space<vmem>>, vector<64x32xbf16>
    %cst_43 = arith.constant dense<0.000000e+00> : vector<8x32xf32>
    %145 = tpu.matmul %143, %144, %cst_43 {dimension_numbers = #tpu.dot_dimension_numbers<[1], [0], [0], [1], [0, 0, 1, 1], [], []>} : vector<8x64xbf16>, vector<64x32xbf16>, vector<8x32xf32> -> vector<8x32xf32>
    %c0_44 = arith.constant 0 : index
    %c0_45 = arith.constant 0 : index
    %146 = vector.load %arg13[%c0_44, %c0_45] : memref<1x32xf32, #tpu.memory_space<vmem>>, vector<1x32xf32>
    %147 = vector.shape_cast %146 : vector<1x32xf32> to vector<32xf32>
    %148 = vector.shape_cast %147 : vector<32xf32> to vector<1x32xf32>
    %149 = vector.broadcast %148 : vector<1x32xf32> to vector<8x32xf32>
    %150 = arith.addf %145, %149 : vector<8x32xf32>
    %151 = arith.addf %98, %150 : vector<8x32xf32>
    %c0_46 = arith.constant 0 : index
    %c0_47 = arith.constant 0 : index
    %c0_48 = arith.constant 0 : index
    %152 = vector.load %arg14[%c0_46, %c0_47, %c0_48] : memref<1x8x32xf32, #tpu.memory_space<vmem>>, vector<1x8x32xf32>
    %153 = vector.shape_cast %152 : vector<1x8x32xf32> to vector<8x32xf32>
    %154 = vector.shape_cast %151 : vector<8x32xf32> to vector<1x8x32xf32>
    tpu.vector_store %arg14[%c0_46, %c0_47, %c0_48], %154 {strides = array<i32>} : memref<1x8x32xf32, #tpu.memory_space<vmem>>, vector<1x8x32xf32>,
    return
  }
  func.func @transform_0(%arg0: i32) -> (i32, i32, i32) {
    %c0_i32 = arith.constant 0 : i32
    %c0_i32_0 = arith.constant 0 : i32
    %c0_i32_1 = arith.constant 0 : i32
    return %arg0, %c0_i32, %c0_i32_0 : i32, i32, i32
  }
  func.func @transform_1(%arg0: i32) -> (i32, i32) {
    %c0_i32 = arith.constant 0 : i32
    %c0_i32_0 = arith.constant 0 : i32
    %c0_i32_1 = arith.constant 0 : i32
    return %c0_i32, %c0_i32_0 : i32, i32
  }
  func.func @transform_2(%arg0: i32) -> (i32, i32) {
    %c0_i32 = arith.constant 0 : i32
    %c0_i32_0 = arith.constant 0 : i32
    %c0_i32_1 = arith.constant 0 : i32
    return %c0_i32, %c0_i32_0 : i32, i32
  }
  func.func @transform_3(%arg0: i32) -> (i32, i32) {
    %c0_i32 = arith.constant 0 : i32
    %c0_i32_0 = arith.constant 0 : i32
    %c0_i32_1 = arith.constant 0 : i32
    return %c0_i32, %c0_i32_0 : i32, i32
  }
  func.func @transform_4(%arg0: i32) -> (i32, i32) {
    %c0_i32 = arith.constant 0 : i32
    %c0_i32_0 = arith.constant 0 : i32
    %c0_i32_1 = arith.constant 0 : i32
    return %c0_i32, %c0_i32_0 : i32, i32
  }
  func.func @transform_5(%arg0: i32) -> (i32, i32) {
    %c0_i32 = arith.constant 0 : i32
    %c0_i32_0 = arith.constant 0 : i32
    %c0_i32_1 = arith.constant 0 : i32
    return %c0_i32, %c0_i32_0 : i32, i32
  }
  func.func @transform_6(%arg0: i32) -> (i32, i32) {
    %c0_i32 = arith.constant 0 : i32
    %c0_i32_0 = arith.constant 0 : i32
    %c0_i32_1 = arith.constant 0 : i32
    return %c0_i32, %c0_i32_0 : i32, i32
  }
  func.func @transform_7(%arg0: i32) -> (i32, i32) {
    %c0_i32 = arith.constant 0 : i32
    %c0_i32_0 = arith.constant 0 : i32
    %c0_i32_1 = arith.constant 0 : i32
    return %c0_i32, %c0_i32_0 : i32, i32
  }
  func.func @transform_8(%arg0: i32) -> (i32, i32) {
    %c0_i32 = arith.constant 0 : i32
    %c0_i32_0 = arith.constant 0 : i32
    %c0_i32_1 = arith.constant 0 : i32
    return %c0_i32, %c0_i32_0 : i32, i32
  }
  func.func @transform_9(%arg0: i32) -> (i32, i32) {
    %c0_i32 = arith.constant 0 : i32
    %c0_i32_0 = arith.constant 0 : i32
    %c0_i32_1 = arith.constant 0 : i32
    return %c0_i32, %c0_i32_0 : i32, i32
  }
  func.func @transform_10(%arg0: i32) -> (i32, i32) {
    %c0_i32 = arith.constant 0 : i32
    %c0_i32_0 = arith.constant 0 : i32
    %c0_i32_1 = arith.constant 0 : i32
    return %c0_i32, %c0_i32_0 : i32, i32
  }
  func.func @transform_11(%arg0: i32) -> (i32, i32) {
    %c0_i32 = arith.constant 0 : i32
    %c0_i32_0 = arith.constant 0 : i32
    %c0_i32_1 = arith.constant 0 : i32
    return %c0_i32, %c0_i32_0 : i32, i32
  }
  func.func @transform_12(%arg0: i32) -> (i32, i32) {
    %c0_i32 = arith.constant 0 : i32
    %c0_i32_0 = arith.constant 0 : i32
    %c0_i32_1 = arith.constant 0 : i32
    return %c0_i32, %c0_i32_0 : i32, i32
  }
  func.func @transform_13(%arg0: i32) -> (i32, i32, i32) {
    %c0_i32 = arith.constant 0 : i32
    %c0_i32_0 = arith.constant 0 : i32
    %c0_i32_1 = arith.constant 0 : i32
    return %arg0, %c0_i32, %c0_i32_0 : i32, i32, i32
  }
}

</mosaic_0001>

<llo_original>
// kernel: tpu_custom_call.1
$region0: #{tpu_custom_call.1}
  #allocation0 [shape = 'u32[]', space=smem, size = 0x4, offset = 0x4, fixed_abs, tag = 'smem constant byte address 0x4 - core index']
  #allocation1 [shape = 'u32[144,128]{1,0:T(1,128)}', space=vmem, size = 0x12000, scoped, tag = 'internal scratch']
  %s0 = inlined_call_operand.hbm [shape: f32[2,8,32], index: 0, kind: input, shape index: {}]
  %s1 = inlined_call_operand.hbm [shape: f32[1,32], index: 1, kind: input, shape index: {}]
  %s2 = inlined_call_operand.hbm [shape: f32[1,32], index: 2, kind: input, shape index: {}]
  %s3 = inlined_call_operand.hbm [shape: bf16[32,96], index: 3, kind: input, shape index: {}]
  %s4 = inlined_call_operand.hbm [shape: f32[1,96], index: 4, kind: input, shape index: {}]
  %s5 = inlined_call_operand.hbm [shape: bf16[32,32], index: 5, kind: input, shape index: {}]
  %s6 = inlined_call_operand.hbm [shape: f32[1,32], index: 6, kind: input, shape index: {}]
  %s7 = inlined_call_operand.hbm [shape: f32[1,32], index: 7, kind: input, shape index: {}]
  %s8 = inlined_call_operand.hbm [shape: f32[1,32], index: 8, kind: input, shape index: {}]
  %s9 = inlined_call_operand.hbm [shape: bf16[32,64], index: 9, kind: input, shape index: {}]
  %s10 = inlined_call_operand.hbm [shape: f32[1,64], index: 10, kind: input, shape index: {}]
  %s11 = inlined_call_operand.hbm [shape: bf16[64,32], index: 11, kind: input, shape index: {}]
  %s12 = inlined_call_operand.hbm [shape: f32[1,32], index: 12, kind: input, shape index: {}]
  %s13 = inlined_call_operand.hbm [shape: f32[2,8,32], index: 13, kind: output, shape index: {}]
  %s14 = sld [smem:[#allocation0]]
  $region137: #{tpu_custom_call.1} parent=0
    _
  %s16 = ssub.s32 1, %s14
  %s17 = scalar_select 0, %s16, %s14
  $region1: #{tpu_custom_call.1} parent=0
    #allocation2 [shape = 'u8[8192]{0}', space=vmem, size = 0x2000, scoped, tag = 'input window, operand 0']
    #allocation3 [shape = 's32[2]{0}', space=sflag, size = 0x8, scoped, tag = 'scoped memory for tpu_custom_call.1']
    #allocation4 [shape = 's32[2]{0}', space=sflag, size = 0x8, scoped, tag = 'scoped memory for tpu_custom_call.1']
    #allocation5 [shape = 'u8[512]{0}', space=vmem, size = 0x400, scoped, tag = 'input window, operand 1, single buffered']
    #allocation6 [shape = 's32[1]{0}', space=sflag, size = 0x4, scoped, tag = 'scoped memory for tpu_custom_call.1']
    #allocation7 [shape = 'u8[512]{0}', space=vmem, size = 0x400, scoped, tag = 'input window, operand 2, single buffered']
    #allocation8 [shape = 'u8[8192]{0}', space=vmem, size = 0x2000, scoped, tag = 'input window, operand 3, single buffered']
    #allocation9 [shape = 's32[1]{0}', space=sflag, size = 0x4, scoped, tag = 'scoped memory for tpu_custom_call.1']
    #allocation10 [shape = 'u8[512]{0}', space=vmem, size = 0x400, scoped, tag = 'input window, operand 4, single buffered']
    #allocation11 [shape = 'u8[8192]{0}', space=vmem, size = 0x2000, scoped, tag = 'input window, operand 5, single buffered']
    #allocation12 [shape = 's32[1]{0}', space=sflag, size = 0x4, scoped, tag = 'scoped memory for tpu_custom_call.1']
    #allocation13 [shape = 'u8[512]{0}', space=vmem, size = 0x400, scoped, tag = 'input window, operand 6, single buffered']
    #allocation14 [shape = 'u8[512]{0}', space=vmem, size = 0x400, scoped, tag = 'input window, operand 7, single buffered']
    #allocation15 [shape = 's32[1]{0}', space=sflag, size = 0x4, scoped, tag = 'scoped memory for tpu_custom_call.1']
    #allocation16 [shape = 'u8[512]{0}', space=vmem, size = 0x400, scoped, tag = 'input window, operand 8, single buffered']
    #allocation17 [shape = 'u8[8192]{0}', space=vmem, size = 0x2000, scoped, tag = 'input window, operand 9, single buffered']
    #allocation18 [shape = 's32[1]{0}', space=sflag, size = 0x4, scoped, tag = 'scoped memory for tpu_custom_call.1']
    #allocation19 [shape = 'u8[512]{0}', space=vmem, size = 0x400, scoped, tag = 'input window, operand 10, single buffered']
    #allocation20 [shape = 'u8[16384]{0}', space=vmem, size = 0x4000, scoped, tag = 'input window, operand 11, single buffered']
    #allocation21 [shape = 's32[1]{0}', space=sflag, size = 0x4, scoped, tag = 'scoped memory for tpu_custom_call.1']
    #allocation22 [shape = 'u8[512]{0}', space=vmem, size = 0x400, scoped, tag = 'input window, operand 12, single buffered']
    #allocation23 [shape = 'u8[8192]{0}', space=vmem, size = 0x2000, scoped, tag = 'output window, operand 0']
    %18 = vsyncpa [#allocation3], 0
    %s19 = scalar_lea.sflag [#allocation3], 1
    %20 = vsyncpa %s19, 0
    %21 = vsyncpa [#allocation6], 0
    %22 = vsyncpa [#allocation9], 0
    %23 = vsyncpa [#allocation12], 0
    %24 = vsyncpa [#allocation15], 0
    %25 = vsyncpa [#allocation18], 0
    %26 = vsyncpa [#allocation21], 0
    %27 = vsyncpa [#allocation4], 0
    %s28 = scalar_lea.sflag [#allocation4], 1
    %29 = vsyncpa %s28, 0
    loop: start=0, step=1, limit=4
    $region2: #{tpu_custom_call.1} parent=1 // loop_pre_header
      _
    $region3: #{tpu_custom_call.1} parent=1 // loop_header
      %s31 = sphi 0, %s35
      %p32 = scmp.ge.s32.totalorder %s31, 4
      %s41 = sphi 0, %s43
      %s44 = sphi 0, %s41
      %s45 = sphi 0, %s44
      %s61 = sphi 0, %s45
      %s65 = sphi 0, %s65
      %s67 = sphi 0, %s65
      %s68 = sphi 0, %s67
      %s82 = sphi 0, %s68
      %s86 = sphi 0, %s86
      %s88 = sphi 0, %s86
      %s89 = sphi 0, %s88
      %s103 = sphi 0, %s89
      %s107 = sphi 0, %s107
      %s109 = sphi 0, %s107
      %s110 = sphi 0, %s109
      %s124 = sphi 0, %s110
      %s128 = sphi 0, %s128
      %s130 = sphi 0, %s128
      %s131 = sphi 0, %s130
      %s145 = sphi 0, %s131
      %s149 = sphi 0, %s149
      %s151 = sphi 0, %s149
      %s152 = sphi 0, %s151
      %s166 = sphi 0, %s152
      %s170 = sphi 0, %s170
      %s172 = sphi 0, %s170
      %s173 = sphi 0, %s172
      %s187 = sphi 0, %s173
      %s191 = sphi 0, %s191
      %s193 = sphi 0, %s191
      %s194 = sphi 0, %s193
      %s208 = sphi 0, %s194
      %s212 = sphi 0, %s212
      %s214 = sphi 0, %s212
      %s215 = sphi 0, %s214
      %s229 = sphi 0, %s215
      %s233 = sphi 0, %s233
      %s235 = sphi 0, %s233
      %s236 = sphi 0, %s235
      %s250 = sphi 0, %s236
      %s254 = sphi 0, %s254
      %s256 = sphi 0, %s254
      %s257 = sphi 0, %s256
      %s271 = sphi 0, %s257
      %s275 = sphi 0, %s275
      %s277 = sphi 0, %s275
      %s278 = sphi 0, %s277
      %s292 = sphi 0, %s278
      %s296 = sphi 0, %s296
      %s298 = sphi 0, %s296
      %s299 = sphi 0, %s298
      %s313 = sphi 0, %s299
      %s319 = sphi 0, %s321
      %s322 = sphi 0, %s319
      %s323 = sphi 0, %s322
      %s339 = sphi 0, %s323
    $region4: #{tpu_custom_call.1} parent=1 // loop_header_branch
      %34 = sbr.rel (%p32) target = $region8
    $region5: #{tpu_custom_call.1} parent=1 // loop_body
      %s36 = ssub.s32 %s31, 1
      %s37 = ssub.s32 %s31, 2
      %s38 = sadd.s32 %s31, 1
      %s39 = ssub.s32 %s31, %s38
      %p40 = scmp.eq.s32.totalorder %s39, 0
      %s42 = sadd.s32 %s41, 1
      %s43 = scalar_select %p40, %s41, %s42
      %p46 = pneg %p40
      %p47 = scmp.eq.s32.totalorder %s31, 1
      %p48 = por %p46, %p47
      %p49 = scmp.ne.s32.totalorder %s41, %s44
      %p50 = scmp.eq.s32.totalorder %s31, 0
      %p51 = por %p49, %p50
      %p52 = scmp.ne.s32.totalorder %s41, %s44
      %p53 = scmp.eq.s32.totalorder %s36, 1
      %p54 = por %p52, %p53
      %p55 = scmp.ne.s32.totalorder %s44, %s45
      %p56 = scmp.eq.s32.totalorder %s36, 0
      %p57 = por %p55, %p56
      %p58 = scmp.ne.s32.totalorder %s44, %s45
      %p59 = scmp.eq.s32.totalorder %s37, 1
      %p60 = por %p58, %p59
      %p62 = scmp.ne.s32.totalorder %s45, %s61
      %p63 = scmp.eq.s32.totalorder %s37, 0
      %p64 = por %p62, %p63
      %s66 = sadd.s32 %s65, 1
      %p69 = scmp.eq.s32.totalorder %s31, 1
      %p70 = scmp.ne.s32.totalorder %s65, %s67
      %p71 = scmp.eq.s32.totalorder %s31, 0
      %p72 = por %p70, %p71
      %p73 = scmp.ne.s32.totalorder %s65, %s67
      %p74 = scmp.eq.s32.totalorder %s36, 1
      %p75 = por %p73, %p74
      %p76 = scmp.ne.s32.totalorder %s67, %s68
      %p77 = scmp.eq.s32.totalorder %s36, 0
      %p78 = por %p76, %p77
      %p79 = scmp.ne.s32.totalorder %s67, %s68
      %p80 = scmp.eq.s32.totalorder %s37, 1
      %p81 = por %p79, %p80
      %p83 = scmp.ne.s32.totalorder %s68, %s82
      %p84 = scmp.eq.s32.totalorder %s37, 0
      %p85 = por %p83, %p84
      %s87 = sadd.s32 %s86, 1
      %p90 = scmp.eq.s32.totalorder %s31, 1
      %p91 = scmp.ne.s32.totalorder %s86, %s88
      %p92 = scmp.eq.s32.totalorder %s31, 0
      %p93 = por %p91, %p92
      %p94 = scmp.ne.s32.totalorder %s86, %s88
      %p95 = scmp.eq.s32.totalorder %s36, 1
      %p96 = por %p94, %p95
      %p97 = scmp.ne.s32.totalorder %s88, %s89
      %p98 = scmp.eq.s32.totalorder %s36, 0
      %p99 = por %p97, %p98
      %p100 = scmp.ne.s32.totalorder %s88, %s89
      %p101 = scmp.eq.s32.totalorder %s37, 1
      %p102 = por %p100, %p101
      %p104 = scmp.ne.s32.totalorder %s89, %s103
      %p105 = scmp.eq.s32.totalorder %s37, 0
      %p106 = por %p104, %p105
      %s108 = sadd.s32 %s107, 1
      %p111 = scmp.eq.s32.totalorder %s31, 1
      %p112 = scmp.ne.s32.totalorder %s107, %s109
      %p113 = scmp.eq.s32.totalorder %s31, 0
      %p114 = por %p112, %p113
      %p115 = scmp.ne.s32.totalorder %s107, %s109
      %p116 = scmp.eq.s32.totalorder %s36, 1
      %p117 = por %p115, %p116
      %p118 = scmp.ne.s32.totalorder %s109, %s110
      %p119 = scmp.eq.s32.totalorder %s36, 0
      %p120 = por %p118, %p119
      %p121 = scmp.ne.s32.totalorder %s109, %s110
      %p122 = scmp.eq.s32.totalorder %s37, 1
      %p123 = por %p121, %p122
      %p125 = scmp.ne.s32.totalorder %s110, %s124
      %p126 = scmp.eq.s32.totalorder %s37, 0
      %p127 = por %p125, %p126
      %s129 = sadd.s32 %s128, 1
      %p132 = scmp.eq.s32.totalorder %s31, 1
      %p133 = scmp.ne.s32.totalorder %s128, %s130
      %p134 = scmp.eq.s32.totalorder %s31, 0
      %p135 = por %p133, %p134
      %p136 = scmp.ne.s32.totalorder %s128, %s130
      %p137 = scmp.eq.s32.totalorder %s36, 1
      %p138 = por %p136, %p137
      %p139 = scmp.ne.s32.totalorder %s130, %s131
      %p140 = scmp.eq.s32.totalorder %s36, 0
      %p141 = por %p139, %p140
      %p142 = scmp.ne.s32.totalorder %s130, %s131
      %p143 = scmp.eq.s32.totalorder %s37, 1
      %p144 = por %p142, %p143
      %p146 = scmp.ne.s32.totalorder %s131, %s145
      %p147 = scmp.eq.s32.totalorder %s37, 0
      %p148 = por %p146, %p147
      %s150 = sadd.s32 %s149, 1
      %p153 = scmp.eq.s32.totalorder %s31, 1
      %p154 = scmp.ne.s32.totalorder %s149, %s151
      %p155 = scmp.eq.s32.totalorder %s31, 0
      %p156 = por %p154, %p155
      %p157 = scmp.ne.s32.totalorder %s149, %s151
      %p158 = scmp.eq.s32.totalorder %s36, 1
      %p159 = por %p157, %p158
      %p160 = scmp.ne.s32.totalorder %s151, %s152
      %p161 = scmp.eq.s32.totalorder %s36, 0
      %p162 = por %p160, %p161
      %p163 = scmp.ne.s32.totalorder %s151, %s152
      %p164 = scmp.eq.s32.totalorder %s37, 1
      %p165 = por %p163, %p164
      %p167 = scmp.ne.s32.totalorder %s152, %s166
      %p168 = scmp.eq.s32.totalorder %s37, 0
      %p169 = por %p167, %p168
      %s171 = sadd.s32 %s170, 1
      %p174 = scmp.eq.s32.totalorder %s31, 1
      %p175 = scmp.ne.s32.totalorder %s170, %s172
      %p176 = scmp.eq.s32.totalorder %s31, 0
      %p177 = por %p175, %p176
      %p178 = scmp.ne.s32.totalorder %s170, %s172
      %p179 = scmp.eq.s32.totalorder %s36, 1
      %p180 = por %p178, %p179
      %p181 = scmp.ne.s32.totalorder %s172, %s173
      %p182 = scmp.eq.s32.totalorder %s36, 0
      %p183 = por %p181, %p182
      %p184 = scmp.ne.s32.totalorder %s172, %s173
      %p185 = scmp.eq.s32.totalorder %s37, 1
      %p186 = por %p184, %p185
      %p188 = scmp.ne.s32.totalorder %s173, %s187
      %p189 = scmp.eq.s32.totalorder %s37, 0
      %p190 = por %p188, %p189
      %s192 = sadd.s32 %s191, 1
      %p195 = scmp.eq.s32.totalorder %s31, 1
      %p196 = scmp.ne.s32.totalorder %s191, %s193
      %p197 = scmp.eq.s32.totalorder %s31, 0
      %p198 = por %p196, %p197
      %p199 = scmp.ne.s32.totalorder %s191, %s193
      %p200 = scmp.eq.s32.totalorder %s36, 1
      %p201 = por %p199, %p200
      %p202 = scmp.ne.s32.totalorder %s193, %s194
      %p203 = scmp.eq.s32.totalorder %s36, 0
      %p204 = por %p202, %p203
      %p205 = scmp.ne.s32.totalorder %s193, %s194
      %p206 = scmp.eq.s32.totalorder %s37, 1
      %p207 = por %p205, %p206
      %p209 = scmp.ne.s32.totalorder %s194, %s208
      %p210 = scmp.eq.s32.totalorder %s37, 0
      %p211 = por %p209, %p210
      %s213 = sadd.s32 %s212, 1
      %p216 = scmp.eq.s32.totalorder %s31, 1
      %p217 = scmp.ne.s32.totalorder %s212, %s214
      %p218 = scmp.eq.s32.totalorder %s31, 0
      %p219 = por %p217, %p218
      %p220 = scmp.ne.s32.totalorder %s212, %s214
      %p221 = scmp.eq.s32.totalorder %s36, 1
      %p222 = por %p220, %p221
      %p223 = scmp.ne.s32.totalorder %s214, %s215
      %p224 = scmp.eq.s32.totalorder %s36, 0
      %p225 = por %p223, %p224
      %p226 = scmp.ne.s32.totalorder %s214, %s215
      %p227 = scmp.eq.s32.totalorder %s37, 1
      %p228 = por %p226, %p227
      %p230 = scmp.ne.s32.totalorder %s215, %s229
      %p231 = scmp.eq.s32.totalorder %s37, 0
      %p232 = por %p230, %p231
      %s234 = sadd.s32 %s233, 1
      %p237 = scmp.eq.s32.totalorder %s31, 1
      %p238 = scmp.ne.s32.totalorder %s233, %s235
      %p239 = scmp.eq.s32.totalorder %s31, 0
      %p240 = por %p238, %p239
      %p241 = scmp.ne.s32.totalorder %s233, %s235
      %p242 = scmp.eq.s32.totalorder %s36, 1
      %p243 = por %p241, %p242
      %p244 = scmp.ne.s32.totalorder %s235, %s236
      %p245 = scmp.eq.s32.totalorder %s36, 0
      %p246 = por %p244, %p245
      %p247 = scmp.ne.s32.totalorder %s235, %s236
      %p248 = scmp.eq.s32.totalorder %s37, 1
      %p249 = por %p247, %p248
      %p251 = scmp.ne.s32.totalorder %s236, %s250
      %p252 = scmp.eq.s32.totalorder %s37, 0
      %p253 = por %p251, %p252
      %s255 = sadd.s32 %s254, 1
      %p258 = scmp.eq.s32.totalorder %s31, 1
      %p259 = scmp.ne.s32.totalorder %s254, %s256
      %p260 = scmp.eq.s32.totalorder %s31, 0
      %p261 = por %p259, %p260
      %p262 = scmp.ne.s32.totalorder %s254, %s256
      %p263 = scmp.eq.s32.totalorder %s36, 1
      %p264 = por %p262, %p263
      %p265 = scmp.ne.s32.totalorder %s256, %s257
      %p266 = scmp.eq.s32.totalorder %s36, 0
      %p267 = por %p265, %p266
      %p268 = scmp.ne.s32.totalorder %s256, %s257
      %p269 = scmp.eq.s32.totalorder %s37, 1
      %p270 = por %p268, %p269
      %p272 = scmp.ne.s32.totalorder %s257, %s271
      %p273 = scmp.eq.s32.totalorder %s37, 0
      %p274 = por %p272, %p273
      %s276 = sadd.s32 %s275, 1
      %p279 = scmp.eq.s32.totalorder %s31, 1
      %p280 = scmp.ne.s32.totalorder %s275, %s277
      %p281 = scmp.eq.s32.totalorder %s31, 0
      %p282 = por %p280, %p281
      %p283 = scmp.ne.s32.totalorder %s275, %s277
      %p284 = scmp.eq.s32.totalorder %s36, 1
      %p285 = por %p283, %p284
      %p286 = scmp.ne.s32.totalorder %s277, %s278
      %p287 = scmp.eq.s32.totalorder %s36, 0
      %p288 = por %p286, %p287
      %p289 = scmp.ne.s32.totalorder %s277, %s278
      %p290 = scmp.eq.s32.totalorder %s37, 1
      %p291 = por %p289, %p290
      %p293 = scmp.ne.s32.totalorder %s278, %s292
      %p294 = scmp.eq.s32.totalorder %s37, 0
      %p295 = por %p293, %p294
      %s297 = sadd.s32 %s296, 1
      %p300 = scmp.eq.s32.totalorder %s31, 1
      %p301 = scmp.ne.s32.totalorder %s296, %s298
      %p302 = scmp.eq.s32.totalorder %s31, 0
      %p303 = por %p301, %p302
      %p304 = scmp.ne.s32.totalorder %s296, %s298
      %p305 = scmp.eq.s32.totalorder %s36, 1
      %p306 = por %p304, %p305
      %p307 = scmp.ne.s32.totalorder %s298, %s299
      %p308 = scmp.eq.s32.totalorder %s36, 0
      %p309 = por %p307, %p308
      %p310 = scmp.ne.s32.totalorder %s298, %s299
      %p311 = scmp.eq.s32.totalorder %s37, 1
      %p312 = por %p310, %p311
      %p314 = scmp.ne.s32.totalorder %s299, %s313
      %p315 = scmp.eq.s32.totalorder %s37, 0
      %p316 = por %p314, %p315
      %s317 = ssub.s32 %s31, %s38
      %p318 = scmp.eq.s32.totalorder %s317, 0
      %s320 = sadd.s32 %s319, 1
      %s321 = scalar_select %p318, %s319, %s320
      %p324 = pneg %p318
      %p325 = scmp.eq.s32.totalorder %s31, 1
      %p326 = por %p324, %p325
      %p327 = scmp.ne.s32.totalorder %s319, %s322
      %p328 = scmp.eq.s32.totalorder %s31, 0
      %p329 = por %p327, %p328
      %p330 = scmp.ne.s32.totalorder %s319, %s322
      %p331 = scmp.eq.s32.totalorder %s36, 1
      %p332 = por %p330, %p331
      %p333 = scmp.ne.s32.totalorder %s322, %s323
      %p334 = scmp.eq.s32.totalorder %s36, 0
      %p335 = por %p333, %p334
      %p336 = scmp.ne.s32.totalorder %s322, %s323
      %p337 = scmp.eq.s32.totalorder %s37, 1
      %p338 = por %p336, %p337
      %p340 = scmp.ne.s32.totalorder %s323, %s339
      %p341 = scmp.eq.s32.totalorder %s37, 0
      %p342 = por %p340, %p341
      %p343 = scmp.le.s32.totalorder 1, %s31
      %p344 = scmp.lt.s32.totalorder %s31, 3
      %p345 = pnand %p343, %p344
      %p346 = pneg %p345
      // Predicated region
      $region9: #{tpu_custom_call.1} parent=5 // pred_check
        _
      $region10: #{tpu_custom_call.1} parent=5 // pred_check_branch
        %348 = sbr.rel (%p345) target = $region12
      $region11: #{tpu_custom_call.1} parent=5 // pred_region
        %s349 = ssub.s32 %s31, 1
        // Predicated region
        $region13: #{tpu_custom_call.1} parent=11 // pred_check
          %p350 = pneg %p78
        $region14: #{tpu_custom_call.1} parent=11 // pred_check_branch
          %352 = sbr.rel (%p350) target = $region16
        $region15: #{tpu_custom_call.1} parent=11 // pred_region
          %s354 = ssub.s32 16, 16
          %355 = vsyncadd [#allocation6], %s354
          %s357 = sshll.u32 [#allocation5], 4
          %s358 = int_to_ptr.vmem [resolvable:$true] %s357
          %360 = dma.hbm_to_vmem [thread:$0]  %s1, 16, %s358, [#allocation6]
        $region16: #{tpu_custom_call.1} parent=11 // pred_fallthru
          _
        // Predicated region
        $region17: #{tpu_custom_call.1} parent=11 // pred_check
          %p361 = pneg %p99
        $region18: #{tpu_custom_call.1} parent=11 // pred_check_branch
          %363 = sbr.rel (%p361) target = $region20
        $region19: #{tpu_custom_call.1} parent=11 // pred_region
          %s365 = ssub.s32 16, 16
          %366 = vsyncadd [#allocation6], %s365
          %s368 = sshll.u32 [#allocation7], 4
          %s369 = int_to_ptr.vmem [resolvable:$true] %s368
          %371 = dma.hbm_to_vmem [thread:$0]  %s2, 16, %s369, [#allocation6]
        $region20: #{tpu_custom_call.1} parent=11 // pred_fallthru
          _
        // Predicated region
        $region21: #{tpu_custom_call.1} parent=11 // pred_check
          %p372 = pneg %p120
        $region22: #{tpu_custom_call.1} parent=11 // pred_check_branch
          %374 = sbr.rel (%p372) target = $region24
        $region23: #{tpu_custom_call.1} parent=11 // pred_region
          %s376 = ssub.s32 256, 256
          %377 = vsyncadd [#allocation9], %s376
          %s378 = sshll.u32 [#allocation8], 4
          %s379 = int_to_ptr.vmem [resolvable:$true] %s378
          %384 = dma.hbm_to_vmem [thread:$0]  %s3, 256, %s379, [#allocation9], 64, 64, 4
        $region24: #{tpu_custom_call.1} parent=11 // pred_fallthru
          _
        // Predicated region
        $region25: #{tpu_custom_call.1} parent=11 // pred_check
          %p385 = pneg %p141
        $region26: #{tpu_custom_call.1} parent=11 // pred_check_branch
          %387 = sbr.rel (%p385) target = $region28
        $region27: #{tpu_custom_call.1} parent=11 // pred_region
          %s389 = ssub.s32 16, 16
          %390 = vsyncadd [#allocation9], %s389
          %s392 = sshll.u32 [#allocation10], 4
          %s393 = int_to_ptr.vmem [resolvable:$true] %s392
          %395 = dma.hbm_to_vmem [thread:$0]  %s4, 16, %s393, [#allocation9]
        $region28: #{tpu_custom_call.1} parent=11 // pred_fallthru
          _
        // Predicated region
        $region29: #{tpu_custom_call.1} parent=11 // pred_check
          %p396 = pneg %p162
        $region30: #{tpu_custom_call.1} parent=11 // pred_check_branch
          %398 = sbr.rel (%p396) target = $region32
        $region31: #{tpu_custom_call.1} parent=11 // pred_region
          %s400 = ssub.s32 256, 256
          %401 = vsyncadd [#allocation12], %s400
          %s402 = sshll.u32 [#allocation11], 4
          %s403 = int_to_ptr.vmem [resolvable:$true] %s402
          %408 = dma.hbm_to_vmem [thread:$0]  %s5, 256, %s403, [#allocation12], 64, 64, 4
        $region32: #{tpu_custom_call.1} parent=11 // pred_fallthru
          _
        // Predicated region
        $region33: #{tpu_custom_call.1} parent=11 // pred_check
          %p409 = pneg %p183
        $region34: #{tpu_custom_call.1} parent=11 // pred_check_branch
          %411 = sbr.rel (%p409) target = $region36
        $region35: #{tpu_custom_call.1} parent=11 // pred_region
          %s413 = ssub.s32 16, 16
          %414 = vsyncadd [#allocation12], %s413
          %s416 = sshll.u32 [#allocation13], 4
          %s417 = int_to_ptr.vmem [resolvable:$true] %s416
          %419 = dma.hbm_to_vmem [thread:$0]  %s6, 16, %s417, [#allocation12]
        $region36: #{tpu_custom_call.1} parent=11 // pred_fallthru
          _
        // Predicated region
        $region37: #{tpu_custom_call.1} parent=11 // pred_check
          %p420 = pneg %p204
        $region38: #{tpu_custom_call.1} parent=11 // pred_check_branch
          %422 = sbr.rel (%p420) target = $region40
        $region39: #{tpu_custom_call.1} parent=11 // pred_region
          %s424 = ssub.s32 16, 16
          %425 = vsyncadd [#allocation15], %s424
          %s427 = sshll.u32 [#allocation14], 4
          %s428 = int_to_ptr.vmem [resolvable:$true] %s427
          %430 = dma.hbm_to_vmem [thread:$0]  %s7, 16, %s428, [#allocation15]
        $region40: #{tpu_custom_call.1} parent=11 // pred_fallthru
          _
        // Predicated region
        $region41: #{tpu_custom_call.1} parent=11 // pred_check
          %p431 = pneg %p225
        $region42: #{tpu_custom_call.1} parent=11 // pred_check_branch
          %433 = sbr.rel (%p431) target = $region44
        $region43: #{tpu_custom_call.1} parent=11 // pred_region
          %s435 = ssub.s32 16, 16
          %436 = vsyncadd [#allocation15], %s435
          %s438 = sshll.u32 [#allocation16], 4
          %s439 = int_to_ptr.vmem [resolvable:$true] %s438
          %441 = dma.hbm_to_vmem [thread:$0]  %s8, 16, %s439, [#allocation15]
        $region44: #{tpu_custom_call.1} parent=11 // pred_fallthru
          _
        // Predicated region
        $region45: #{tpu_custom_call.1} parent=11 // pred_check
          %p442 = pneg %p246
        $region46: #{tpu_custom_call.1} parent=11 // pred_check_branch
          %444 = sbr.rel (%p442) target = $region48
        $region47: #{tpu_custom_call.1} parent=11 // pred_region
          %s446 = ssub.s32 256, 256
          %447 = vsyncadd [#allocation18], %s446
          %s448 = sshll.u32 [#allocation17], 4
          %s449 = int_to_ptr.vmem [resolvable:$true] %s448
          %454 = dma.hbm_to_vmem [thread:$0]  %s9, 256, %s449, [#allocation18], 64, 64, 4
        $region48: #{tpu_custom_call.1} parent=11 // pred_fallthru
          _
        // Predicated region
        $region49: #{tpu_custom_call.1} parent=11 // pred_check
          %p455 = pneg %p267
        $region50: #{tpu_custom_call.1} parent=11 // pred_check_branch
          %457 = sbr.rel (%p455) target = $region52
        $region51: #{tpu_custom_call.1} parent=11 // pred_region
          %s459 = ssub.s32 16, 16
          %460 = vsyncadd [#allocation18], %s459
          %s462 = sshll.u32 [#allocation19], 4
          %s463 = int_to_ptr.vmem [resolvable:$true] %s462
          %465 = dma.hbm_to_vmem [thread:$0]  %s10, 16, %s463, [#allocation18]
        $region52: #{tpu_custom_call.1} parent=11 // pred_fallthru
          _
        // Predicated region
        $region53: #{tpu_custom_call.1} parent=11 // pred_check
          %p466 = pneg %p288
        $region54: #{tpu_custom_call.1} parent=11 // pred_check_branch
          %468 = sbr.rel (%p466) target = $region56
        $region55: #{tpu_custom_call.1} parent=11 // pred_region
          %s470 = ssub.s32 512, 512
          %471 = vsyncadd [#allocation21], %s470
          %s472 = sshll.u32 [#allocation20], 4
          %s473 = int_to_ptr.vmem [resolvable:$true] %s472
          %478 = dma.hbm_to_vmem [thread:$0]  %s11, 512, %s473, [#allocation21], 64, 64, 4
        $region56: #{tpu_custom_call.1} parent=11 // pred_fallthru
          _
        // Predicated region
        $region57: #{tpu_custom_call.1} parent=11 // pred_check
          %p479 = pneg %p309
        $region58: #{tpu_custom_call.1} parent=11 // pred_check_branch
          %481 = sbr.rel (%p479) target = $region60
        $region59: #{tpu_custom_call.1} parent=11 // pred_region
          %s483 = ssub.s32 16, 16
          %484 = vsyncadd [#allocation21], %s483
          %s486 = sshll.u32 [#allocation22], 4
          %s487 = int_to_ptr.vmem [resolvable:$true] %s486
          %489 = dma.hbm_to_vmem [thread:$0]  %s12, 16, %s487, [#allocation21]
        $region60: #{tpu_custom_call.1} parent=11 // pred_fallthru
          _
      $region12: #{tpu_custom_call.1} parent=5 // pred_fallthru
        _
      %p490 = scmp.lt.s32.totalorder %s31, 2
      // Predicated region
      $region61: #{tpu_custom_call.1} parent=5 // pred_check
        %p491 = pneg %p490
      $region62: #{tpu_custom_call.1} parent=5 // pred_check_branch
        %493 = sbr.rel (%p491) target = $region64
      $region63: #{tpu_custom_call.1} parent=5 // pred_region
        // Predicated region
        $region65: #{tpu_custom_call.1} parent=63 // pred_check
          %p494 = pneg %p51
        $region66: #{tpu_custom_call.1} parent=63 // pred_check_branch
          %496 = sbr.rel (%p494) target = $region68
        $region67: #{tpu_custom_call.1} parent=63 // pred_region
          %s497 = sand.u32 %s41, 1
          %s498 = scalar_lea.sflag [#allocation3], %s497
          %s499 = sand.u32 %s41, 1
          %s500 = smul.addr %s499, 8
          %s501 = scalar_lea.vmem [#allocation2], %s500
          %s503 = ssub.s32 128, 128
          %504 = vsyncadd %s498, %s503
          %s505 = smul.addr %s31, 128
          %s506 = scalar_lea.hbm %s0, %s505
          %s508 = sshll.u32 %s501, 4
          %s509 = int_to_ptr.vmem [resolvable:$true] %s508
          %511 = dma.hbm_to_vmem [thread:$0]  %s506, 128, %s509, %s498
        $region68: #{tpu_custom_call.1} parent=63 // pred_fallthru
          _
      $region64: #{tpu_custom_call.1} parent=5 // pred_fallthru
        _
      %p512 = scmp.le.s32.totalorder 1, %s31
      %p513 = scmp.lt.s32.totalorder %s31, 3
      %p514 = pnand %p512, %p513
      %p515 = pneg %p514
      // Predicated region
      $region69: #{tpu_custom_call.1} parent=5 // pred_check
        _
      $region70: #{tpu_custom_call.1} parent=5 // pred_check_branch
        %517 = sbr.rel (%p514) target = $region72
      $region71: #{tpu_custom_call.1} parent=5 // pred_region
        %s518 = ssub.s32 %s31, 1
        %s519 = sand.u32 %s44, 1
        %s520 = scalar_lea.sflag [#allocation3], %s519
        %s521 = sand.u32 %s44, 1
        %s522 = smul.addr %s521, 8
        %s523 = scalar_lea.vmem [#allocation2], %s522
        // Predicated region
        $region73: #{tpu_custom_call.1} parent=71 // pred_check
          %p524 = pneg %p57
        $region74: #{tpu_custom_call.1} parent=71 // pred_check_branch
          %526 = sbr.rel (%p524) target = $region76
        $region75: #{tpu_custom_call.1} parent=71 // pred_region
          %527 = dma.done %s520, 128
        $region76: #{tpu_custom_call.1} parent=71 // pred_fallthru
          _
        // Predicated region
        $region77: #{tpu_custom_call.1} parent=71 // pred_check
          %p528 = pneg %p78
        $region78: #{tpu_custom_call.1} parent=71 // pred_check_branch
          %530 = sbr.rel (%p528) target = $region80
        $region79: #{tpu_custom_call.1} parent=71 // pred_region
          %531 = dma.done [#allocation6], 16
        $region80: #{tpu_custom_call.1} parent=71 // pred_fallthru
          _
        // Predicated region
        $region81: #{tpu_custom_call.1} parent=71 // pred_check
          %p532 = pneg %p99
        $region82: #{tpu_custom_call.1} parent=71 // pred_check_branch
          %534 = sbr.rel (%p532) target = $region84
        $region83: #{tpu_custom_call.1} parent=71 // pred_region
          %535 = dma.done [#allocation6], 16
        $region84: #{tpu_custom_call.1} parent=71 // pred_fallthru
          _
        // Predicated region
        $region85: #{tpu_custom_call.1} parent=71 // pred_check
          %p536 = pneg %p120
        $region86: #{tpu_custom_call.1} parent=71 // pred_check_branch
          %538 = sbr.rel (%p536) target = $region88
        $region87: #{tpu_custom_call.1} parent=71 // pred_region
          %539 = dma.done [#allocation9], 256
        $region88: #{tpu_custom_call.1} parent=71 // pred_fallthru
          _
        // Predicated region
        $region89: #{tpu_custom_call.1} parent=71 // pred_check
          %p540 = pneg %p141
        $region90: #{tpu_custom_call.1} parent=71 // pred_check_branch
          %542 = sbr.rel (%p540) target = $region92
        $region91: #{tpu_custom_call.1} parent=71 // pred_region
          %543 = dma.done [#allocation9], 16
        $region92: #{tpu_custom_call.1} parent=71 // pred_fallthru
          _
        // Predicated region
        $region93: #{tpu_custom_call.1} parent=71 // pred_check
          %p544 = pneg %p162
        $region94: #{tpu_custom_call.1} parent=71 // pred_check_branch
          %546 = sbr.rel (%p544) target = $region96
        $region95: #{tpu_custom_call.1} parent=71 // pred_region
          %547 = dma.done [#allocation12], 256
        $region96: #{tpu_custom_call.1} parent=71 // pred_fallthru
          _
        // Predicated region
        $region97: #{tpu_custom_call.1} parent=71 // pred_check
          %p548 = pneg %p183
        $region98: #{tpu_custom_call.1} parent=71 // pred_check_branch
          %550 = sbr.rel (%p548) target = $region100
        $region99: #{tpu_custom_call.1} parent=71 // pred_region
          %551 = dma.done [#allocation12], 16
        $region100: #{tpu_custom_call.1} parent=71 // pred_fallthru
          _
        // Predicated region
        $region101: #{tpu_custom_call.1} parent=71 // pred_check
          %p552 = pneg %p204
        $region102: #{tpu_custom_call.1} parent=71 // pred_check_branch
          %554 = sbr.rel (%p552) target = $region104
        $region103: #{tpu_custom_call.1} parent=71 // pred_region
          %555 = dma.done [#allocation15], 16
        $region104: #{tpu_custom_call.1} parent=71 // pred_fallthru
          _
        // Predicated region
        $region105: #{tpu_custom_call.1} parent=71 // pred_check
          %p556 = pneg %p225
        $region106: #{tpu_custom_call.1} parent=71 // pred_check_branch
          %558 = sbr.rel (%p556) target = $region108
        $region107: #{tpu_custom_call.1} parent=71 // pred_region
          %559 = dma.done [#allocation15], 16
        $region108: #{tpu_custom_call.1} parent=71 // pred_fallthru
          _
        // Predicated region
        $region109: #{tpu_custom_call.1} parent=71 // pred_check
          %p560 = pneg %p246
        $region110: #{tpu_custom_call.1} parent=71 // pred_check_branch
          %562 = sbr.rel (%p560) target = $region112
        $region111: #{tpu_custom_call.1} parent=71 // pred_region
          %563 = dma.done [#allocation18], 256
        $region112: #{tpu_custom_call.1} parent=71 // pred_fallthru
          _
        // Predicated region
        $region113: #{tpu_custom_call.1} parent=71 // pred_check
          %p564 = pneg %p267
        $region114: #{tpu_custom_call.1} parent=71 // pred_check_branch
          %566 = sbr.rel (%p564) target = $region116
        $region115: #{tpu_custom_call.1} parent=71 // pred_region
          %567 = dma.done [#allocation18], 16
        $region116: #{tpu_custom_call.1} parent=71 // pred_fallthru
          _
        // Predicated region
        $region117: #{tpu_custom_call.1} parent=71 // pred_check
          %p568 = pneg %p288
        $region118: #{tpu_custom_call.1} parent=71 // pred_check_branch
          %570 = sbr.rel (%p568) target = $region120
        $region119: #{tpu_custom_call.1} parent=71 // pred_region
          %571 = dma.done [#allocation21], 512
        $region120: #{tpu_custom_call.1} parent=71 // pred_fallthru
          _
        // Predicated region
        $region121: #{tpu_custom_call.1} parent=71 // pred_check
          %p572 = pneg %p309
        $region122: #{tpu_custom_call.1} parent=71 // pred_check_branch
          %574 = sbr.rel (%p572) target = $region124
        $region123: #{tpu_custom_call.1} parent=71 // pred_region
          %575 = dma.done [#allocation21], 16
        $region124: #{tpu_custom_call.1} parent=71 // pred_fallthru
          _
        %s576 = sand.u32 %s44, 1
        %s577 = scalar_lea.sflag [#allocation3], %s576
        %s578 = sand.u32 %s44, 1
        %s579 = smul.addr %s578, 8
        %s580 = scalar_lea.vmem [#allocation2], %s579
        %p581 = pneg %p57
        %p582 = pneg %p54
        %p583 = pneg %p78
        %p584 = pneg %p75
        %p585 = pneg %p99
        %p586 = pneg %p96
        %p587 = pneg %p120
        %p588 = pneg %p117
        %p589 = pneg %p141
        %p590 = pneg %p138
        %p591 = pneg %p162
        %p592 = pneg %p159
        %p593 = pneg %p183
        %p594 = pneg %p180
        %p595 = pneg %p204
        %p596 = pneg %p201
        %p597 = pneg %p225
        %p598 = pneg %p222
        %p599 = pneg %p246
        %p600 = pneg %p243
        %p601 = pneg %p267
        %p602 = pneg %p264
        %p603 = pneg %p288
        %p604 = pneg %p285
        %p605 = pneg %p309
        %p606 = pneg %p306
        %p607 = pneg %p335
        %p608 = pneg %p332
        %s609 = sand.u32 %s322, 1
        %s610 = scalar_lea.sflag [#allocation4], %s609
        %s611 = sand.u32 %s322, 1
        %s612 = smul.addr %s611, 8
        %s613 = scalar_lea.vmem [#allocation23], %s612
        %v615 = vld [vmem:[%s523] sm:$0xff]
        %v616 = vld [vmem:[#allocation5] sm:$0x1]
        %v617 = vld [vmem:[#allocation7] sm:$0x1]
        %vm618 = vcmask 261120
        %v619 = vsel %vm618, %v615, 0.0
        %620 = vadd.xlane.f32.xlu0 %v619
        %v621 = vpop.xlane.xlu0 %620
        %v622 = vrcp.pop 32.0
        %v623 = vmul.f32 %v621, %v622
        %v624 = vsub.f32 %v615, %v623
        %v625 = vmul.f32 %v624, %v624
        %v626 = vsel %vm618, %v625, 0.0
        %627 = vadd.xlane.f32.xlu0 %v626
        %v628 = vpop.xlane.xlu0 %627
        %v629 = vmul.f32 %v628, %v622
        %v630 = vadd.f32 %v629, 1e-05
        %v631 = vrsqrt.pop %v630
        %v632 = vmul.f32 %v624, %v631
        %v634 = vlaneseq
        %v635 = vshrl.u32 %v634, 7
        %v636 = vsub.s32 0, %v635
        %v637 = vrot.slane %v616, %v636
        %v639 = vmul.f32 %v632, %v637
        %v641 = vlaneseq
        %v642 = vshrl.u32 %v641, 7
        %v643 = vsub.s32 0, %v642
        %v644 = vrot.slane %v617, %v643
        %v646 = vadd.f32 %v639, %v644
        %v647 = vpack.c.bf16 %v646, %v646
        %v648 = vld [vmem:[#allocation8] sm:$0xf]
        %v649 = vld [vmem:[#allocation8 + $0x4] sm:$0xf]
        %v650 = vld [vmem:[#allocation8 + $0x8] sm:$0xf]
        %v651 = vld [vmem:[#allocation8 + $0xc] sm:$0xf]
        %v652 = vld [vmem:[#allocation10] sm:$0x1]
        %v654 = vlaneseq
        %v655 = vshrl.u32 %v654, 7
        %v656 = vsub.s32 0, %v655
        %v657 = vrot.slane %v652, %v656
        %v663 = vunpack.c.l.b16 %v648
        %v664 = vunpack.c.l.b16 %v649
        %v665 = vunpack.c.l.b16 %v650
        %v666 = vunpack.c.l.b16 %v651
        %v667 = vpack.c.b16 %v664, %v663
        %v668 = vpack.c.b16 %v666, %v665
        %v672 = vsel %vm618, %v647, 0
        %674 = vmatprep.subr.bf16.mxu0 0
        %675 = vmatpush1.bf16.msra.mxu0 %v667
        %676 = vmatprep.subr.bf16.mxu0 0
        %677 = vmatpush1.bf16.msra.mxu0 %v668
        %678 = vmatprep.subr.bf16.mxu0 0
        %679 = vmatpush1.bf16.msra.mxu0 0
        %680 = vmatprep.subr.bf16.mxu0 0
        %681 = vmatpush1.bf16.msra.mxu0 0
        %682 = vmatprep.subr.bf16.mxu0 0
        %683 = vmatpush1.bf16.msra.mxu0 0
        %684 = vmatprep.subr.bf16.mxu0 0
        %685 = vmatpush1.bf16.msra.mxu0 0
        %686 = vmatprep.subr.bf16.mxu0 0
        %687 = vmatpush1.bf16.msra.mxu0 0
        %688 = vmatprep.subr.bf16.mxu0 0
        %689 = vmatpush1.bf16.msra.mxu0 0
        %690 = vmatprep.subr.bf16.mxu0 0
        %691 = vmatpush1.bf16.msra.mxu0 0
        %692 = vmatprep.subr.bf16.mxu0 0
        %693 = vmatpush1.bf16.msra.mxu0 0
        %694 = vmatprep.subr.bf16.mxu0 0
        %695 = vmatpush1.bf16.msra.mxu0 0
        %696 = vmatprep.subr.bf16.mxu0 0
        %697 = vmatpush1.bf16.msra.mxu0 0
        %698 = vmatprep.subr.bf16.mxu0 0
        %699 = vmatpush1.bf16.msra.mxu0 0
        %700 = vmatprep.subr.bf16.mxu0 0
        %701 = vmatpush1.bf16.msra.mxu0 0
        %702 = vmatprep.subr.bf16.mxu0 0
        %703 = vmatpush1.bf16.msra.mxu0 0
        %704 = vmatprep.subr.bf16.mxu0 0
        %705 = vmatpush1.bf16.msra.mxu0 0
        %706 = vmatprep.mubr.bf16.mxu0 0
        %707 = vmatmul.mubr.bf16.gmra.mrb[0].mxu0 %v672
        %v708 = vpop.f32.mrb[0].mxu0
        %v709 = vadd.f32 %v657, %v708
        %v710 = vpop.f32.mrb[0].mxu0
        %v711 = vpop.f32.mrb[0].mxu0
        %v712 = vpop.f32.mrb[0].mxu0
        %713 = vdwg.mxu0
        %715 = vrot.lane.b32.xlu0 %v709, 120
        %v716 = vpop.permute.xlu0 %715
        %718 = vrot.lane.b32.xlu0 %v709, 112
        %v719 = vpop.permute.xlu0 %718
        %721 = vrot.lane.b32.xlu0 %v709, 104
        %v722 = vpop.permute.xlu0 %721
        %v724 = vpack.c.bf16 %v709, %v709
        %v725 = vpack.c.bf16 %v716, %v716
        %v726 = vpack.c.bf16 %v719, %v719
        %v727 = vpack.c.bf16 %v722, %v722
        %729 = vrot.lane.b32.xlu0 %v724, 96
        %v730 = vpop.permute.xlu0 %729
        %vm731 = vcmask 64512
        %v733 = vsel %vm731, %v724, 0
        %v736 = vsel %vm731, %v730, 0
        %738 = vmatprep.subr.bf16.mxu0 0
        %739 = vmatpush1.bf16.xpose.msra.mxu0 %v736
        %740 = vmatprep.subr.bf16.mxu0 0
        %741 = vmatpush1.bf16.xpose.msra.mxu0 0
        %742 = vmatprep.subr.bf16.mxu0 0
        %743 = vmatpush1.bf16.xpose.msra.mxu0 0
        %744 = vmatprep.subr.bf16.mxu0 0
        %745 = vmatpush1.bf16.xpose.msra.mxu0 0
        %746 = vmatprep.subr.bf16.mxu0 0
        %747 = vmatpush1.bf16.xpose.msra.mxu0 0
        %748 = vmatprep.subr.bf16.mxu0 0
        %749 = vmatpush1.bf16.xpose.msra.mxu0 0
        %750 = vmatprep.subr.bf16.mxu0 0
        %751 = vmatpush1.bf16.xpose.msra.mxu0 0
        %752 = vmatprep.subr.bf16.mxu0 0
        %753 = vmatpush1.bf16.xpose.msra.mxu0 0
        %754 = vmatprep.subr.bf16.mxu0 0
        %755 = vmatpush1.bf16.xpose.msra.mxu0 0
        %756 = vmatprep.subr.bf16.mxu0 0
        %757 = vmatpush1.bf16.xpose.msra.mxu0 0
        %758 = vmatprep.subr.bf16.mxu0 0
        %759 = vmatpush1.bf16.xpose.msra.mxu0 0
        %760 = vmatprep.subr.bf16.mxu0 0
        %761 = vmatpush1.bf16.xpose.msra.mxu0 0
        %762 = vmatprep.subr.bf16.mxu0 0
        %763 = vmatpush1.bf16.xpose.msra.mxu0 0
        %764 = vmatprep.subr.bf16.mxu0 0
        %765 = vmatpush1.bf16.xpose.msra.mxu0 0
        %766 = vmatprep.subr.bf16.mxu0 0
        %767 = vmatpush1.bf16.xpose.msra.mxu0 0
        %768 = vmatprep.subr.bf16.mxu0 0
        %769 = vmatpush1.bf16.xpose.msra.mxu0 0
        %770 = vmatprep.mubr.bf16.mxu0 0
        %771 = vmatmul.mubr.bf16.gmra.mrb[0].mxu0 %v733
        %v772 = vpop.f32.mrb[0].mxu0
        %v773 = vadd.f32 0.0, %v772
        %v774 = vpop.f32.mrb[0].mxu0
        %v775 = vpop.f32.mrb[0].mxu0
        %v776 = vpop.f32.mrb[0].mxu0
        %777 = vdwg.mxu0
        %779 = vrot.lane.b32.xlu0 %v725, 96
        %v780 = vpop.permute.xlu0 %779
        %v782 = vsel %vm731, %v725, 0
        %v785 = vsel %vm731, %v780, 0
        %787 = vmatprep.subr.bf16.mxu0 0
        %788 = vmatpush1.bf16.xpose.msra.mxu0 %v785
        %789 = vmatprep.subr.bf16.mxu0 0
        %790 = vmatpush1.bf16.xpose.msra.mxu0 0
        %791 = vmatprep.subr.bf16.mxu0 0
        %792 = vmatpush1.bf16.xpose.msra.mxu0 0
        %793 = vmatprep.subr.bf16.mxu0 0
        %794 = vmatpush1.bf16.xpose.msra.mxu0 0
        %795 = vmatprep.subr.bf16.mxu0 0
        %796 = vmatpush1.bf16.xpose.msra.mxu0 0
        %797 = vmatprep.subr.bf16.mxu0 0
        %798 = vmatpush1.bf16.xpose.msra.mxu0 0
        %799 = vmatprep.subr.bf16.mxu0 0
        %800 = vmatpush1.bf16.xpose.msra.mxu0 0
        %801 = vmatprep.subr.bf16.mxu0 0
        %802 = vmatpush1.bf16.xpose.msra.mxu0 0
        %803 = vmatprep.subr.bf16.mxu0 0
        %804 = vmatpush1.bf16.xpose.msra.mxu0 0
        %805 = vmatprep.subr.bf16.mxu0 0
        %806 = vmatpush1.bf16.xpose.msra.mxu0 0
        %807 = vmatprep.subr.bf16.mxu0 0
        %808 = vmatpush1.bf16.xpose.msra.mxu0 0
        %809 = vmatprep.subr.bf16.mxu0 0
        %810 = vmatpush1.bf16.xpose.msra.mxu0 0
        %811 = vmatprep.subr.bf16.mxu0 0
        %812 = vmatpush1.bf16.xpose.msra.mxu0 0
        %813 = vmatprep.subr.bf16.mxu0 0
        %814 = vmatpush1.bf16.xpose.msra.mxu0 0
        %815 = vmatprep.subr.bf16.mxu0 0
        %816 = vmatpush1.bf16.xpose.msra.mxu0 0
        %817 = vmatprep.subr.bf16.mxu0 0
        %818 = vmatpush1.bf16.xpose.msra.mxu0 0
        %819 = vmatprep.mubr.bf16.mxu0 0
        %820 = vmatmul.mubr.bf16.gmra.mrb[0].mxu0 %v782
        %v821 = vpop.f32.mrb[0].mxu0
        %v822 = vadd.f32 0.0, %v821
        %v823 = vpop.f32.mrb[0].mxu0
        %v824 = vpop.f32.mrb[0].mxu0
        %v825 = vpop.f32.mrb[0].mxu0
        %826 = vdwg.mxu0
        %828 = vrot.lane.b32.xlu0 %v726, 96
        %v829 = vpop.permute.xlu0 %828
        %v831 = vsel %vm731, %v726, 0
        %v834 = vsel %vm731, %v829, 0
        %836 = vmatprep.subr.bf16.mxu0 0
        %837 = vmatpush1.bf16.xpose.msra.mxu0 %v834
        %838 = vmatprep.subr.bf16.mxu0 0
        %839 = vmatpush1.bf16.xpose.msra.mxu0 0
        %840 = vmatprep.subr.bf16.mxu0 0
        %841 = vmatpush1.bf16.xpose.msra.mxu0 0
        %842 = vmatprep.subr.bf16.mxu0 0
        %843 = vmatpush1.bf16.xpose.msra.mxu0 0
        %844 = vmatprep.subr.bf16.mxu0 0
        %845 = vmatpush1.bf16.xpose.msra.mxu0 0
        %846 = vmatprep.subr.bf16.mxu0 0
        %847 = vmatpush1.bf16.xpose.msra.mxu0 0
        %848 = vmatprep.subr.bf16.mxu0 0
        %849 = vmatpush1.bf16.xpose.msra.mxu0 0
        %850 = vmatprep.subr.bf16.mxu0 0
        %851 = vmatpush1.bf16.xpose.msra.mxu0 0
        %852 = vmatprep.subr.bf16.mxu0 0
        %853 = vmatpush1.bf16.xpose.msra.mxu0 0
        %854 = vmatprep.subr.bf16.mxu0 0
        %855 = vmatpush1.bf16.xpose.msra.mxu0 0
        %856 = vmatprep.subr.bf16.mxu0 0
        %857 = vmatpush1.bf16.xpose.msra.mxu0 0
        %858 = vmatprep.subr.bf16.mxu0 0
        %859 = vmatpush1.bf16.xpose.msra.mxu0 0
        %860 = vmatprep.subr.bf16.mxu0 0
        %861 = vmatpush1.bf16.xpose.msra.mxu0 0
        %862 = vmatprep.subr.bf16.mxu0 0
        %863 = vmatpush1.bf16.xpose.msra.mxu0 0
        %864 = vmatprep.subr.bf16.mxu0 0
        %865 = vmatpush1.bf16.xpose.msra.mxu0 0
        %866 = vmatprep.subr.bf16.mxu0 0
        %867 = vmatpush1.bf16.xpose.msra.mxu0 0
        %868 = vmatprep.mubr.bf16.mxu0 0
        %869 = vmatmul.mubr.bf16.gmra.mrb[0].mxu0 %v831
        %v870 = vpop.f32.mrb[0].mxu0
        %v871 = vadd.f32 0.0, %v870
        %v872 = vpop.f32.mrb[0].mxu0
        %v873 = vpop.f32.mrb[0].mxu0
        %v874 = vpop.f32.mrb[0].mxu0
        %875 = vdwg.mxu0
        %877 = vrot.lane.b32.xlu0 %v727, 96
        %v878 = vpop.permute.xlu0 %877
        %v880 = vsel %vm731, %v727, 0
        %v883 = vsel %vm731, %v878, 0
        %885 = vmatprep.subr.bf16.mxu0 0
        %886 = vmatpush1.bf16.xpose.msra.mxu0 %v883
        %887 = vmatprep.subr.bf16.mxu0 0
        %888 = vmatpush1.bf16.xpose.msra.mxu0 0
        %889 = vmatprep.subr.bf16.mxu0 0
        %890 = vmatpush1.bf16.xpose.msra.mxu0 0
        %891 = vmatprep.subr.bf16.mxu0 0
        %892 = vmatpush1.bf16.xpose.msra.mxu0 0
        %893 = vmatprep.subr.bf16.mxu0 0
        %894 = vmatpush1.bf16.xpose.msra.mxu0 0
        %895 = vmatprep.subr.bf16.mxu0 0
        %896 = vmatpush1.bf16.xpose.msra.mxu0 0
        %897 = vmatprep.subr.bf16.mxu0 0
        %898 = vmatpush1.bf16.xpose.msra.mxu0 0
        %899 = vmatprep.subr.bf16.mxu0 0
        %900 = vmatpush1.bf16.xpose.msra.mxu0 0
        %901 = vmatprep.subr.bf16.mxu0 0
        %902 = vmatpush1.bf16.xpose.msra.mxu0 0
        %903 = vmatprep.subr.bf16.mxu0 0
        %904 = vmatpush1.bf16.xpose.msra.mxu0 0
        %905 = vmatprep.subr.bf16.mxu0 0
        %906 = vmatpush1.bf16.xpose.msra.mxu0 0
        %907 = vmatprep.subr.bf16.mxu0 0
        %908 = vmatpush1.bf16.xpose.msra.mxu0 0
        %909 = vmatprep.subr.bf16.mxu0 0
        %910 = vmatpush1.bf16.xpose.msra.mxu0 0
        %911 = vmatprep.subr.bf16.mxu0 0
        %912 = vmatpush1.bf16.xpose.msra.mxu0 0
        %913 = vmatprep.subr.bf16.mxu0 0
        %914 = vmatpush1.bf16.xpose.msra.mxu0 0
        %915 = vmatprep.subr.bf16.mxu0 0
        %916 = vmatpush1.bf16.xpose.msra.mxu0 0
        %917 = vmatprep.mubr.bf16.mxu0 0
        %918 = vmatmul.mubr.bf16.gmra.mrb[0].mxu0 %v880
        %v919 = vpop.f32.mrb[0].mxu0
        %v920 = vadd.f32 0.0, %v919
        %v921 = vpop.f32.mrb[0].mxu0
        %v922 = vpop.f32.mrb[0].mxu0
        %v923 = vpop.f32.mrb[0].mxu0
        %924 = vdwg.mxu0
        %v925 = vsel %vm731, %v773, -inf
        %926 = vmax.xlane.f32.xlu0 %v925
        %v927 = vpop.xlane.xlu0 %926
        %v928 = vsel %vm731, %v822, -inf
        %929 = vmax.xlane.f32.xlu0 %v928
        %v930 = vpop.xlane.xlu0 %929
        %v931 = vsel %vm731, %v871, -inf
        %932 = vmax.xlane.f32.xlu0 %v931
        %v933 = vpop.xlane.xlu0 %932
        %v934 = vsel %vm731, %v920, -inf
        %935 = vmax.xlane.f32.xlu0 %v934
        %v936 = vpop.xlane.xlu0 %935
        %v937 = vsub.f32 %v773, %v927
        %v938 = vsub.f32 %v822, %v930
        %v939 = vsub.f32 %v871, %v933
        %v940 = vsub.f32 %v920, %v936
        %v941 = vmul.f32 %v937, 1.442695
        %v942 = vpow.pop %v941
        %v943 = vmul.f32 %v938, 1.442695
        %v944 = vpow.pop %v943
        %v945 = vmul.f32 %v939, 1.442695
        %v946 = vpow.pop %v945
        %v947 = vmul.f32 %v940, 1.442695
        %v948 = vpow.pop %v947
        %v949 = vsel %vm731, %v942, 0.0
        %950 = vadd.xlane.f32.xlu0 %v949
        %v951 = vpop.xlane.xlu0 %950
        %v952 = vsel %vm731, %v944, 0.0
        %953 = vadd.xlane.f32.xlu0 %v952
        %v954 = vpop.xlane.xlu0 %953
        %v955 = vsel %vm731, %v946, 0.0
        %956 = vadd.xlane.f32.xlu0 %v955
        %v957 = vpop.xlane.xlu0 %956
        %v958 = vsel %vm731, %v948, 0.0
        %959 = vadd.xlane.f32.xlu0 %v958
        %v960 = vpop.xlane.xlu0 %959
        %v961 = vpack.c.bf16 %v942, %v942
        %v962 = vpack.c.bf16 %v944, %v944
        %v963 = vpack.c.bf16 %v946, %v946
        %v964 = vpack.c.bf16 %v948, %v948
        %965 = vrot.lane.b32.xlu0 %v724, 64
        %v966 = vpop.permute.xlu0 %965
        %v968 = vsel %vm731, %v961, 0
        %vm970 = vcmask 1043456
        %v972 = vsel %vm970, %v966, 0
        %974 = vmatprep.subr.bf16.mxu0 0
        %975 = vmatpush1.bf16.msra.mxu0 %v972
        %976 = vmatprep.subr.bf16.mxu0 0
        %977 = vmatpush1.bf16.msra.mxu0 0
        %978 = vmatprep.subr.bf16.mxu0 0
        %979 = vmatpush1.bf16.msra.mxu0 0
        %980 = vmatprep.subr.bf16.mxu0 0
        %981 = vmatpush1.bf16.msra.mxu0 0
        %982 = vmatprep.subr.bf16.mxu0 0
        %983 = vmatpush1.bf16.msra.mxu0 0
        %984 = vmatprep.subr.bf16.mxu0 0
        %985 = vmatpush1.bf16.msra.mxu0 0
        %986 = vmatprep.subr.bf16.mxu0 0
        %987 = vmatpush1.bf16.msra.mxu0 0
        %988 = vmatprep.subr.bf16.mxu0 0
        %989 = vmatpush1.bf16.msra.mxu0 0
        %990 = vmatprep.subr.bf16.mxu0 0
        %991 = vmatpush1.bf16.msra.mxu0 0
        %992 = vmatprep.subr.bf16.mxu0 0
        %993 = vmatpush1.bf16.msra.mxu0 0
        %994 = vmatprep.subr.bf16.mxu0 0
        %995 = vmatpush1.bf16.msra.mxu0 0
        %996 = vmatprep.subr.bf16.mxu0 0
        %997 = vmatpush1.bf16.msra.mxu0 0
        %998 = vmatprep.subr.bf16.mxu0 0
        %999 = vmatpush1.bf16.msra.mxu0 0
        %1000 = vmatprep.subr.bf16.mxu0 0
        %1001 = vmatpush1.bf16.msra.mxu0 0
        %1002 = vmatprep.subr.bf16.mxu0 0
        %1003 = vmatpush1.bf16.msra.mxu0 0
        %1004 = vmatprep.subr.bf16.mxu0 0
        %1005 = vmatpush1.bf16.msra.mxu0 0
        %1006 = vmatprep.mubr.bf16.mxu0 0
        %1007 = vmatmul.mubr.bf16.gmra.mrb[0].mxu0 %v968
        %v1008 = vpop.f32.mrb[0].mxu0
        %v1009 = vadd.f32 0.0, %v1008
        %v1010 = vpop.f32.mrb[0].mxu0
        %v1011 = vpop.f32.mrb[0].mxu0
        %v1012 = vpop.f32.mrb[0].mxu0
        %1013 = vdwg.mxu0
        %1014 = vrot.lane.b32.xlu0 %v725, 64
        %v1015 = vpop.permute.xlu0 %1014
        %v1017 = vsel %vm731, %v962, 0
        %v1020 = vsel %vm970, %v1015, 0
        %1022 = vmatprep.subr.bf16.mxu0 0
        %1023 = vmatpush1.bf16.msra.mxu0 %v1020
        %1024 = vmatprep.subr.bf16.mxu0 0
        %1025 = vmatpush1.bf16.msra.mxu0 0
        %1026 = vmatprep.subr.bf16.mxu0 0
        %1027 = vmatpush1.bf16.msra.mxu0 0
        %1028 = vmatprep.subr.bf16.mxu0 0
        %1029 = vmatpush1.bf16.msra.mxu0 0
        %1030 = vmatprep.subr.bf16.mxu0 0
        %1031 = vmatpush1.bf16.msra.mxu0 0
        %1032 = vmatprep.subr.bf16.mxu0 0
        %1033 = vmatpush1.bf16.msra.mxu0 0
        %1034 = vmatprep.subr.bf16.mxu0 0
        %1035 = vmatpush1.bf16.msra.mxu0 0
        %1036 = vmatprep.subr.bf16.mxu0 0
        %1037 = vmatpush1.bf16.msra.mxu0 0
        %1038 = vmatprep.subr.bf16.mxu0 0
        %1039 = vmatpush1.bf16.msra.mxu0 0
        %1040 = vmatprep.subr.bf16.mxu0 0
        %1041 = vmatpush1.bf16.msra.mxu0 0
        %1042 = vmatprep.subr.bf16.mxu0 0
        %1043 = vmatpush1.bf16.msra.mxu0 0
        %1044 = vmatprep.subr.bf16.mxu0 0
        %1045 = vmatpush1.bf16.msra.mxu0 0
        %1046 = vmatprep.subr.bf16.mxu0 0
        %1047 = vmatpush1.bf16.msra.mxu0 0
        %1048 = vmatprep.subr.bf16.mxu0 0
        %1049 = vmatpush1.bf16.msra.mxu0 0
        %1050 = vmatprep.subr.bf16.mxu0 0
        %1051 = vmatpush1.bf16.msra.mxu0 0
        %1052 = vmatprep.subr.bf16.mxu0 0
        %1053 = vmatpush1.bf16.msra.mxu0 0
        %1054 = vmatprep.mubr.bf16.mxu0 0
        %1055 = vmatmul.mubr.bf16.gmra.mrb[0].mxu0 %v1017
        %v1056 = vpop.f32.mrb[0].mxu0
        %v1057 = vadd.f32 0.0, %v1056
        %v1058 = vpop.f32.mrb[0].mxu0
        %v1059 = vpop.f32.mrb[0].mxu0
        %v1060 = vpop.f32.mrb[0].mxu0
        %1061 = vdwg.mxu0
        %1062 = vrot.lane.b32.xlu0 %v726, 64
        %v1063 = vpop.permute.xlu0 %1062
        %v1065 = vsel %vm731, %v963, 0
        %v1068 = vsel %vm970, %v1063, 0
        %1070 = vmatprep.subr.bf16.mxu0 0
        %1071 = vmatpush1.bf16.msra.mxu0 %v1068
        %1072 = vmatprep.subr.bf16.mxu0 0
        %1073 = vmatpush1.bf16.msra.mxu0 0
        %1074 = vmatprep.subr.bf16.mxu0 0
        %1075 = vmatpush1.bf16.msra.mxu0 0
        %1076 = vmatprep.subr.bf16.mxu0 0
        %1077 = vmatpush1.bf16.msra.mxu0 0
        %1078 = vmatprep.subr.bf16.mxu0 0
        %1079 = vmatpush1.bf16.msra.mxu0 0
        %1080 = vmatprep.subr.bf16.mxu0 0
        %1081 = vmatpush1.bf16.msra.mxu0 0
        %1082 = vmatprep.subr.bf16.mxu0 0
        %1083 = vmatpush1.bf16.msra.mxu0 0
        %1084 = vmatprep.subr.bf16.mxu0 0
        %1085 = vmatpush1.bf16.msra.mxu0 0
        %1086 = vmatprep.subr.bf16.mxu0 0
        %1087 = vmatpush1.bf16.msra.mxu0 0
        %1088 = vmatprep.subr.bf16.mxu0 0
        %1089 = vmatpush1.bf16.msra.mxu0 0
        %1090 = vmatprep.subr.bf16.mxu0 0
        %1091 = vmatpush1.bf16.msra.mxu0 0
        %1092 = vmatprep.subr.bf16.mxu0 0
        %1093 = vmatpush1.bf16.msra.mxu0 0
        %1094 = vmatprep.subr.bf16.mxu0 0
        %1095 = vmatpush1.bf16.msra.mxu0 0
        %1096 = vmatprep.subr.bf16.mxu0 0
        %1097 = vmatpush1.bf16.msra.mxu0 0
        %1098 = vmatprep.subr.bf16.mxu0 0
        %1099 = vmatpush1.bf16.msra.mxu0 0
        %1100 = vmatprep.subr.bf16.mxu0 0
        %1101 = vmatpush1.bf16.msra.mxu0 0
        %1102 = vmatprep.mubr.bf16.mxu0 0
        %1103 = vmatmul.mubr.bf16.gmra.mrb[0].mxu0 %v1065
        %v1104 = vpop.f32.mrb[0].mxu0
        %v1105 = vadd.f32 0.0, %v1104
        %v1106 = vpop.f32.mrb[0].mxu0
        %v1107 = vpop.f32.mrb[0].mxu0
        %v1108 = vpop.f32.mrb[0].mxu0
        %1109 = vdwg.mxu0
        %1110 = vrot.lane.b32.xlu0 %v727, 64
        %v1111 = vpop.permute.xlu0 %1110
        %v1113 = vsel %vm731, %v964, 0
        %v1116 = vsel %vm970, %v1111, 0
        %1118 = vmatprep.subr.bf16.mxu0 0
        %1119 = vmatpush1.bf16.msra.mxu0 %v1116
        %1120 = vmatprep.subr.bf16.mxu0 0
        %1121 = vmatpush1.bf16.msra.mxu0 0
        %1122 = vmatprep.subr.bf16.mxu0 0
        %1123 = vmatpush1.bf16.msra.mxu0 0
        %1124 = vmatprep.subr.bf16.mxu0 0
        %1125 = vmatpush1.bf16.msra.mxu0 0
        %1126 = vmatprep.subr.bf16.mxu0 0
        %1127 = vmatpush1.bf16.msra.mxu0 0
        %1128 = vmatprep.subr.bf16.mxu0 0
        %1129 = vmatpush1.bf16.msra.mxu0 0
        %1130 = vmatprep.subr.bf16.mxu0 0
        %1131 = vmatpush1.bf16.msra.mxu0 0
        %1132 = vmatprep.subr.bf16.mxu0 0
        %1133 = vmatpush1.bf16.msra.mxu0 0
        %1134 = vmatprep.subr.bf16.mxu0 0
        %1135 = vmatpush1.bf16.msra.mxu0 0
        %1136 = vmatprep.subr.bf16.mxu0 0
        %1137 = vmatpush1.bf16.msra.mxu0 0
        %1138 = vmatprep.subr.bf16.mxu0 0
        %1139 = vmatpush1.bf16.msra.mxu0 0
        %1140 = vmatprep.subr.bf16.mxu0 0
        %1141 = vmatpush1.bf16.msra.mxu0 0
        %1142 = vmatprep.subr.bf16.mxu0 0
        %1143 = vmatpush1.bf16.msra.mxu0 0
        %1144 = vmatprep.subr.bf16.mxu0 0
        %1145 = vmatpush1.bf16.msra.mxu0 0
        %1146 = vmatprep.subr.bf16.mxu0 0
        %1147 = vmatpush1.bf16.msra.mxu0 0
        %1148 = vmatprep.subr.bf16.mxu0 0
        %1149 = vmatpush1.bf16.msra.mxu0 0
        %1150 = vmatprep.mubr.bf16.mxu0 0
        %1151 = vmatmul.mubr.bf16.gmra.mrb[0].mxu0 %v1113
        %v1152 = vpop.f32.mrb[0].mxu0
        %v1153 = vadd.f32 0.0, %v1152
        %v1154 = vpop.f32.mrb[0].mxu0
        %v1155 = vpop.f32.mrb[0].mxu0
        %v1156 = vpop.f32.mrb[0].mxu0
        %1157 = vdwg.mxu0
        %v1158 = vrcp.pop %v951
        %v1159 = vrcp.pop %v954
        %v1160 = vrcp.pop %v957
        %v1161 = vrcp.pop %v960
        %v1162 = vmul.f32 %v1009, %v1158
        %v1163 = vmul.f32 %v1057, %v1159
        %v1164 = vmul.f32 %v1105, %v1160
        %v1165 = vmul.f32 %v1153, %v1161
        %1167 = vrot.lane.b32.xlu0 %v1163, 8
        %v1168 = vpop.permute.xlu0 %1167
        %1171 = vrot.lane.b32.xlu0 %v1164, 16
        %v1172 = vpop.permute.xlu0 %1171
        %1175 = vrot.lane.b32.xlu0 %v1165, 24
        %v1176 = vpop.permute.xlu0 %1175
        %v1178 = vsel %vm731, %v1162, %v1168
        %vm1179 = vcmask 130048
        %v1180 = vsel %vm1179, %v1178, %v1172
        %vm1181 = vcmask 195584
        %v1182 = vsel %vm1181, %v1180, %v1176
        %v1183 = vpack.c.bf16 %v1182, %v1182
        %v1184 = vld [vmem:[#allocation11] sm:$0xf]
        %v1185 = vld [vmem:[#allocation11 + $0x4] sm:$0xf]
        %v1186 = vld [vmem:[#allocation11 + $0x8] sm:$0xf]
        %v1187 = vld [vmem:[#allocation11 + $0xc] sm:$0xf]
        %v1192 = vunpack.c.l.b16 %v1184
        %v1193 = vunpack.c.l.b16 %v1185
        %v1194 = vunpack.c.l.b16 %v1186
        %v1195 = vunpack.c.l.b16 %v1187
        %v1196 = vpack.c.b16 %v1193, %v1192
        %v1197 = vpack.c.b16 %v1195, %v1194
        %v1201 = vsel %vm618, %v1183, 0
        %1203 = vmatprep.subr.bf16.mxu0 0
        %1204 = vmatpush1.bf16.msra.mxu0 %v1196
        %1205 = vmatprep.subr.bf16.mxu0 0
        %1206 = vmatpush1.bf16.msra.mxu0 %v1197
        %1207 = vmatprep.subr.bf16.mxu0 0
        %1208 = vmatpush1.bf16.msra.mxu0 0
        %1209 = vmatprep.subr.bf16.mxu0 0
        %1210 = vmatpush1.bf16.msra.mxu0 0
        %1211 = vmatprep.subr.bf16.mxu0 0
        %1212 = vmatpush1.bf16.msra.mxu0 0
        %1213 = vmatprep.subr.bf16.mxu0 0
        %1214 = vmatpush1.bf16.msra.mxu0 0
        %1215 = vmatprep.subr.bf16.mxu0 0
        %1216 = vmatpush1.bf16.msra.mxu0 0
        %1217 = vmatprep.subr.bf16.mxu0 0
        %1218 = vmatpush1.bf16.msra.mxu0 0
        %1219 = vmatprep.subr.bf16.mxu0 0
        %1220 = vmatpush1.bf16.msra.mxu0 0
        %1221 = vmatprep.subr.bf16.mxu0 0
        %1222 = vmatpush1.bf16.msra.mxu0 0
        %1223 = vmatprep.subr.bf16.mxu0 0
        %1224 = vmatpush1.bf16.msra.mxu0 0
        %1225 = vmatprep.subr.bf16.mxu0 0
        %1226 = vmatpush1.bf16.msra.mxu0 0
        %1227 = vmatprep.subr.bf16.mxu0 0
        %1228 = vmatpush1.bf16.msra.mxu0 0
        %1229 = vmatprep.subr.bf16.mxu0 0
        %1230 = vmatpush1.bf16.msra.mxu0 0
        %1231 = vmatprep.subr.bf16.mxu0 0
        %1232 = vmatpush1.bf16.msra.mxu0 0
        %1233 = vmatprep.subr.bf16.mxu0 0
        %1234 = vmatpush1.bf16.msra.mxu0 0
        %1235 = vmatprep.mubr.bf16.mxu0 0
        %1236 = vmatmul.mubr.bf16.gmra.mrb[0].mxu0 %v1201
        %v1237 = vpop.f32.mrb[0].mxu0
        %v1238 = vadd.f32 0.0, %v1237
        %v1239 = vpop.f32.mrb[0].mxu0
        %v1240 = vpop.f32.mrb[0].mxu0
        %v1241 = vpop.f32.mrb[0].mxu0
        %1242 = vdwg.mxu0
        %v1243 = vadd.f32 %v615, %v1238
        %v1244 = vld [vmem:[#allocation13] sm:$0x1]
        %v1246 = vlaneseq
        %v1247 = vshrl.u32 %v1246, 7
        %v1248 = vsub.s32 0, %v1247
        %v1249 = vrot.slane %v1244, %v1248
        %v1251 = vadd.f32 %v1243, %v1249
        %v1252 = vld [vmem:[#allocation14] sm:$0x1]
        %v1253 = vld [vmem:[#allocation16] sm:$0x1]
        %v1254 = vsel %vm618, %v1251, 0.0
        %1255 = vadd.xlane.f32.xlu0 %v1254
        %v1256 = vpop.xlane.xlu0 %1255
        %v1257 = vmul.f32 %v1256, %v622
        %v1258 = vsub.f32 %v1251, %v1257
        %v1259 = vmul.f32 %v1258, %v1258
        %v1260 = vsel %vm618, %v1259, 0.0
        %1261 = vadd.xlane.f32.xlu0 %v1260
        %v1262 = vpop.xlane.xlu0 %1261
        %v1263 = vmul.f32 %v1262, %v622
        %v1264 = vadd.f32 %v1263, 1e-05
        %v1265 = vrsqrt.pop %v1264
        %v1266 = vmul.f32 %v1258, %v1265
        %v1268 = vlaneseq
        %v1269 = vshrl.u32 %v1268, 7
        %v1270 = vsub.s32 0, %v1269
        %v1271 = vrot.slane %v1252, %v1270
        %v1273 = vmul.f32 %v1266, %v1271
        %v1275 = vlaneseq
        %v1276 = vshrl.u32 %v1275, 7
        %v1277 = vsub.s32 0, %v1276
        %v1278 = vrot.slane %v1253, %v1277
        %v1280 = vadd.f32 %v1273, %v1278
        %v1281 = vpack.c.bf16 %v1280, %v1280
        %v1282 = vld [vmem:[#allocation17] sm:$0xf]
        %v1283 = vld [vmem:[#allocation17 + $0x4] sm:$0xf]
        %v1284 = vld [vmem:[#allocation17 + $0x8] sm:$0xf]
        %v1285 = vld [vmem:[#allocation17 + $0xc] sm:$0xf]
        %v1286 = vld [vmem:[#allocation19] sm:$0x1]
        %v1288 = vlaneseq
        %v1289 = vshrl.u32 %v1288, 7
        %v1290 = vsub.s32 0, %v1289
        %v1291 = vrot.slane %v1286, %v1290
        %v1297 = vunpack.c.l.b16 %v1282
        %v1298 = vunpack.c.l.b16 %v1283
        %v1299 = vunpack.c.l.b16 %v1284
        %v1300 = vunpack.c.l.b16 %v1285
        %v1301 = vpack.c.b16 %v1298, %v1297
        %v1302 = vpack.c.b16 %v1300, %v1299
        %v1306 = vsel %vm618, %v1281, 0
        %1308 = vmatprep.subr.bf16.mxu0 0
        %1309 = vmatpush1.bf16.msra.mxu0 %v1301
        %1310 = vmatprep.subr.bf16.mxu0 0
        %1311 = vmatpush1.bf16.msra.mxu0 %v1302
        %1312 = vmatprep.subr.bf16.mxu0 0
        %1313 = vmatpush1.bf16.msra.mxu0 0
        %1314 = vmatprep.subr.bf16.mxu0 0
        %1315 = vmatpush1.bf16.msra.mxu0 0
        %1316 = vmatprep.subr.bf16.mxu0 0
        %1317 = vmatpush1.bf16.msra.mxu0 0
        %1318 = vmatprep.subr.bf16.mxu0 0
        %1319 = vmatpush1.bf16.msra.mxu0 0
        %1320 = vmatprep.subr.bf16.mxu0 0
        %1321 = vmatpush1.bf16.msra.mxu0 0
        %1322 = vmatprep.subr.bf16.mxu0 0
        %1323 = vmatpush1.bf16.msra.mxu0 0
        %1324 = vmatprep.subr.bf16.mxu0 0
        %1325 = vmatpush1.bf16.msra.mxu0 0
        %1326 = vmatprep.subr.bf16.mxu0 0
        %1327 = vmatpush1.bf16.msra.mxu0 0
        %1328 = vmatprep.subr.bf16.mxu0 0
        %1329 = vmatpush1.bf16.msra.mxu0 0
        %1330 = vmatprep.subr.bf16.mxu0 0
        %1331 = vmatpush1.bf16.msra.mxu0 0
        %1332 = vmatprep.subr.bf16.mxu0 0
        %1333 = vmatpush1.bf16.msra.mxu0 0
        %1334 = vmatprep.subr.bf16.mxu0 0
        %1335 = vmatpush1.bf16.msra.mxu0 0
        %1336 = vmatprep.subr.bf16.mxu0 0
        %1337 = vmatpush1.bf16.msra.mxu0 0
        %1338 = vmatprep.subr.bf16.mxu0 0
        %1339 = vmatpush1.bf16.msra.mxu0 0
        %1340 = vmatprep.mubr.bf16.mxu0 0
        %1341 = vmatmul.mubr.bf16.gmra.mrb[0].mxu0 %v1306
        %v1342 = vpop.f32.mrb[0].mxu0
        %v1343 = vadd.f32 %v1291, %v1342
        %v1344 = vpop.f32.mrb[0].mxu0
        %v1345 = vpop.f32.mrb[0].mxu0
        %v1346 = vpop.f32.mrb[0].mxu0
        %1347 = vdwg.mxu0
        %v1348 = vmul.f32 %v1343, 0.5
        %v1349 = vmul.f32 %v1343, 0.70710677
        %v1350 = verf.f32.pop %v1349
        %v1351 = vadd.f32 %v1350, 1.0
        %v1352 = vmul.f32 %v1348, %v1351
        %v1353 = vpack.c.bf16 %v1352, %v1352
        %v1354 = vld [vmem:[#allocation20] sm:$0xf]
        %v1355 = vld [vmem:[#allocation20 + $0x4] sm:$0xf]
        %v1356 = vld [vmem:[#allocation20 + $0x8] sm:$0xf]
        %v1357 = vld [vmem:[#allocation20 + $0xc] sm:$0xf]
        %v1358 = vld [vmem:[#allocation20 + $0x10] sm:$0xf]
        %v1359 = vld [vmem:[#allocation20 + $0x14] sm:$0xf]
        %v1360 = vld [vmem:[#allocation20 + $0x18] sm:$0xf]
        %v1361 = vld [vmem:[#allocation20 + $0x1c] sm:$0xf]
        %v1362 = vld [vmem:[#allocation22] sm:$0x1]
        %v1364 = vlaneseq
        %v1365 = vshrl.u32 %v1364, 7
        %v1366 = vsub.s32 0, %v1365
        %v1367 = vrot.slane %v1362, %v1366
        %v1377 = vunpack.c.l.b16 %v1354
        %v1378 = vunpack.c.l.b16 %v1355
        %v1379 = vunpack.c.l.b16 %v1356
        %v1380 = vunpack.c.l.b16 %v1357
        %v1381 = vunpack.c.l.b16 %v1358
        %v1382 = vunpack.c.l.b16 %v1359
        %v1383 = vunpack.c.l.b16 %v1360
        %v1384 = vunpack.c.l.b16 %v1361
        %v1385 = vpack.c.b16 %v1378, %v1377
        %v1386 = vpack.c.b16 %v1380, %v1379
        %v1387 = vpack.c.b16 %v1382, %v1381
        %v1388 = vpack.c.b16 %v1384, %v1383
        %vm1393 = vcmask 523264
        %v1395 = vsel %vm1393, %v1353, 0
        %1397 = vmatprep.subr.bf16.mxu0 0
        %1398 = vmatpush1.bf16.msra.mxu0 %v1385
        %1399 = vmatprep.subr.bf16.mxu0 0
        %1400 = vmatpush1.bf16.msra.mxu0 %v1386
        %1401 = vmatprep.subr.bf16.mxu0 0
        %1402 = vmatpush1.bf16.msra.mxu0 %v1387
        %1403 = vmatprep.subr.bf16.mxu0 0
        %1404 = vmatpush1.bf16.msra.mxu0 %v1388
        %1405 = vmatprep.subr.bf16.mxu0 0
        %1406 = vmatpush1.bf16.msra.mxu0 0
        %1407 = vmatprep.subr.bf16.mxu0 0
        %1408 = vmatpush1.bf16.msra.mxu0 0
        %1409 = vmatprep.subr.bf16.mxu0 0
        %1410 = vmatpush1.bf16.msra.mxu0 0
        %1411 = vmatprep.subr.bf16.mxu0 0
        %1412 = vmatpush1.bf16.msra.mxu0 0
        %1413 = vmatprep.subr.bf16.mxu0 0
        %1414 = vmatpush1.bf16.msra.mxu0 0
        %1415 = vmatprep.subr.bf16.mxu0 0
        %1416 = vmatpush1.bf16.msra.mxu0 0
        %1417 = vmatprep.subr.bf16.mxu0 0
        %1418 = vmatpush1.bf16.msra.mxu0 0
        %1419 = vmatprep.subr.bf16.mxu0 0
        %1420 = vmatpush1.bf16.msra.mxu0 0
        %1421 = vmatprep.subr.bf16.mxu0 0
        %1422 = vmatpush1.bf16.msra.mxu0 0
        %1423 = vmatprep.subr.bf16.mxu0 0
        %1424 = vmatpush1.bf16.msra.mxu0 0
        %1425 = vmatprep.subr.bf16.mxu0 0
        %1426 = vmatpush1.bf16.msra.mxu0 0
        %1427 = vmatprep.subr.bf16.mxu0 0
        %1428 = vmatpush1.bf16.msra.mxu0 0
        %1429 = vmatprep.mubr.bf16.mxu0 0
        %1430 = vmatmul.mubr.bf16.gmra.mrb[0].mxu0 %v1395
        %v1431 = vpop.f32.mrb[0].mxu0
        %v1432 = vadd.f32 %v1367, %v1431
        %v1433 = vpop.f32.mrb[0].mxu0
        %v1434 = vpop.f32.mrb[0].mxu0
        %v1435 = vpop.f32.mrb[0].mxu0
        %1436 = vdwg.mxu0
        %v1437 = vadd.f32 %v1251, %v1432
        %1438 = vst.msk [vmem:[%s613] sm:$0xff] %vm618, %v1437
        %s1439 = sand.u32 %s322, 1
        %s1440 = scalar_lea.sflag [#allocation4], %s1439
        %s1441 = sand.u32 %s322, 1
        %s1442 = smul.addr %s1441, 8
        %s1443 = scalar_lea.vmem [#allocation23], %s1442
        // Predicated region
        $region125: #{tpu_custom_call.1} parent=71 // pred_check
          %p1444 = pneg %p332
        $region126: #{tpu_custom_call.1} parent=71 // pred_check_branch
          %1446 = sbr.rel (%p1444) target = $region128
        $region127: #{tpu_custom_call.1} parent=71 // pred_region
          %s1448 = ssub.s32 128, 128
          %1449 = vsyncadd %s1440, %s1448
          %s1450 = smul.addr %s36, 128
          %s1451 = scalar_lea.hbm %s13, %s1450
          %s1453 = sshll.u32 %s1443, 4
          %s1454 = int_to_ptr.vmem [resolvable:$true] %s1453
          %1456 = dma.vmem_to_hbm [thread:$0]  %s1454, 128, %s1451, %s1440
        $region128: #{tpu_custom_call.1} parent=71 // pred_fallthru
          _
      $region72: #{tpu_custom_call.1} parent=5 // pred_fallthru
        _
      %p1457 = scmp.le.s32.totalorder 2, %s31
      // Predicated region
      $region129: #{tpu_custom_call.1} parent=5 // pred_check
        %p1458 = pneg %p1457
      $region130: #{tpu_custom_call.1} parent=5 // pred_check_branch
        %1460 = sbr.rel (%p1458) target = $region132
      $region131: #{tpu_custom_call.1} parent=5 // pred_region
        %s1461 = ssub.s32 %s31, 2
        // Predicated region
        $region133: #{tpu_custom_call.1} parent=131 // pred_check
          %p1462 = pneg %p338
        $region134: #{tpu_custom_call.1} parent=131 // pred_check_branch
          %1464 = sbr.rel (%p1462) target = $region136
        $region135: #{tpu_custom_call.1} parent=131 // pred_region
          %s1465 = sand.u32 %s323, 1
          %s1466 = scalar_lea.sflag [#allocation4], %s1465
          %s1467 = sand.u32 %s323, 1
          %s1468 = smul.addr %s1467, 8
          %s1469 = scalar_lea.vmem [#allocation23], %s1468
          %1470 = dma.done %s1466, 128
        $region136: #{tpu_custom_call.1} parent=131 // pred_fallthru
          _
      $region132: #{tpu_custom_call.1} parent=5 // pred_fallthru
        _
    $region6: #{tpu_custom_call.1} parent=1 // loop_footer
      %s35 = sadd.s32 1, %s31
    $region7: #{tpu_custom_call.1} parent=1 // loop_footer_branch
      %30 = sbr.rel target = $region3
    $region8: #{tpu_custom_call.1} parent=1 // loop_exit
      _
    %1471 = vsyncpa [#allocation3], 1
    %s1472 = scalar_lea.sflag [#allocation3], 1
    %1473 = vsyncpa %s1472, 1
    %1474 = vsyncpa [#allocation6], 1
    %1475 = vsyncpa [#allocation9], 1
    %1476 = vsyncpa [#allocation12], 1
    %1477 = vsyncpa [#allocation15], 1
    %1478 = vsyncpa [#allocation18], 1
    %1479 = vsyncpa [#allocation21], 1
    %1480 = vsyncpa [#allocation4], 1
    %s1481 = scalar_lea.sflag [#allocation4], 1
    %1482 = vsyncpa %s1481, 1

// kernel: tpu_custom_call.1
$region0: #{tpu_custom_call.1}
  #allocation0 [shape = 'u32[]', space=smem, size = 0x4, offset = 0x4, fixed_abs, tag = 'smem constant byte address 0x4 - core index']
  #allocation1 [shape = 'u32[144,128]{1,0:T(1,128)}', space=vmem, size = 0x12000, scoped, tag = 'internal scratch']
  %s0 = inlined_call_operand.hbm [shape: f32[2,8,32], index: 0, kind: input, shape index: {}]
  %s1 = inlined_call_operand.hbm [shape: f32[1,32], index: 1, kind: input, shape index: {}]
  %s2 = inlined_call_operand.hbm [shape: f32[1,32], index: 2, kind: input, shape index: {}]
  %s3 = inlined_call_operand.hbm [shape: bf16[32,96], index: 3, kind: input, shape index: {}]
  %s4 = inlined_call_operand.hbm [shape: f32[1,96], index: 4, kind: input, shape index: {}]
  %s5 = inlined_call_operand.hbm [shape: bf16[32,32], index: 5, kind: input, shape index: {}]
  %s6 = inlined_call_operand.hbm [shape: f32[1,32], index: 6, kind: input, shape index: {}]
  %s7 = inlined_call_operand.hbm [shape: f32[1,32], index: 7, kind: input, shape index: {}]
  %s8 = inlined_call_operand.hbm [shape: f32[1,32], index: 8, kind: input, shape index: {}]
  %s9 = inlined_call_operand.hbm [shape: bf16[32,64], index: 9, kind: input, shape index: {}]
  %s10 = inlined_call_operand.hbm [shape: f32[1,64], index: 10, kind: input, shape index: {}]
  %s11 = inlined_call_operand.hbm [shape: bf16[64,32], index: 11, kind: input, shape index: {}]
  %s12 = inlined_call_operand.hbm [shape: f32[1,32], index: 12, kind: input, shape index: {}]
  %s13 = inlined_call_operand.hbm [shape: f32[2,8,32], index: 13, kind: output, shape index: {}]
  %s14 = sld [smem:[#allocation0]]
  $region137: #{tpu_custom_call.1} parent=0
    _
  %s16 = ssub.s32 1, %s14
  %s17 = scalar_select 0, %s16, %s14
  $region1: #{tpu_custom_call.1} parent=0
    #allocation2 [shape = 'u8[8192]{0}', space=vmem, size = 0x2000, scoped, tag = 'input window, operand 0']
    #allocation3 [shape = 's32[2]{0}', space=sflag, size = 0x8, scoped, tag = 'scoped memory for tpu_custom_call.1']
    #allocation4 [shape = 's32[2]{0}', space=sflag, size = 0x8, scoped, tag = 'scoped memory for tpu_custom_call.1']
    #allocation5 [shape = 'u8[512]{0}', space=vmem, size = 0x400, scoped, tag = 'input window, operand 1, single buffered']
    #allocation6 [shape = 's32[1]{0}', space=sflag, size = 0x4, scoped, tag = 'scoped memory for tpu_custom_call.1']
    #allocation7 [shape = 'u8[512]{0}', space=vmem, size = 0x400, scoped, tag = 'input window, operand 2, single buffered']
    #allocation8 [shape = 'u8[8192]{0}', space=vmem, size = 0x2000, scoped, tag = 'input window, operand 3, single buffered']
    #allocation9 [shape = 's32[1]{0}', space=sflag, size = 0x4, scoped, tag = 'scoped memory for tpu_custom_call.1']
    #allocation10 [shape = 'u8[512]{0}', space=vmem, size = 0x400, scoped, tag = 'input window, operand 4, single buffered']
    #allocation11 [shape = 'u8[8192]{0}', space=vmem, size = 0x2000, scoped, tag = 'input window, operand 5, single buffered']
    #allocation12 [shape = 's32[1]{0}', space=sflag, size = 0x4, scoped, tag = 'scoped memory for tpu_custom_call.1']
    #allocation13 [shape = 'u8[512]{0}', space=vmem, size = 0x400, scoped, tag = 'input window, operand 6, single buffered']
    #allocation14 [shape = 'u8[512]{0}', space=vmem, size = 0x400, scoped, tag = 'input window, operand 7, single buffered']
    #allocation15 [shape = 's32[1]{0}', space=sflag, size = 0x4, scoped, tag = 'scoped memory for tpu_custom_call.1']
    #allocation16 [shape = 'u8[512]{0}', space=vmem, size = 0x400, scoped, tag = 'input window, operand 8, single buffered']
    #allocation17 [shape = 'u8[8192]{0}', space=vmem, size = 0x2000, scoped, tag = 'input window, operand 9, single buffered']
    #allocation18 [shape = 's32[1]{0}', space=sflag, size = 0x4, scoped, tag = 'scoped memory for tpu_custom_call.1']
    #allocation19 [shape = 'u8[512]{0}', space=vmem, size = 0x400, scoped, tag = 'input window, operand 10, single buffered']
    #allocation20 [shape = 'u8[16384]{0}', space=vmem, size = 0x4000, scoped, tag = 'input window, operand 11, single buffered']
    #allocation21 [shape = 's32[1]{0}', space=sflag, size = 0x4, scoped, tag = 'scoped memory for tpu_custom_call.1']
    #allocation22 [shape = 'u8[512]{0}', space=vmem, size = 0x400, scoped, tag = 'input window, operand 12, single buffered']
    #allocation23 [shape = 'u8[8192]{0}', space=vmem, size = 0x2000, scoped, tag = 'output window, operand 0']
    %18 = vsyncpa [#allocation3], 0
    %s19 = scalar_lea.sflag [#allocation3], 1
    %20 = vsyncpa %s19, 0
    %21 = vsyncpa [#allocation6], 0
    %22 = vsyncpa [#allocation9], 0
    %23 = vsyncpa [#allocation12], 0
    %24 = vsyncpa [#allocation15], 0
    %25 = vsyncpa [#allocation18], 0
    %26 = vsyncpa [#allocation21], 0
    %27 = vsyncpa [#allocation4], 0
    %s28 = scalar_lea.sflag [#allocation4], 1
    %29 = vsyncpa %s28, 0
    loop: start=0, step=1, limit=4
    $region2: #{tpu_custom_call.1} parent=1 // loop_pre_header
      _
    $region3: #{tpu_custom_call.1} parent=1 // loop_header
      %s31 = sphi 0, %s35
      %p32 = scmp.ge.s32.totalorder %s31, 4
      %s41 = sphi 0, %s43
      %s44 = sphi 0, %s41
      %s45 = sphi 0, %s44
      %s61 = sphi 0, %s45
      %s65 = sphi 0, %s65
      %s67 = sphi 0, %s65
      %s68 = sphi 0, %s67
      %s82 = sphi 0, %s68
      %s86 = sphi 0, %s86
      %s88 = sphi 0, %s86
      %s89 = sphi 0, %s88
      %s103 = sphi 0, %s89
      %s107 = sphi 0, %s107
      %s109 = sphi 0, %s107
      %s110 = sphi 0, %s109
      %s124 = sphi 0, %s110
      %s128 = sphi 0, %s128
      %s130 = sphi 0, %s128
      %s131 = sphi 0, %s130
      %s145 = sphi 0, %s131
      %s149 = sphi 0, %s149
      %s151 = sphi 0, %s149
      %s152 = sphi 0, %s151
      %s166 = sphi 0, %s152
      %s170 = sphi 0, %s170
      %s172 = sphi 0, %s170
      %s173 = sphi 0, %s172
      %s187 = sphi 0, %s173
      %s191 = sphi 0, %s191
      %s193 = sphi 0, %s191
      %s194 = sphi 0, %s193
      %s208 = sphi 0, %s194
      %s212 = sphi 0, %s212
      %s214 = sphi 0, %s212
      %s215 = sphi 0, %s214
      %s229 = sphi 0, %s215
      %s233 = sphi 0, %s233
      %s235 = sphi 0, %s233
      %s236 = sphi 0, %s235
      %s250 = sphi 0, %s236
      %s254 = sphi 0, %s254
      %s256 = sphi 0, %s254
      %s257 = sphi 0, %s256
      %s271 = sphi 0, %s257
      %s275 = sphi 0, %s275
      %s277 = sphi 0, %s275
      %s278 = sphi 0, %s277
      %s292 = sphi 0, %s278
      %s296 = sphi 0, %s296
      %s298 = sphi 0, %s296
      %s299 = sphi 0, %s298
      %s313 = sphi 0, %s299
      %s319 = sphi 0, %s321
      %s322 = sphi 0, %s319
      %s323 = sphi 0, %s322
      %s339 = sphi 0, %s323
    $region4: #{tpu_custom_call.1} parent=1 // loop_header_branch
      %34 = sbr.rel (%p32) target = $region8
    $region5: #{tpu_custom_call.1} parent=1 // loop_body
      %s36 = ssub.s32 %s31, 1
      %s37 = ssub.s32 %s31, 2
      %s38 = sadd.s32 %s31, 1
      %s39 = ssub.s32 %s31, %s38
      %p40 = scmp.eq.s32.totalorder %s39, 0
      %s42 = sadd.s32 %s41, 1
      %s43 = scalar_select %p40, %s41, %s42
      %p46 = pneg %p40
      %p47 = scmp.eq.s32.totalorder %s31, 1
      %p48 = por %p46, %p47
      %p49 = scmp.ne.s32.totalorder %s41, %s44
      %p50 = scmp.eq.s32.totalorder %s31, 0
      %p51 = por %p49, %p50
      %p52 = scmp.ne.s32.totalorder %s41, %s44
      %p53 = scmp.eq.s32.totalorder %s36, 1
      %p54 = por %p52, %p53
      %p55 = scmp.ne.s32.totalorder %s44, %s45
      %p56 = scmp.eq.s32.totalorder %s36, 0
      %p57 = por %p55, %p56
      %p58 = scmp.ne.s32.totalorder %s44, %s45
      %p59 = scmp.eq.s32.totalorder %s37, 1
      %p60 = por %p58, %p59
      %p62 = scmp.ne.s32.totalorder %s45, %s61
      %p63 = scmp.eq.s32.totalorder %s37, 0
      %p64 = por %p62, %p63
      %s66 = sadd.s32 %s65, 1
      %p69 = scmp.eq.s32.totalorder %s31, 1
      %p70 = scmp.ne.s32.totalorder %s65, %s67
      %p71 = scmp.eq.s32.totalorder %s31, 0
      %p72 = por %p70, %p71
      %p73 = scmp.ne.s32.totalorder %s65, %s67
      %p74 = scmp.eq.s32.totalorder %s36, 1
      %p75 = por %p73, %p74
      %p76 = scmp.ne.s32.totalorder %s67, %s68
      %p77 = scmp.eq.s32.totalorder %s36, 0
      %p78 = por %p76, %p77
      %p79 = scmp.ne.s32.totalorder %s67, %s68
      %p80 = scmp.eq.s32.totalorder %s37, 1
      %p81 = por %p79, %p80
      %p83 = scmp.ne.s32.totalorder %s68, %s82
      %p84 = scmp.eq.s32.totalorder %s37, 0
      %p85 = por %p83, %p84
      %s87 = sadd.s32 %s86, 1
      %p90 = scmp.eq.s32.totalorder %s31, 1
      %p91 = scmp.ne.s32.totalorder %s86, %s88
      %p92 = scmp.eq.s32.totalorder %s31, 0
      %p93 = por %p91, %p92
      %p94 = scmp.ne.s32.totalorder %s86, %s88
      %p95 = scmp.eq.s32.totalorder %s36, 1
      %p96 = por %p94, %p95
      %p97 = scmp.ne.s32.totalorder %s88, %s89
      %p98 = scmp.eq.s32.totalorder %s36, 0
      %p99 = por %p97, %p98
      %p100 = scmp.ne.s32.totalorder %s88, %s89
      %p101 = scmp.eq.s32.totalorder %s37, 1
      %p102 = por %p100, %p101
      %p104 = scmp.ne.s32.totalorder %s89, %s103
      %p105 = scmp.eq.s32.totalorder %s37, 0
      %p106 = por %p104, %p105
      %s108 = sadd.s32 %s107, 1
      %p111 = scmp.eq.s32.totalorder %s31, 1
      %p112 = scmp.ne.s32.totalorder %s107, %s109
      %p113 = scmp.eq.s32.totalorder %s31, 0
      %p114 = por %p112, %p113
      %p115 = scmp.ne.s32.totalorder %s107, %s109
      %p116 = scmp.eq.s32.totalorder %s36, 1
      %p117 = por %p115, %p116
      %p118 = scmp.ne.s32.totalorder %s109, %s110
      %p119 = scmp.eq.s32.totalorder %s36, 0
      %p120 = por %p118, %p119
      %p121 = scmp.ne.s32.totalorder %s109, %s110
      %p122 = scmp.eq.s32.totalorder %s37, 1
      %p123 = por %p121, %p122
      %p125 = scmp.ne.s32.totalorder %s110, %s124
      %p126 = scmp.eq.s32.totalorder %s37, 0
      %p127 = por %p125, %p126
      %s129 = sadd.s32 %s128, 1
      %p132 = scmp.eq.s32.totalorder %s31, 1
      %p133 = scmp.ne.s32.totalorder %s128, %s130
      %p134 = scmp.eq.s32.totalorder %s31, 0
      %p135 = por %p133, %p134
      %p136 = scmp.ne.s32.totalorder %s128, %s130
      %p137 = scmp.eq.s32.totalorder %s36, 1
      %p138 = por %p136, %p137
      %p139 = scmp.ne.s32.totalorder %s130, %s131
      %p140 = scmp.eq.s32.totalorder %s36, 0
      %p141 = por %p139, %p140
      %p142 = scmp.ne.s32.totalorder %s130, %s131
      %p143 = scmp.eq.s32.totalorder %s37, 1
      %p144 = por %p142, %p143
      %p146 = scmp.ne.s32.totalorder %s131, %s145
      %p147 = scmp.eq.s32.totalorder %s37, 0
      %p148 = por %p146, %p147
      %s150 = sadd.s32 %s149, 1
      %p153 = scmp.eq.s32.totalorder %s31, 1
      %p154 = scmp.ne.s32.totalorder %s149, %s151
      %p155 = scmp.eq.s32.totalorder %s31, 0
      %p156 = por %p154, %p155
      %p157 = scmp.ne.s32.totalorder %s149, %s151
      %p158 = scmp.eq.s32.totalorder %s36, 1
      %p159 = por %p157, %p158
      %p160 = scmp.ne.s32.totalorder %s151, %s152
      %p161 = scmp.eq.s32.totalorder %s36, 0
      %p162 = por %p160, %p161
      %p163 = scmp.ne.s32.totalorder %s151, %s152
      %p164 = scmp.eq.s32.totalorder %s37, 1
      %p165 = por %p163, %p164
      %p167 = scmp.ne.s32.totalorder %s152, %s166
      %p168 = scmp.eq.s32.totalorder %s37, 0
      %p169 = por %p167, %p168
      %s171 = sadd.s32 %s170, 1
      %p174 = scmp.eq.s32.totalorder %s31, 1
      %p175 = scmp.ne.s32.totalorder %s170, %s172
      %p176 = scmp.eq.s32.totalorder %s31, 0
      %p177 = por %p175, %p176
      %p178 = scmp.ne.s32.totalorder %s170, %s172
      %p179 = scmp.eq.s32.totalorder %s36, 1
      %p180 = por %p178, %p179
      %p181 = scmp.ne.s32.totalorder %s172, %s173
      %p182 = scmp.eq.s32.totalorder %s36, 0
      %p183 = por %p181, %p182
      %p184 = scmp.ne.s32.totalorder %s172, %s173
      %p185 = scmp.eq.s32.totalorder %s37, 1
      %p186 = por %p184, %p185
      %p188 = scmp.ne.s32.totalorder %s173, %s187
      %p189 = scmp.eq.s32.totalorder %s37, 0
      %p190 = por %p188, %p189
      %s192 = sadd.s32 %s191, 1
      %p195 = scmp.eq.s32.totalorder %s31, 1
      %p196 = scmp.ne.s32.totalorder %s191, %s193
      %p197 = scmp.eq.s32.totalorder %s31, 0
      %p198 = por %p196, %p197
      %p199 = scmp.ne.s32.totalorder %s191, %s193
      %p200 = scmp.eq.s32.totalorder %s36, 1
      %p201 = por %p199, %p200
      %p202 = scmp.ne.s32.totalorder %s193, %s194
      %p203 = scmp.eq.s32.totalorder %s36, 0
      %p204 = por %p202, %p203
      %p205 = scmp.ne.s32.totalorder %s193, %s194
      %p206 = scmp.eq.s32.totalorder %s37, 1
      %p207 = por %p205, %p206
      %p209 = scmp.ne.s32.totalorder %s194, %s208
      %p210 = scmp.eq.s32.totalorder %s37, 0
      %p211 = por %p209, %p210
      %s213 = sadd.s32 %s212, 1
      %p216 = scmp.eq.s32.totalorder %s31, 1
      %p217 = scmp.ne.s32.totalorder %s212, %s214
      %p218 = scmp.eq.s32.totalorder %s31, 0
      %p219 = por %p217, %p218
      %p220 = scmp.ne.s32.totalorder %s212, %s214
      %p221 = scmp.eq.s32.totalorder %s36, 1
      %p222 = por %p220, %p221
      %p223 = scmp.ne.s32.totalorder %s214, %s215
      %p224 = scmp.eq.s32.totalorder %s36, 0
      %p225 = por %p223, %p224
      %p226 = scmp.ne.s32.totalorder %s214, %s215
      %p227 = scmp.eq.s32.totalorder %s37, 1
      %p228 = por %p226, %p227
      %p230 = scmp.ne.s32.totalorder %s215, %s229
      %p231 = scmp.eq.s32.totalorder %s37, 0
      %p232 = por %p230, %p231
      %s234 = sadd.s32 %s233, 1
      %p237 = scmp.eq.s32.totalorder %s31, 1
      %p238 = scmp.ne.s32.totalorder %s233, %s235
      %p239 = scmp.eq.s32.totalorder %s31, 0
      %p240 = por %p238, %p239
      %p241 = scmp.ne.s32.totalorder %s233, %s235
      %p242 = scmp.eq.s32.totalorder %s36, 1
      %p243 = por %p241, %p242
      %p244 = scmp.ne.s32.totalorder %s235, %s236
      %p245 = scmp.eq.s32.totalorder %s36, 0
      %p246 = por %p244, %p245
      %p247 = scmp.ne.s32.totalorder %s235, %s236
      %p248 = scmp.eq.s32.totalorder %s37, 1
      %p249 = por %p247, %p248
      %p251 = scmp.ne.s32.totalorder %s236, %s250
      %p252 = scmp.eq.s32.totalorder %s37, 0
      %p253 = por %p251, %p252
      %s255 = sadd.s32 %s254, 1
      %p258 = scmp.eq.s32.totalorder %s31, 1
      %p259 = scmp.ne.s32.totalorder %s254, %s256
      %p260 = scmp.eq.s32.totalorder %s31, 0
      %p261 = por %p259, %p260
      %p262 = scmp.ne.s32.totalorder %s254, %s256
      %p263 = scmp.eq.s32.totalorder %s36, 1
      %p264 = por %p262, %p263
      %p265 = scmp.ne.s32.totalorder %s256, %s257
      %p266 = scmp.eq.s32.totalorder %s36, 0
      %p267 = por %p265, %p266
      %p268 = scmp.ne.s32.totalorder %s256, %s257
      %p269 = scmp.eq.s32.totalorder %s37, 1
      %p270 = por %p268, %p269
      %p272 = scmp.ne.s32.totalorder %s257, %s271
      %p273 = scmp.eq.s32.totalorder %s37, 0
      %p274 = por %p272, %p273
      %s276 = sadd.s32 %s275, 1
      %p279 = scmp.eq.s32.totalorder %s31, 1
      %p280 = scmp.ne.s32.totalorder %s275, %s277
      %p281 = scmp.eq.s32.totalorder %s31, 0
      %p282 = por %p280, %p281
      %p283 = scmp.ne.s32.totalorder %s275, %s277
      %p284 = scmp.eq.s32.totalorder %s36, 1
      %p285 = por %p283, %p284
      %p286 = scmp.ne.s32.totalorder %s277, %s278
      %p287 = scmp.eq.s32.totalorder %s36, 0
      %p288 = por %p286, %p287
      %p289 = scmp.ne.s32.totalorder %s277, %s278
      %p290 = scmp.eq.s32.totalorder %s37, 1
      %p291 = por %p289, %p290
      %p293 = scmp.ne.s32.totalorder %s278, %s292
      %p294 = scmp.eq.s32.totalorder %s37, 0
      %p295 = por %p293, %p294
      %s297 = sadd.s32 %s296, 1
      %p300 = scmp.eq.s32.totalorder %s31, 1
      %p301 = scmp.ne.s32.totalorder %s296, %s298
      %p302 = scmp.eq.s32.totalorder %s31, 0
      %p303 = por %p301, %p302
      %p304 = scmp.ne.s32.totalorder %s296, %s298
      %p305 = scmp.eq.s32.totalorder %s36, 1
      %p306 = por %p304, %p305
      %p307 = scmp.ne.s32.totalorder %s298, %s299
      %p308 = scmp.eq.s32.totalorder %s36, 0
      %p309 = por %p307, %p308
      %p310 = scmp.ne.s32.totalorder %s298, %s299
      %p311 = scmp.eq.s32.totalorder %s37, 1
      %p312 = por %p310, %p311
      %p314 = scmp.ne.s32.totalorder %s299, %s313
      %p315 = scmp.eq.s32.totalorder %s37, 0
      %p316 = por %p314, %p315
      %s317 = ssub.s32 %s31, %s38
      %p318 = scmp.eq.s32.totalorder %s317, 0
      %s320 = sadd.s32 %s319, 1
      %s321 = scalar_select %p318, %s319, %s320
      %p324 = pneg %p318
      %p325 = scmp.eq.s32.totalorder %s31, 1
      %p326 = por %p324, %p325
      %p327 = scmp.ne.s32.totalorder %s319, %s322
      %p328 = scmp.eq.s32.totalorder %s31, 0
      %p329 = por %p327, %p328
      %p330 = scmp.ne.s32.totalorder %s319, %s322
      %p331 = scmp.eq.s32.totalorder %s36, 1
      %p332 = por %p330, %p331
      %p333 = scmp.ne.s32.totalorder %s322, %s323
      %p334 = scmp.eq.s32.totalorder %s36, 0
      %p335 = por %p333, %p334
      %p336 = scmp.ne.s32.totalorder %s322, %s323
      %p337 = scmp.eq.s32.totalorder %s37, 1
      %p338 = por %p336, %p337
      %p340 = scmp.ne.s32.totalorder %s323, %s339
      %p341 = scmp.eq.s32.totalorder %s37, 0
      %p342 = por %p340, %p341
      %p343 = scmp.le.s32.totalorder 1, %s31
      %p344 = scmp.lt.s32.totalorder %s31, 3
      %p345 = pnand %p343, %p344
      %p346 = pneg %p345
      // Predicated region
      $region9: #{tpu_custom_call.1} parent=5 // pred_check
        _
      $region10: #{tpu_custom_call.1} parent=5 // pred_check_branch
        %348 = sbr.rel (%p345) target = $region12
      $region11: #{tpu_custom_call.1} parent=5 // pred_region
        %s349 = ssub.s32 %s31, 1
        // Predicated region
        $region13: #{tpu_custom_call.1} parent=11 // pred_check
          %p350 = pneg %p78
        $region14: #{tpu_custom_call.1} parent=11 // pred_check_branch
          %352 = sbr.rel (%p350) target = $region16
        $region15: #{tpu_custom_call.1} parent=11 // pred_region
          %s354 = ssub.s32 16, 16
          %355 = vsyncadd [#allocation6], %s354
          %s357 = sshll.u32 [#allocation5], 4
          %s358 = int_to_ptr.vmem [resolvable:$true] %s357
          %360 = dma.hbm_to_vmem [thread:$0]  %s1, 16, %s358, [#allocation6]
        $region16: #{tpu_custom_call.1} parent=11 // pred_fallthru
          _
        // Predicated region
        $region17: #{tpu_custom_call.1} parent=11 // pred_check
          %p361 = pneg %p99
        $region18: #{tpu_custom_call.1} parent=11 // pred_check_branch
          %363 = sbr.rel (%p361) target = $region20
        $region19: #{tpu_custom_call.1} parent=11 // pred_region
          %s365 = ssub.s32 16, 16
          %366 = vsyncadd [#allocation6], %s365
          %s368 = sshll.u32 [#allocation7], 4
          %s369 = int_to_ptr.vmem [resolvable:$true] %s368
          %371 = dma.hbm_to_vmem [thread:$0]  %s2, 16, %s369, [#allocation6]
        $region20: #{tpu_custom_call.1} parent=11 // pred_fallthru
          _
        // Predicated region
        $region21: #{tpu_custom_call.1} parent=11 // pred_check
          %p372 = pneg %p120
        $region22: #{tpu_custom_call.1} parent=11 // pred_check_branch
          %374 = sbr.rel (%p372) target = $region24
        $region23: #{tpu_custom_call.1} parent=11 // pred_region
          %s376 = ssub.s32 256, 256
          %377 = vsyncadd [#allocation9], %s376
          %s378 = sshll.u32 [#allocation8], 4
          %s379 = int_to_ptr.vmem [resolvable:$true] %s378
          %384 = dma.hbm_to_vmem [thread:$0]  %s3, 256, %s379, [#allocation9], 64, 64, 4
        $region24: #{tpu_custom_call.1} parent=11 // pred_fallthru
          _
        // Predicated region
        $region25: #{tpu_custom_call.1} parent=11 // pred_check
          %p385 = pneg %p141
        $region26: #{tpu_custom_call.1} parent=11 // pred_check_branch
          %387 = sbr.rel (%p385) target = $region28
        $region27: #{tpu_custom_call.1} parent=11 // pred_region
          %s389 = ssub.s32 16, 16
          %390 = vsyncadd [#allocation9], %s389
          %s392 = sshll.u32 [#allocation10], 4
          %s393 = int_to_ptr.vmem [resolvable:$true] %s392
          %395 = dma.hbm_to_vmem [thread:$0]  %s4, 16, %s393, [#allocation9]
        $region28: #{tpu_custom_call.1} parent=11 // pred_fallthru
          _
        // Predicated region
        $region29: #{tpu_custom_call.1} parent=11 // pred_check
          %p396 = pneg %p162
        $region30: #{tpu_custom_call.1} parent=11 // pred_check_branch
          %398 = sbr.rel (%p396) target = $region32
        $region31: #{tpu_custom_call.1} parent=11 // pred_region
          %s400 = ssub.s32 256, 256
          %401 = vsyncadd [#allocation12], %s400
          %s402 = sshll.u32 [#allocation11], 4
          %s403 = int_to_ptr.vmem [resolvable:$true] %s402
          %408 = dma.hbm_to_vmem [thread:$0]  %s5, 256, %s403, [#allocation12], 64, 64, 4
        $region32: #{tpu_custom_call.1} parent=11 // pred_fallthru
          _
        // Predicated region
        $region33: #{tpu_custom_call.1} parent=11 // pred_check
          %p409 = pneg %p183
        $region34: #{tpu_custom_call.1} parent=11 // pred_check_branch
          %411 = sbr.rel (%p409) target = $region36
        $region35: #{tpu_custom_call.1} parent=11 // pred_region
          %s413 = ssub.s32 16, 16
          %414 = vsyncadd [#allocation12], %s413
          %s416 = sshll.u32 [#allocation13], 4
          %s417 = int_to_ptr.vmem [resolvable:$true] %s416
          %419 = dma.hbm_to_vmem [thread:$0]  %s6, 16, %s417, [#allocation12]
        $region36: #{tpu_custom_call.1} parent=11 // pred_fallthru
          _
        // Predicated region
        $region37: #{tpu_custom_call.1} parent=11 // pred_check
          %p420 = pneg %p204
        $region38: #{tpu_custom_call.1} parent=11 // pred_check_branch
          %422 = sbr.rel (%p420) target = $region40
        $region39: #{tpu_custom_call.1} parent=11 // pred_region
          %s424 = ssub.s32 16, 16
          %425 = vsyncadd [#allocation15], %s424
          %s427 = sshll.u32 [#allocation14], 4
          %s428 = int_to_ptr.vmem [resolvable:$true] %s427
          %430 = dma.hbm_to_vmem [thread:$0]  %s7, 16, %s428, [#allocation15]
        $region40: #{tpu_custom_call.1} parent=11 // pred_fallthru
          _
        // Predicated region
        $region41: #{tpu_custom_call.1} parent=11 // pred_check
          %p431 = pneg %p225
        $region42: #{tpu_custom_call.1} parent=11 // pred_check_branch
          %433 = sbr.rel (%p431) target = $region44
        $region43: #{tpu_custom_call.1} parent=11 // pred_region
          %s435 = ssub.s32 16, 16
          %436 = vsyncadd [#allocation15], %s435
          %s438 = sshll.u32 [#allocation16], 4
          %s439 = int_to_ptr.vmem [resolvable:$true] %s438
          %441 = dma.hbm_to_vmem [thread:$0]  %s8, 16, %s439, [#allocation15]
        $region44: #{tpu_custom_call.1} parent=11 // pred_fallthru
          _
        // Predicated region
        $region45: #{tpu_custom_call.1} parent=11 // pred_check
          %p442 = pneg %p246
        $region46: #{tpu_custom_call.1} parent=11 // pred_check_branch
          %444 = sbr.rel (%p442) target = $region48
        $region47: #{tpu_custom_call.1} parent=11 // pred_region
          %s446 = ssub.s32 256, 256
          %447 = vsyncadd [#allocation18], %s446
          %s448 = sshll.u32 [#allocation17], 4
          %s449 = int_to_ptr.vmem [resolvable:$true] %s448
          %454 = dma.hbm_to_vmem [thread:$0]  %s9, 256, %s449, [#allocation18], 64, 64, 4
        $region48: #{tpu_custom_call.1} parent=11 // pred_fallthru
          _
        // Predicated region
        $region49: #{tpu_custom_call.1} parent=11 // pred_check
          %p455 = pneg %p267
        $region50: #{tpu_custom_call.1} parent=11 // pred_check_branch
          %457 = sbr.rel (%p455) target = $region52
        $region51: #{tpu_custom_call.1} parent=11 // pred_region
          %s459 = ssub.s32 16, 16
          %460 = vsyncadd [#allocation18], %s459
          %s462 = sshll.u32 [#allocation19], 4
          %s463 = int_to_ptr.vmem [resolvable:$true] %s462
          %465 = dma.hbm_to_vmem [thread:$0]  %s10, 16, %s463, [#allocation18]
        $region52: #{tpu_custom_call.1} parent=11 // pred_fallthru
          _
        // Predicated region
        $region53: #{tpu_custom_call.1} parent=11 // pred_check
          %p466 = pneg %p288
        $region54: #{tpu_custom_call.1} parent=11 // pred_check_branch
          %468 = sbr.rel (%p466) target = $region56
        $region55: #{tpu_custom_call.1} parent=11 // pred_region
          %s470 = ssub.s32 512, 512
          %471 = vsyncadd [#allocation21], %s470
          %s472 = sshll.u32 [#allocation20], 4
          %s473 = int_to_ptr.vmem [resolvable:$true] %s472
          %478 = dma.hbm_to_vmem [thread:$0]  %s11, 512, %s473, [#allocation21], 64, 64, 4
        $region56: #{tpu_custom_call.1} parent=11 // pred_fallthru
          _
        // Predicated region
        $region57: #{tpu_custom_call.1} parent=11 // pred_check
          %p479 = pneg %p309
        $region58: #{tpu_custom_call.1} parent=11 // pred_check_branch
          %481 = sbr.rel (%p479) target = $region60
        $region59: #{tpu_custom_call.1} parent=11 // pred_region
          %s483 = ssub.s32 16, 16
          %484 = vsyncadd [#allocation21], %s483
          %s486 = sshll.u32 [#allocation22], 4
          %s487 = int_to_ptr.vmem [resolvable:$true] %s486
          %489 = dma.hbm_to_vmem [thread:$0]  %s12, 16, %s487, [#allocation21]
        $region60: #{tpu_custom_call.1} parent=11 // pred_fallthru
          _
      $region12: #{tpu_custom_call.1} parent=5 // pred_fallthru
        _
      %p490 = scmp.lt.s32.totalorder %s31, 2
      // Predicated region
      $region61: #{tpu_custom_call.1} parent=5 // pred_check
        %p491 = pneg %p490
      $region62: #{tpu_custom_call.1} parent=5 // pred_check_branch
        %493 = sbr.rel (%p491) target = $region64
      $region63: #{tpu_custom_call.1} parent=5 // pred_region
        // Predicated region
        $region65: #{tpu_custom_call.1} parent=63 // pred_check
          %p494 = pneg %p51
        $region66: #{tpu_custom_call.1} parent=63 // pred_check_branch
          %496 = sbr.rel (%p494) target = $region68
        $region67: #{tpu_custom_call.1} parent=63 // pred_region
          %s497 = sand.u32 %s41, 1
          %s498 = scalar_lea.sflag [#allocation3], %s497
          %s499 = sand.u32 %s41, 1
          %s500 = smul.addr %s499, 8
          %s501 = scalar_lea.vmem [#allocation2], %s500
          %s503 = ssub.s32 128, 128
          %504 = vsyncadd %s498, %s503
          %s505 = smul.addr %s31, 128
          %s506 = scalar_lea.hbm %s0, %s505
          %s508 = sshll.u32 %s501, 4
          %s509 = int_to_ptr.vmem [resolvable:$true] %s508
          %511 = dma.hbm_to_vmem [thread:$0]  %s506, 128, %s509, %s498
        $region68: #{tpu_custom_call.1} parent=63 // pred_fallthru
          _
      $region64: #{tpu_custom_call.1} parent=5 // pred_fallthru
        _
      %p512 = scmp.le.s32.totalorder 1, %s31
      %p513 = scmp.lt.s32.totalorder %s31, 3
      %p514 = pnand %p512, %p513
      %p515 = pneg %p514
      // Predicated region
      $region69: #{tpu_custom_call.1} parent=5 // pred_check
        _
      $region70: #{tpu_custom_call.1} parent=5 // pred_check_branch
        %517 = sbr.rel (%p514) target = $region72
      $region71: #{tpu_custom_call.1} parent=5 // pred_region
        %s518 = ssub.s32 %s31, 1
        %s519 = sand.u32 %s44, 1
        %s520 = scalar_lea.sflag [#allocation3], %s519
        %s521 = sand.u32 %s44, 1
        %s522 = smul.addr %s521, 8
        %s523 = scalar_lea.vmem [#allocation2], %s522
        // Predicated region
        $region73: #{tpu_custom_call.1} parent=71 // pred_check
          %p524 = pneg %p57
        $region74: #{tpu_custom_call.1} parent=71 // pred_check_branch
          %526 = sbr.rel (%p524) target = $region76
        $region75: #{tpu_custom_call.1} parent=71 // pred_region
          %527 = dma.done %s520, 128
        $region76: #{tpu_custom_call.1} parent=71 // pred_fallthru
          _
        // Predicated region
        $region77: #{tpu_custom_call.1} parent=71 // pred_check
          %p528 = pneg %p78
        $region78: #{tpu_custom_call.1} parent=71 // pred_check_branch
          %530 = sbr.rel (%p528) target = $region80
        $region79: #{tpu_custom_call.1} parent=71 // pred_region
          %531 = dma.done [#allocation6], 16
        $region80: #{tpu_custom_call.1} parent=71 // pred_fallthru
          _
        // Predicated region
        $region81: #{tpu_custom_call.1} parent=71 // pred_check
          %p532 = pneg %p99
        $region82: #{tpu_custom_call.1} parent=71 // pred_check_branch
          %534 = sbr.rel (%p532) target = $region84
        $region83: #{tpu_custom_call.1} parent=71 // pred_region
          %535 = dma.done [#allocation6], 16
        $region84: #{tpu_custom_call.1} parent=71 // pred_fallthru
          _
        // Predicated region
        $region85: #{tpu_custom_call.1} parent=71 // pred_check
          %p536 = pneg %p120
        $region86: #{tpu_custom_call.1} parent=71 // pred_check_branch
          %538 = sbr.rel (%p536) target = $region88
        $region87: #{tpu_custom_call.1} parent=71 // pred_region
          %539 = dma.done [#allocation9], 256
        $region88: #{tpu_custom_call.1} parent=71 // pred_fallthru
          _
        // Predicated region
        $region89: #{tpu_custom_call.1} parent=71 // pred_check
          %p540 = pneg %p141
        $region90: #{tpu_custom_call.1} parent=71 // pred_check_branch
          %542 = sbr.rel (%p540) target = $region92
        $region91: #{tpu_custom_call.1} parent=71 // pred_region
          %543 = dma.done [#allocation9], 16
        $region92: #{tpu_custom_call.1} parent=71 // pred_fallthru
          _
        // Predicated region
        $region93: #{tpu_custom_call.1} parent=71 // pred_check
          %p544 = pneg %p162
        $region94: #{tpu_custom_call.1} parent=71 // pred_check_branch
          %546 = sbr.rel (%p544) target = $region96
        $region95: #{tpu_custom_call.1} parent=71 // pred_region
          %547 = dma.done [#allocation12], 256
        $region96: #{tpu_custom_call.1} parent=71 // pred_fallthru
          _
        // Predicated region
        $region97: #{tpu_custom_call.1} parent=71 // pred_check
          %p548 = pneg %p183
        $region98: #{tpu_custom_call.1} parent=71 // pred_check_branch
          %550 = sbr.rel (%p548) target = $region100
        $region99: #{tpu_custom_call.1} parent=71 // pred_region
          %551 = dma.done [#allocation12], 16
        $region100: #{tpu_custom_call.1} parent=71 // pred_fallthru
          _
        // Predicated region
        $region101: #{tpu_custom_call.1} parent=71 // pred_check
          %p552 = pneg %p204
        $region102: #{tpu_custom_call.1} parent=71 // pred_check_branch
          %554 = sbr.rel (%p552) target = $region104
        $region103: #{tpu_custom_call.1} parent=71 // pred_region
          %555 = dma.done [#allocation15], 16
        $region104: #{tpu_custom_call.1} parent=71 // pred_fallthru
          _
        // Predicated region
        $region105: #{tpu_custom_call.1} parent=71 // pred_check
          %p556 = pneg %p225
        $region106: #{tpu_custom_call.1} parent=71 // pred_check_branch
          %558 = sbr.rel (%p556) target = $region108
        $region107: #{tpu_custom_call.1} parent=71 // pred_region
          %559 = dma.done [#allocation15], 16
        $region108: #{tpu_custom_call.1} parent=71 // pred_fallthru
          _
        // Predicated region
        $region109: #{tpu_custom_call.1} parent=71 // pred_check
          %p560 = pneg %p246
        $region110: #{tpu_custom_call.1} parent=71 // pred_check_branch
          %562 = sbr.rel (%p560) target = $region112
        $region111: #{tpu_custom_call.1} parent=71 // pred_region
          %563 = dma.done [#allocation18], 256
        $region112: #{tpu_custom_call.1} parent=71 // pred_fallthru
          _
        // Predicated region
        $region113: #{tpu_custom_call.1} parent=71 // pred_check
          %p564 = pneg %p267
        $region114: #{tpu_custom_call.1} parent=71 // pred_check_branch
          %566 = sbr.rel (%p564) target = $region116
        $region115: #{tpu_custom_call.1} parent=71 // pred_region
          %567 = dma.done [#allocation18], 16
        $region116: #{tpu_custom_call.1} parent=71 // pred_fallthru
          _
        // Predicated region
        $region117: #{tpu_custom_call.1} parent=71 // pred_check
          %p568 = pneg %p288
        $region118: #{tpu_custom_call.1} parent=71 // pred_check_branch
          %570 = sbr.rel (%p568) target = $region120
        $region119: #{tpu_custom_call.1} parent=71 // pred_region
          %571 = dma.done [#allocation21], 512
        $region120: #{tpu_custom_call.1} parent=71 // pred_fallthru
          _
        // Predicated region
        $region121: #{tpu_custom_call.1} parent=71 // pred_check
          %p572 = pneg %p309
        $region122: #{tpu_custom_call.1} parent=71 // pred_check_branch
          %574 = sbr.rel (%p572) target = $region124
        $region123: #{tpu_custom_call.1} parent=71 // pred_region
          %575 = dma.done [#allocation21], 16
        $region124: #{tpu_custom_call.1} parent=71 // pred_fallthru
          _
        %s576 = sand.u32 %s44, 1
        %s577 = scalar_lea.sflag [#allocation3], %s576
        %s578 = sand.u32 %s44, 1
        %s579 = smul.addr %s578, 8
        %s580 = scalar_lea.vmem [#allocation2], %s579
        %p581 = pneg %p57
        %p582 = pneg %p54
        %p583 = pneg %p78
        %p584 = pneg %p75
        %p585 = pneg %p99
        %p586 = pneg %p96
        %p587 = pneg %p120
        %p588 = pneg %p117
        %p589 = pneg %p141
        %p590 = pneg %p138
        %p591 = pneg %p162
        %p592 = pneg %p159
        %p593 = pneg %p183
        %p594 = pneg %p180
        %p595 = pneg %p204
        %p596 = pneg %p201
        %p597 = pneg %p225
        %p598 = pneg %p222
        %p599 = pneg %p246
        %p600 = pneg %p243
        %p601 = pneg %p267
        %p602 = pneg %p264
        %p603 = pneg %p288
        %p604 = pneg %p285
        %p605 = pneg %p309
        %p606 = pneg %p306
        %p607 = pneg %p335
        %p608 = pneg %p332
        %s609 = sand.u32 %s322, 1
        %s610 = scalar_lea.sflag [#allocation4], %s609
        %s611 = sand.u32 %s322, 1
        %s612 = smul.addr %s611, 8
        %s613 = scalar_lea.vmem [#allocation23], %s612
        %v615 = vld [vmem:[%s523] sm:$0xff]
        %v616 = vld [vmem:[#allocation5] sm:$0x1]
        %v617 = vld [vmem:[#allocation7] sm:$0x1]
        %vm618 = vcmask 261120
        %v619 = vsel %vm618, %v615, 0.0
        %620 = vadd.xlane.f32.xlu0 %v619
        %v621 = vpop.xlane.xlu0 %620
        %v622 = vrcp.pop 32.0
        %v623 = vmul.f32 %v621, %v622
        %v624 = vsub.f32 %v615, %v623
        %v625 = vmul.f32 %v624, %v624
        %v626 = vsel %vm618, %v625, 0.0
        %627 = vadd.xlane.f32.xlu0 %v626
        %v628 = vpop.xlane.xlu0 %627
        %v629 = vmul.f32 %v628, %v622
        %v630 = vadd.f32 %v629, 1e-05
        %v631 = vrsqrt.pop %v630
        %v632 = vmul.f32 %v624, %v631
        %v634 = vlaneseq
        %v635 = vshrl.u32 %v634, 7
        %v636 = vsub.s32 0, %v635
        %v637 = vrot.slane %v616, %v636
        %v639 = vmul.f32 %v632, %v637
        %v641 = vlaneseq
        %v642 = vshrl.u32 %v641, 7
        %v643 = vsub.s32 0, %v642
        %v644 = vrot.slane %v617, %v643
        %v646 = vadd.f32 %v639, %v644
        %v647 = vpack.c.bf16 %v646, %v646
        %v648 = vld [vmem:[#allocation8] sm:$0xf]
        %v649 = vld [vmem:[#allocation8 + $0x4] sm:$0xf]
        %v650 = vld [vmem:[#allocation8 + $0x8] sm:$0xf]
        %v651 = vld [vmem:[#allocation8 + $0xc] sm:$0xf]
        %v652 = vld [vmem:[#allocation10] sm:$0x1]
        %v654 = vlaneseq
        %v655 = vshrl.u32 %v654, 7
        %v656 = vsub.s32 0, %v655
        %v657 = vrot.slane %v652, %v656
        %v663 = vunpack.c.l.b16 %v648
        %v664 = vunpack.c.l.b16 %v649
        %v665 = vunpack.c.l.b16 %v650
        %v666 = vunpack.c.l.b16 %v651
        %v667 = vpack.c.b16 %v664, %v663
        %v668 = vpack.c.b16 %v666, %v665
        %v672 = vsel %vm618, %v647, 0
        %674 = vmatprep.subr.bf16.mxu0 0
        %675 = vmatpush1.bf16.msra.mxu0 %v667
        %676 = vmatprep.subr.bf16.mxu0 0
        %677 = vmatpush1.bf16.msra.mxu0 %v668
        %678 = vmatprep.subr.bf16.mxu0 0
        %679 = vmatpush1.bf16.msra.mxu0 0
        %680 = vmatprep.subr.bf16.mxu0 0
        %681 = vmatpush1.bf16.msra.mxu0 0
        %682 = vmatprep.subr.bf16.mxu0 0
        %683 = vmatpush1.bf16.msra.mxu0 0
        %684 = vmatprep.subr.bf16.mxu0 0
        %685 = vmatpush1.bf16.msra.mxu0 0
        %686 = vmatprep.subr.bf16.mxu0 0
        %687 = vmatpush1.bf16.msra.mxu0 0
        %688 = vmatprep.subr.bf16.mxu0 0
        %689 = vmatpush1.bf16.msra.mxu0 0
        %690 = vmatprep.subr.bf16.mxu0 0
        %691 = vmatpush1.bf16.msra.mxu0 0
        %692 = vmatprep.subr.bf16.mxu0 0
        %693 = vmatpush1.bf16.msra.mxu0 0
        %694 = vmatprep.subr.bf16.mxu0 0
        %695 = vmatpush1.bf16.msra.mxu0 0
        %696 = vmatprep.subr.bf16.mxu0 0
        %697 = vmatpush1.bf16.msra.mxu0 0
        %698 = vmatprep.subr.bf16.mxu0 0
        %699 = vmatpush1.bf16.msra.mxu0 0
        %700 = vmatprep.subr.bf16.mxu0 0
        %701 = vmatpush1.bf16.msra.mxu0 0
        %702 = vmatprep.subr.bf16.mxu0 0
        %703 = vmatpush1.bf16.msra.mxu0 0
        %704 = vmatprep.subr.bf16.mxu0 0
        %705 = vmatpush1.bf16.msra.mxu0 0
        %706 = vmatprep.mubr.bf16.mxu0 0
        %707 = vmatmul.mubr.bf16.gmra.mrb[0].mxu0 %v672
        %v708 = vpop.f32.mrb[0].mxu0
        %v709 = vadd.f32 %v657, %v708
        %v710 = vpop.f32.mrb[0].mxu0
        %v711 = vpop.f32.mrb[0].mxu0
        %v712 = vpop.f32.mrb[0].mxu0
        %713 = vdwg.mxu0
        %715 = vrot.lane.b32.xlu0 %v709, 120
        %v716 = vpop.permute.xlu0 %715
        %718 = vrot.lane.b32.xlu0 %v709, 112
        %v719 = vpop.permute.xlu0 %718
        %721 = vrot.lane.b32.xlu0 %v709, 104
        %v722 = vpop.permute.xlu0 %721
        %v724 = vpack.c.bf16 %v709, %v709
        %v725 = vpack.c.bf16 %v716, %v716
        %v726 = vpack.c.bf16 %v719, %v719
        %v727 = vpack.c.bf16 %v722, %v722
        %729 = vrot.lane.b32.xlu0 %v724, 96
        %v730 = vpop.permute.xlu0 %729
        %vm731 = vcmask 64512
        %v733 = vsel %vm731, %v724, 0
        %v736 = vsel %vm731, %v730, 0
        %738 = vmatprep.subr.bf16.mxu0 0
        %739 = vmatpush1.bf16.xpose.msra.mxu0 %v736
        %740 = vmatprep.subr.bf16.mxu0 0
        %741 = vmatpush1.bf16.xpose.msra.mxu0 0
        %742 = vmatprep.subr.bf16.mxu0 0
        %743 = vmatpush1.bf16.xpose.msra.mxu0 0
        %744 = vmatprep.subr.bf16.mxu0 0
        %745 = vmatpush1.bf16.xpose.msra.mxu0 0
        %746 = vmatprep.subr.bf16.mxu0 0
        %747 = vmatpush1.bf16.xpose.msra.mxu0 0
        %748 = vmatprep.subr.bf16.mxu0 0
        %749 = vmatpush1.bf16.xpose.msra.mxu0 0
        %750 = vmatprep.subr.bf16.mxu0 0
        %751 = vmatpush1.bf16.xpose.msra.mxu0 0
        %752 = vmatprep.subr.bf16.mxu0 0
        %753 = vmatpush1.bf16.xpose.msra.mxu0 0
        %754 = vmatprep.subr.bf16.mxu0 0
        %755 = vmatpush1.bf16.xpose.msra.mxu0 0
        %756 = vmatprep.subr.bf16.mxu0 0
        %757 = vmatpush1.bf16.xpose.msra.mxu0 0
        %758 = vmatprep.subr.bf16.mxu0 0
        %759 = vmatpush1.bf16.xpose.msra.mxu0 0
        %760 = vmatprep.subr.bf16.mxu0 0
        %761 = vmatpush1.bf16.xpose.msra.mxu0 0
        %762 = vmatprep.subr.bf16.mxu0 0
        %763 = vmatpush1.bf16.xpose.msra.mxu0 0
        %764 = vmatprep.subr.bf16.mxu0 0
        %765 = vmatpush1.bf16.xpose.msra.mxu0 0
        %766 = vmatprep.subr.bf16.mxu0 0
        %767 = vmatpush1.bf16.xpose.msra.mxu0 0
        %768 = vmatprep.subr.bf16.mxu0 0
        %769 = vmatpush1.bf16.xpose.msra.mxu0 0
        %770 = vmatprep.mubr.bf16.mxu0 0
        %771 = vmatmul.mubr.bf16.gmra.mrb[0].mxu0 %v733
        %v772 = vpop.f32.mrb[0].mxu0
        %v773 = vadd.f32 0.0, %v772
        %v774 = vpop.f32.mrb[0].mxu0
        %v775 = vpop.f32.mrb[0].mxu0
        %v776 = vpop.f32.mrb[0].mxu0
        %777 = vdwg.mxu0
        %779 = vrot.lane.b32.xlu0 %v725, 96
        %v780 = vpop.permute.xlu0 %779
        %v782 = vsel %vm731, %v725, 0
        %v785 = vsel %vm731, %v780, 0
        %787 = vmatprep.subr.bf16.mxu0 0
        %788 = vmatpush1.bf16.xpose.msra.mxu0 %v785
        %789 = vmatprep.subr.bf16.mxu0 0
        %790 = vmatpush1.bf16.xpose.msra.mxu0 0
        %791 = vmatprep.subr.bf16.mxu0 0
        %792 = vmatpush1.bf16.xpose.msra.mxu0 0
        %793 = vmatprep.subr.bf16.mxu0 0
        %794 = vmatpush1.bf16.xpose.msra.mxu0 0
        %795 = vmatprep.subr.bf16.mxu0 0
        %796 = vmatpush1.bf16.xpose.msra.mxu0 0
        %797 = vmatprep.subr.bf16.mxu0 0
        %798 = vmatpush1.bf16.xpose.msra.mxu0 0
        %799 = vmatprep.subr.bf16.mxu0 0
        %800 = vmatpush1.bf16.xpose.msra.mxu0 0
        %801 = vmatprep.subr.bf16.mxu0 0
        %802 = vmatpush1.bf16.xpose.msra.mxu0 0
        %803 = vmatprep.subr.bf16.mxu0 0
        %804 = vmatpush1.bf16.xpose.msra.mxu0 0
        %805 = vmatprep.subr.bf16.mxu0 0
        %806 = vmatpush1.bf16.xpose.msra.mxu0 0
        %807 = vmatprep.subr.bf16.mxu0 0
        %808 = vmatpush1.bf16.xpose.msra.mxu0 0
        %809 = vmatprep.subr.bf16.mxu0 0
        %810 = vmatpush1.bf16.xpose.msra.mxu0 0
        %811 = vmatprep.subr.bf16.mxu0 0
        %812 = vmatpush1.bf16.xpose.msra.mxu0 0
        %813 = vmatprep.subr.bf16.mxu0 0
        %814 = vmatpush1.bf16.xpose.msra.mxu0 0
        %815 = vmatprep.subr.bf16.mxu0 0
        %816 = vmatpush1.bf16.xpose.msra.mxu0 0
        %817 = vmatprep.subr.bf16.mxu0 0
        %818 = vmatpush1.bf16.xpose.msra.mxu0 0
        %819 = vmatprep.mubr.bf16.mxu0 0
        %820 = vmatmul.mubr.bf16.gmra.mrb[0].mxu0 %v782
        %v821 = vpop.f32.mrb[0].mxu0
        %v822 = vadd.f32 0.0, %v821
        %v823 = vpop.f32.mrb[0].mxu0
        %v824 = vpop.f32.mrb[0].mxu0
        %v825 = vpop.f32.mrb[0].mxu0
        %826 = vdwg.mxu0
        %828 = vrot.lane.b32.xlu0 %v726, 96
        %v829 = vpop.permute.xlu0 %828
        %v831 = vsel %vm731, %v726, 0
        %v834 = vsel %vm731, %v829, 0
        %836 = vmatprep.subr.bf16.mxu0 0
        %837 = vmatpush1.bf16.xpose.msra.mxu0 %v834
        %838 = vmatprep.subr.bf16.mxu0 0
        %839 = vmatpush1.bf16.xpose.msra.mxu0 0
        %840 = vmatprep.subr.bf16.mxu0 0
        %841 = vmatpush1.bf16.xpose.msra.mxu0 0
        %842 = vmatprep.subr.bf16.mxu0 0
        %843 = vmatpush1.bf16.xpose.msra.mxu0 0
        %844 = vmatprep.subr.bf16.mxu0 0
        %845 = vmatpush1.bf16.xpose.msra.mxu0 0
        %846 = vmatprep.subr.bf16.mxu0 0
        %847 = vmatpush1.bf16.xpose.msra.mxu0 0
        %848 = vmatprep.subr.bf16.mxu0 0
        %849 = vmatpush1.bf16.xpose.msra.mxu0 0
        %850 = vmatprep.subr.bf16.mxu0 0
        %851 = vmatpush1.bf16.xpose.msra.mxu0 0
        %852 = vmatprep.subr.bf16.mxu0 0
        %853 = vmatpush1.bf16.xpose.msra.mxu0 0
        %854 = vmatprep.subr.bf16.mxu0 0
        %855 = vmatpush1.bf16.xpose.msra.mxu0 0
        %856 = vmatprep.subr.bf16.mxu0 0
        %857 = vmatpush1.bf16.xpose.msra.mxu0 0
        %858 = vmatprep.subr.bf16.mxu0 0
        %859 = vmatpush1.bf16.xpose.msra.mxu0 0
        %860 = vmatprep.subr.bf16.mxu0 0
        %861 = vmatpush1.bf16.xpose.msra.mxu0 0
        %862 = vmatprep.subr.bf16.mxu0 0
        %863 = vmatpush1.bf16.xpose.msra.mxu0 0
        %864 = vmatprep.subr.bf16.mxu0 0
        %865 = vmatpush1.bf16.xpose.msra.mxu0 0
        %866 = vmatprep.subr.bf16.mxu0 0
        %867 = vmatpush1.bf16.xpose.msra.mxu0 0
        %868 = vmatprep.mubr.bf16.mxu0 0
        %869 = vmatmul.mubr.bf16.gmra.mrb[0].mxu0 %v831
        %v870 = vpop.f32.mrb[0].mxu0
        %v871 = vadd.f32 0.0, %v870
        %v872 = vpop.f32.mrb[0].mxu0
        %v873 = vpop.f32.mrb[0].mxu0
        %v874 = vpop.f32.mrb[0].mxu0
        %875 = vdwg.mxu0
        %877 = vrot.lane.b32.xlu0 %v727, 96
        %v878 = vpop.permute.xlu0 %877
        %v880 = vsel %vm731, %v727, 0
        %v883 = vsel %vm731, %v878, 0
        %885 = vmatprep.subr.bf16.mxu0 0
        %886 = vmatpush1.bf16.xpose.msra.mxu0 %v883
        %887 = vmatprep.subr.bf16.mxu0 0
        %888 = vmatpush1.bf16.xpose.msra.mxu0 0
        %889 = vmatprep.subr.bf16.mxu0 0
        %890 = vmatpush1.bf16.xpose.msra.mxu0 0
        %891 = vmatprep.subr.bf16.mxu0 0
        %892 = vmatpush1.bf16.xpose.msra.mxu0 0
        %893 = vmatprep.subr.bf16.mxu0 0
        %894 = vmatpush1.bf16.xpose.msra.mxu0 0
        %895 = vmatprep.subr.bf16.mxu0 0
        %896 = vmatpush1.bf16.xpose.msra.mxu0 0
        %897 = vmatprep.subr.bf16.mxu0 0
        %898 = vmatpush1.bf16.xpose.msra.mxu0 0
        %899 = vmatprep.subr.bf16.mxu0 0
        %900 = vmatpush1.bf16.xpose.msra.mxu0 0
        %901 = vmatprep.subr.bf16.mxu0 0
        %902 = vmatpush1.bf16.xpose.msra.mxu0 0
        %903 = vmatprep.subr.bf16.mxu0 0
        %904 = vmatpush1.bf16.xpose.msra.mxu0 0
        %905 = vmatprep.subr.bf16.mxu0 0
        %906 = vmatpush1.bf16.xpose.msra.mxu0 0
        %907 = vmatprep.subr.bf16.mxu0 0
        %908 = vmatpush1.bf16.xpose.msra.mxu0 0
        %909 = vmatprep.subr.bf16.mxu0 0
        %910 = vmatpush1.bf16.xpose.msra.mxu0 0
        %911 = vmatprep.subr.bf16.mxu0 0
        %912 = vmatpush1.bf16.xpose.msra.mxu0 0
        %913 = vmatprep.subr.bf16.mxu0 0
        %914 = vmatpush1.bf16.xpose.msra.mxu0 0
        %915 = vmatprep.subr.bf16.mxu0 0
        %916 = vmatpush1.bf16.xpose.msra.mxu0 0
        %917 = vmatprep.mubr.bf16.mxu0 0
        %918 = vmatmul.mubr.bf16.gmra.mrb[0].mxu0 %v880
        %v919 = vpop.f32.mrb[0].mxu0
        %v920 = vadd.f32 0.0, %v919
        %v921 = vpop.f32.mrb[0].mxu0
        %v922 = vpop.f32.mrb[0].mxu0
        %v923 = vpop.f32.mrb[0].mxu0
        %924 = vdwg.mxu0
        %v925 = vsel %vm731, %v773, -inf
        %926 = vmax.xlane.f32.xlu0 %v925
        %v927 = vpop.xlane.xlu0 %926
        %v928 = vsel %vm731, %v822, -inf
        %929 = vmax.xlane.f32.xlu0 %v928
        %v930 = vpop.xlane.xlu0 %929
        %v931 = vsel %vm731, %v871, -inf
        %932 = vmax.xlane.f32.xlu0 %v931
        %v933 = vpop.xlane.xlu0 %932
        %v934 = vsel %vm731, %v920, -inf
        %935 = vmax.xlane.f32.xlu0 %v934
        %v936 = vpop.xlane.xlu0 %935
        %v937 = vsub.f32 %v773, %v927
        %v938 = vsub.f32 %v822, %v930
        %v939 = vsub.f32 %v871, %v933
        %v940 = vsub.f32 %v920, %v936
        %v941 = vmul.f32 %v937, 1.442695
        %v942 = vpow.pop %v941
        %v943 = vmul.f32 %v938, 1.442695
        %v944 = vpow.pop %v943
        %v945 = vmul.f32 %v939, 1.442695
        %v946 = vpow.pop %v945
        %v947 = vmul.f32 %v940, 1.442695
        %v948 = vpow.pop %v947
        %v949 = vsel %vm731, %v942, 0.0
        %950 = vadd.xlane.f32.xlu0 %v949
        %v951 = vpop.xlane.xlu0 %950
        %v952 = vsel %vm731, %v944, 0.0
        %953 = vadd.xlane.f32.xlu0 %v952
        %v954 = vpop.xlane.xlu0 %953
        %v955 = vsel %vm731, %v946, 0.0
        %956 = vadd.xlane.f32.xlu0 %v955
        %v957 = vpop.xlane.xlu0 %956
        %v958 = vsel %vm731, %v948, 0.0
        %959 = vadd.xlane.f32.xlu0 %v958
        %v960 = vpop.xlane.xlu0 %959
        %v961 = vpack.c.bf16 %v942, %v942
        %v962 = vpack.c.bf16 %v944, %v944
        %v963 = vpack.c.bf16 %v946, %v946
        %v964 = vpack.c.bf16 %v948, %v948
        %965 = vrot.lane.b32.xlu0 %v724, 64
        %v966 = vpop.permute.xlu0 %965
        %v968 = vsel %vm731, %v961, 0
        %vm970 = vcmask 1043456
        %v972 = vsel %vm970, %v966, 0
        %974 = vmatprep.subr.bf16.mxu0 0
        %975 = vmatpush1.bf16.msra.mxu0 %v972
        %976 = vmatprep.subr.bf16.mxu0 0
        %977 = vmatpush1.bf16.msra.mxu0 0
        %978 = vmatprep.subr.bf16.mxu0 0
        %979 = vmatpush1.bf16.msra.mxu0 0
        %980 = vmatprep.subr.bf16.mxu0 0
        %981 = vmatpush1.bf16.msra.mxu0 0
        %982 = vmatprep.subr.bf16.mxu0 0
        %983 = vmatpush1.bf16.msra.mxu0 0
        %984 = vmatprep.subr.bf16.mxu0 0
        %985 = vmatpush1.bf16.msra.mxu0 0
        %986 = vmatprep.subr.bf16.mxu0 0
        %987 = vmatpush1.bf16.msra.mxu0 0
        %988 = vmatprep.subr.bf16.mxu0 0
        %989 = vmatpush1.bf16.msra.mxu0 0
        %990 = vmatprep.subr.bf16.mxu0 0
        %991 = vmatpush1.bf16.msra.mxu0 0
        %992 = vmatprep.subr.bf16.mxu0 0
        %993 = vmatpush1.bf16.msra.mxu0 0
        %994 = vmatprep.subr.bf16.mxu0 0
        %995 = vmatpush1.bf16.msra.mxu0 0
        %996 = vmatprep.subr.bf16.mxu0 0
        %997 = vmatpush1.bf16.msra.mxu0 0
        %998 = vmatprep.subr.bf16.mxu0 0
        %999 = vmatpush1.bf16.msra.mxu0 0
        %1000 = vmatprep.subr.bf16.mxu0 0
        %1001 = vmatpush1.bf16.msra.mxu0 0
        %1002 = vmatprep.subr.bf16.mxu0 0
        %1003 = vmatpush1.bf16.msra.mxu0 0
        %1004 = vmatprep.subr.bf16.mxu0 0
        %1005 = vmatpush1.bf16.msra.mxu0 0
        %1006 = vmatprep.mubr.bf16.mxu0 0
        %1007 = vmatmul.mubr.bf16.gmra.mrb[0].mxu0 %v968
        %v1008 = vpop.f32.mrb[0].mxu0
        %v1009 = vadd.f32 0.0, %v1008
        %v1010 = vpop.f32.mrb[0].mxu0
        %v1011 = vpop.f32.mrb[0].mxu0
        %v1012 = vpop.f32.mrb[0].mxu0
        %1013 = vdwg.mxu0
        %1014 = vrot.lane.b32.xlu0 %v725, 64
        %v1015 = vpop.permute.xlu0 %1014
        %v1017 = vsel %vm731, %v962, 0
        %v1020 = vsel %vm970, %v1015, 0
        %1022 = vmatprep.subr.bf16.mxu0 0
        %1023 = vmatpush1.bf16.msra.mxu0 %v1020
        %1024 = vmatprep.subr.bf16.mxu0 0
        %1025 = vmatpush1.bf16.msra.mxu0 0
        %1026 = vmatprep.subr.bf16.mxu0 0
        %1027 = vmatpush1.bf16.msra.mxu0 0
        %1028 = vmatprep.subr.bf16.mxu0 0
        %1029 = vmatpush1.bf16.msra.mxu0 0
        %1030 = vmatprep.subr.bf16.mxu0 0
        %1031 = vmatpush1.bf16.msra.mxu0 0
        %1032 = vmatprep.subr.bf16.mxu0 0
        %1033 = vmatpush1.bf16.msra.mxu0 0
        %1034 = vmatprep.subr.bf16.mxu0 0
        %1035 = vmatpush1.bf16.msra.mxu0 0
        %1036 = vmatprep.subr.bf16.mxu0 0
        %1037 = vmatpush1.bf16.msra.mxu0 0
        %1038 = vmatprep.subr.bf16.mxu0 0
        %1039 = vmatpush1.bf16.msra.mxu0 0
        %1040 = vmatprep.subr.bf16.mxu0 0
        %1041 = vmatpush1.bf16.msra.mxu0 0
        %1042 = vmatprep.subr.bf16.mxu0 0
        %1043 = vmatpush1.bf16.msra.mxu0 0
        %1044 = vmatprep.subr.bf16.mxu0 0
        %1045 = vmatpush1.bf16.msra.mxu0 0
        %1046 = vmatprep.subr.bf16.mxu0 0
        %1047 = vmatpush1.bf16.msra.mxu0 0
        %1048 = vmatprep.subr.bf16.mxu0 0
        %1049 = vmatpush1.bf16.msra.mxu0 0
        %1050 = vmatprep.subr.bf16.mxu0 0
        %1051 = vmatpush1.bf16.msra.mxu0 0
        %1052 = vmatprep.subr.bf16.mxu0 0
        %1053 = vmatpush1.bf16.msra.mxu0 0
        %1054 = vmatprep.mubr.bf16.mxu0 0
        %1055 = vmatmul.mubr.bf16.gmra.mrb[0].mxu0 %v1017
        %v1056 = vpop.f32.mrb[0].mxu0
        %v1057 = vadd.f32 0.0, %v1056
        %v1058 = vpop.f32.mrb[0].mxu0
        %v1059 = vpop.f32.mrb[0].mxu0
        %v1060 = vpop.f32.mrb[0].mxu0
        %1061 = vdwg.mxu0
        %1062 = vrot.lane.b32.xlu0 %v726, 64
        %v1063 = vpop.permute.xlu0 %1062
        %v1065 = vsel %vm731, %v963, 0
        %v1068 = vsel %vm970, %v1063, 0
        %1070 = vmatprep.subr.bf16.mxu0 0
        %1071 = vmatpush1.bf16.msra.mxu0 %v1068
        %1072 = vmatprep.subr.bf16.mxu0 0
        %1073 = vmatpush1.bf16.msra.mxu0 0
        %1074 = vmatprep.subr.bf16.mxu0 0
        %1075 = vmatpush1.bf16.msra.mxu0 0
        %1076 = vmatprep.subr.bf16.mxu0 0
        %1077 = vmatpush1.bf16.msra.mxu0 0
        %1078 = vmatprep.subr.bf16.mxu0 0
        %1079 = vmatpush1.bf16.msra.mxu0 0
        %1080 = vmatprep.subr.bf16.mxu0 0
        %1081 = vmatpush1.bf16.msra.mxu0 0
        %1082 = vmatprep.subr.bf16.mxu0 0
        %1083 = vmatpush1.bf16.msra.mxu0 0
        %1084 = vmatprep.subr.bf16.mxu0 0
        %1085 = vmatpush1.bf16.msra.mxu0 0
        %1086 = vmatprep.subr.bf16.mxu0 0
        %1087 = vmatpush1.bf16.msra.mxu0 0
        %1088 = vmatprep.subr.bf16.mxu0 0
        %1089 = vmatpush1.bf16.msra.mxu0 0
        %1090 = vmatprep.subr.bf16.mxu0 0
        %1091 = vmatpush1.bf16.msra.mxu0 0
        %1092 = vmatprep.subr.bf16.mxu0 0
        %1093 = vmatpush1.bf16.msra.mxu0 0
        %1094 = vmatprep.subr.bf16.mxu0 0
        %1095 = vmatpush1.bf16.msra.mxu0 0
        %1096 = vmatprep.subr.bf16.mxu0 0
        %1097 = vmatpush1.bf16.msra.mxu0 0
        %1098 = vmatprep.subr.bf16.mxu0 0
        %1099 = vmatpush1.bf16.msra.mxu0 0
        %1100 = vmatprep.subr.bf16.mxu0 0
        %1101 = vmatpush1.bf16.msra.mxu0 0
        %1102 = vmatprep.mubr.bf16.mxu0 0
        %1103 = vmatmul.mubr.bf16.gmra.mrb[0].mxu0 %v1065
        %v1104 = vpop.f32.mrb[0].mxu0
        %v1105 = vadd.f32 0.0, %v1104
        %v1106 = vpop.f32.mrb[0].mxu0
        %v1107 = vpop.f32.mrb[0].mxu0
        %v1108 = vpop.f32.mrb[0].mxu0
        %1109 = vdwg.mxu0
        %1110 = vrot.lane.b32.xlu0 %v727, 64
        %v1111 = vpop.permute.xlu0 %1110
        %v1113 = vsel %vm731, %v964, 0
        %v1116 = vsel %vm970, %v1111, 0
        %1118 = vmatprep.subr.bf16.mxu0 0
        %1119 = vmatpush1.bf16.msra.mxu0 %v1116
        %1120 = vmatprep.subr.bf16.mxu0 0
        %1121 = vmatpush1.bf16.msra.mxu0 0
        %1122 = vmatprep.subr.bf16.mxu0 0
        %1123 = vmatpush1.bf16.msra.mxu0 0
        %1124 = vmatprep.subr.bf16.mxu0 0
        %1125 = vmatpush1.bf16.msra.mxu0 0
        %1126 = vmatprep.subr.bf16.mxu0 0
        %1127 = vmatpush1.bf16.msra.mxu0 0
        %1128 = vmatprep.subr.bf16.mxu0 0
        %1129 = vmatpush1.bf16.msra.mxu0 0
        %1130 = vmatprep.subr.bf16.mxu0 0
        %1131 = vmatpush1.bf16.msra.mxu0 0
        %1132 = vmatprep.subr.bf16.mxu0 0
        %1133 = vmatpush1.bf16.msra.mxu0 0
        %1134 = vmatprep.subr.bf16.mxu0 0
        %1135 = vmatpush1.bf16.msra.mxu0 0
        %1136 = vmatprep.subr.bf16.mxu0 0
        %1137 = vmatpush1.bf16.msra.mxu0 0
        %1138 = vmatprep.subr.bf16.mxu0 0
        %1139 = vmatpush1.bf16.msra.mxu0 0
        %1140 = vmatprep.subr.bf16.mxu0 0
        %1141 = vmatpush1.bf16.msra.mxu0 0
        %1142 = vmatprep.subr.bf16.mxu0 0
        %1143 = vmatpush1.bf16.msra.mxu0 0
        %1144 = vmatprep.subr.bf16.mxu0 0
        %1145 = vmatpush1.bf16.msra.mxu0 0
        %1146 = vmatprep.subr.bf16.mxu0 0
        %1147 = vmatpush1.bf16.msra.mxu0 0
        %1148 = vmatprep.subr.bf16.mxu0 0
        %1149 = vmatpush1.bf16.msra.mxu0 0
        %1150 = vmatprep.mubr.bf16.mxu0 0
        %1151 = vmatmul.mubr.bf16.gmra.mrb[0].mxu0 %v1113
        %v1152 = vpop.f32.mrb[0].mxu0
        %v1153 = vadd.f32 0.0, %v1152
        %v1154 = vpop.f32.mrb[0].mxu0
        %v1155 = vpop.f32.mrb[0].mxu0
        %v1156 = vpop.f32.mrb[0].mxu0
        %1157 = vdwg.mxu0
        %v1158 = vrcp.pop %v951
        %v1159 = vrcp.pop %v954
        %v1160 = vrcp.pop %v957
        %v1161 = vrcp.pop %v960
        %v1162 = vmul.f32 %v1009, %v1158
        %v1163 = vmul.f32 %v1057, %v1159
        %v1164 = vmul.f32 %v1105, %v1160
        %v1165 = vmul.f32 %v1153, %v1161
        %1167 = vrot.lane.b32.xlu0 %v1163, 8
        %v1168 = vpop.permute.xlu0 %1167
        %1171 = vrot.lane.b32.xlu0 %v1164, 16
        %v1172 = vpop.permute.xlu0 %1171
        %1175 = vrot.lane.b32.xlu0 %v1165, 24
        %v1176 = vpop.permute.xlu0 %1175
        %v1178 = vsel %vm731, %v1162, %v1168
        %vm1179 = vcmask 130048
        %v1180 = vsel %vm1179, %v1178, %v1172
        %vm1181 = vcmask 195584
        %v1182 = vsel %vm1181, %v1180, %v1176
        %v1183 = vpack.c.bf16 %v1182, %v1182
        %v1184 = vld [vmem:[#allocation11] sm:$0xf]
        %v1185 = vld [vmem:[#allocation11 + $0x4] sm:$0xf]
        %v1186 = vld [vmem:[#allocation11 + $0x8] sm:$0xf]
        %v1187 = vld [vmem:[#allocation11 + $0xc] sm:$0xf]
        %v1192 = vunpack.c.l.b16 %v1184
        %v1193 = vunpack.c.l.b16 %v1185
        %v1194 = vunpack.c.l.b16 %v1186
        %v1195 = vunpack.c.l.b16 %v1187
        %v1196 = vpack.c.b16 %v1193, %v1192
        %v1197 = vpack.c.b16 %v1195, %v1194
        %v1201 = vsel %vm618, %v1183, 0
        %1203 = vmatprep.subr.bf16.mxu0 0
        %1204 = vmatpush1.bf16.msra.mxu0 %v1196
        %1205 = vmatprep.subr.bf16.mxu0 0
        %1206 = vmatpush1.bf16.msra.mxu0 %v1197
        %1207 = vmatprep.subr.bf16.mxu0 0
        %1208 = vmatpush1.bf16.msra.mxu0 0
        %1209 = vmatprep.subr.bf16.mxu0 0
        %1210 = vmatpush1.bf16.msra.mxu0 0
        %1211 = vmatprep.subr.bf16.mxu0 0
        %1212 = vmatpush1.bf16.msra.mxu0 0
        %1213 = vmatprep.subr.bf16.mxu0 0
        %1214 = vmatpush1.bf16.msra.mxu0 0
        %1215 = vmatprep.subr.bf16.mxu0 0
        %1216 = vmatpush1.bf16.msra.mxu0 0
        %1217 = vmatprep.subr.bf16.mxu0 0
        %1218 = vmatpush1.bf16.msra.mxu0 0
        %1219 = vmatprep.subr.bf16.mxu0 0
        %1220 = vmatpush1.bf16.msra.mxu0 0
        %1221 = vmatprep.subr.bf16.mxu0 0
        %1222 = vmatpush1.bf16.msra.mxu0 0
        %1223 = vmatprep.subr.bf16.mxu0 0
        %1224 = vmatpush1.bf16.msra.mxu0 0
        %1225 = vmatprep.subr.bf16.mxu0 0
        %1226 = vmatpush1.bf16.msra.mxu0 0
        %1227 = vmatprep.subr.bf16.mxu0 0
        %1228 = vmatpush1.bf16.msra.mxu0 0
        %1229 = vmatprep.subr.bf16.mxu0 0
        %1230 = vmatpush1.bf16.msra.mxu0 0
        %1231 = vmatprep.subr.bf16.mxu0 0
        %1232 = vmatpush1.bf16.msra.mxu0 0
        %1233 = vmatprep.subr.bf16.mxu0 0
        %1234 = vmatpush1.bf16.msra.mxu0 0
        %1235 = vmatprep.mubr.bf16.mxu0 0
        %1236 = vmatmul.mubr.bf16.gmra.mrb[0].mxu0 %v1201
        %v1237 = vpop.f32.mrb[0].mxu0
        %v1238 = vadd.f32 0.0, %v1237
        %v1239 = vpop.f32.mrb[0].mxu0
        %v1240 = vpop.f32.mrb[0].mxu0
        %v1241 = vpop.f32.mrb[0].mxu0
        %1242 = vdwg.mxu0
        %v1243 = vadd.f32 %v615, %v1238
        %v1244 = vld [vmem:[#allocation13] sm:$0x1]
        %v1246 = vlaneseq
        %v1247 = vshrl.u32 %v1246, 7
        %v1248 = vsub.s32 0, %v1247
        %v1249 = vrot.slane %v1244, %v1248
        %v1251 = vadd.f32 %v1243, %v1249
        %v1252 = vld [vmem:[#allocation14] sm:$0x1]
        %v1253 = vld [vmem:[#allocation16] sm:$0x1]
        %v1254 = vsel %vm618, %v1251, 0.0
        %1255 = vadd.xlane.f32.xlu0 %v1254
        %v1256 = vpop.xlane.xlu0 %1255
        %v1257 = vmul.f32 %v1256, %v622
        %v1258 = vsub.f32 %v1251, %v1257
        %v1259 = vmul.f32 %v1258, %v1258
        %v1260 = vsel %vm618, %v1259, 0.0
        %1261 = vadd.xlane.f32.xlu0 %v1260
        %v1262 = vpop.xlane.xlu0 %1261
        %v1263 = vmul.f32 %v1262, %v622
        %v1264 = vadd.f32 %v1263, 1e-05
        %v1265 = vrsqrt.pop %v1264
        %v1266 = vmul.f32 %v1258, %v1265
        %v1268 = vlaneseq
        %v1269 = vshrl.u32 %v1268, 7
        %v1270 = vsub.s32 0, %v1269
        %v1271 = vrot.slane %v1252, %v1270
        %v1273 = vmul.f32 %v1266, %v1271
        %v1275 = vlaneseq
        %v1276 = vshrl.u32 %v1275, 7
        %v1277 = vsub.s32 0, %v1276
        %v1278 = vrot.slane %v1253, %v1277
        %v1280 = vadd.f32 %v1273, %v1278
        %v1281 = vpack.c.bf16 %v1280, %v1280
        %v1282 = vld [vmem:[#allocation17] sm:$0xf]
        %v1283 = vld [vmem:[#allocation17 + $0x4] sm:$0xf]
        %v1284 = vld [vmem:[#allocation17 + $0x8] sm:$0xf]
        %v1285 = vld [vmem:[#allocation17 + $0xc] sm:$0xf]
        %v1286 = vld [vmem:[#allocation19] sm:$0x1]
        %v1288 = vlaneseq
        %v1289 = vshrl.u32 %v1288, 7
        %v1290 = vsub.s32 0, %v1289
        %v1291 = vrot.slane %v1286, %v1290
        %v1297 = vunpack.c.l.b16 %v1282
        %v1298 = vunpack.c.l.b16 %v1283
        %v1299 = vunpack.c.l.b16 %v1284
        %v1300 = vunpack.c.l.b16 %v1285
        %v1301 = vpack.c.b16 %v1298, %v1297
        %v1302 = vpack.c.b16 %v1300, %v1299
        %v1306 = vsel %vm618, %v1281, 0
        %1308 = vmatprep.subr.bf16.mxu0 0
        %1309 = vmatpush1.bf16.msra.mxu0 %v1301
        %1310 = vmatprep.subr.bf16.mxu0 0
        %1311 = vmatpush1.bf16.msra.mxu0 %v1302
        %1312 = vmatprep.subr.bf16.mxu0 0
        %1313 = vmatpush1.bf16.msra.mxu0 0
        %1314 = vmatprep.subr.bf16.mxu0 0
        %1315 = vmatpush1.bf16.msra.mxu0 0
        %1316 = vmatprep.subr.bf16.mxu0 0
        %1317 = vmatpush1.bf16.msra.mxu0 0
        %1318 = vmatprep.subr.bf16.mxu0 0
        %1319 = vmatpush1.bf16.msra.mxu0 0
        %1320 = vmatprep.subr.bf16.mxu0 0
        %1321 = vmatpush1.bf16.msra.mxu0 0
        %1322 = vmatprep.subr.bf16.mxu0 0
        %1323 = vmatpush1.bf16.msra.mxu0 0
        %1324 = vmatprep.subr.bf16.mxu0 0
        %1325 = vmatpush1.bf16.msra.mxu0 0
        %1326 = vmatprep.subr.bf16.mxu0 0
        %1327 = vmatpush1.bf16.msra.mxu0 0
        %1328 = vmatprep.subr.bf16.mxu0 0
        %1329 = vmatpush1.bf16.msra.mxu0 0
        %1330 = vmatprep.subr.bf16.mxu0 0
        %1331 = vmatpush1.bf16.msra.mxu0 0
        %1332 = vmatprep.subr.bf16.mxu0 0
        %1333 = vmatpush1.bf16.msra.mxu0 0
        %1334 = vmatprep.subr.bf16.mxu0 0
        %1335 = vmatpush1.bf16.msra.mxu0 0
        %1336 = vmatprep.subr.bf16.mxu0 0
        %1337 = vmatpush1.bf16.msra.mxu0 0
        %1338 = vmatprep.subr.bf16.mxu0 0
        %1339 = vmatpush1.bf16.msra.mxu0 0
        %1340 = vmatprep.mubr.bf16.mxu0 0
        %1341 = vmatmul.mubr.bf16.gmra.mrb[0].mxu0 %v1306
        %v1342 = vpop.f32.mrb[0].mxu0
        %v1343 = vadd.f32 %v1291, %v1342
        %v1344 = vpop.f32.mrb[0].mxu0
        %v1345 = vpop.f32.mrb[0].mxu0
        %v1346 = vpop.f32.mrb[0].mxu0
        %1347 = vdwg.mxu0
        %v1348 = vmul.f32 %v1343, 0.5
        %v1349 = vmul.f32 %v1343, 0.70710677
        %v1350 = verf.f32.pop %v1349
        %v1351 = vadd.f32 %v1350, 1.0
        %v1352 = vmul.f32 %v1348, %v1351
        %v1353 = vpack.c.bf16 %v1352, %v1352
        %v1354 = vld [vmem:[#allocation20] sm:$0xf]
        %v1355 = vld [vmem:[#allocation20 + $0x4] sm:$0xf]
        %v1356 = vld [vmem:[#allocation20 + $0x8] sm:$0xf]
        %v1357 = vld [vmem:[#allocation20 + $0xc] sm:$0xf]
        %v1358 = vld [vmem:[#allocation20 + $0x10] sm:$0xf]
        %v1359 = vld [vmem:[#allocation20 + $0x14] sm:$0xf]
        %v1360 = vld [vmem:[#allocation20 + $0x18] sm:$0xf]
        %v1361 = vld [vmem:[#allocation20 + $0x1c] sm:$0xf]
        %v1362 = vld [vmem:[#allocation22] sm:$0x1]
        %v1364 = vlaneseq
        %v1365 = vshrl.u32 %v1364, 7
        %v1366 = vsub.s32 0, %v1365
        %v1367 = vrot.slane %v1362, %v1366
        %v1377 = vunpack.c.l.b16 %v1354
        %v1378 = vunpack.c.l.b16 %v1355
        %v1379 = vunpack.c.l.b16 %v1356
        %v1380 = vunpack.c.l.b16 %v1357
        %v1381 = vunpack.c.l.b16 %v1358
        %v1382 = vunpack.c.l.b16 %v1359
        %v1383 = vunpack.c.l.b16 %v1360
        %v1384 = vunpack.c.l.b16 %v1361
        %v1385 = vpack.c.b16 %v1378, %v1377
        %v1386 = vpack.c.b16 %v1380, %v1379
        %v1387 = vpack.c.b16 %v1382, %v1381
        %v1388 = vpack.c.b16 %v1384, %v1383
        %vm1393 = vcmask 523264
        %v1395 = vsel %vm1393, %v1353, 0
        %1397 = vmatprep.subr.bf16.mxu0 0
        %1398 = vmatpush1.bf16.msra.mxu0 %v1385
        %1399 = vmatprep.subr.bf16.mxu0 0
        %1400 = vmatpush1.bf16.msra.mxu0 %v1386
        %1401 = vmatprep.subr.bf16.mxu0 0
        %1402 = vmatpush1.bf16.msra.mxu0 %v1387
        %1403 = vmatprep.subr.bf16.mxu0 0
        %1404 = vmatpush1.bf16.msra.mxu0 %v1388
        %1405 = vmatprep.subr.bf16.mxu0 0
        %1406 = vmatpush1.bf16.msra.mxu0 0
        %1407 = vmatprep.subr.bf16.mxu0 0
        %1408 = vmatpush1.bf16.msra.mxu0 0
        %1409 = vmatprep.subr.bf16.mxu0 0
        %1410 = vmatpush1.bf16.msra.mxu0 0
        %1411 = vmatprep.subr.bf16.mxu0 0
        %1412 = vmatpush1.bf16.msra.mxu0 0
        %1413 = vmatprep.subr.bf16.mxu0 0
        %1414 = vmatpush1.bf16.msra.mxu0 0
        %1415 = vmatprep.subr.bf16.mxu0 0
        %1416 = vmatpush1.bf16.msra.mxu0 0
        %1417 = vmatprep.subr.bf16.mxu0 0
        %1418 = vmatpush1.bf16.msra.mxu0 0
        %1419 = vmatprep.subr.bf16.mxu0 0
        %1420 = vmatpush1.bf16.msra.mxu0 0
        %1421 = vmatprep.subr.bf16.mxu0 0
        %1422 = vmatpush1.bf16.msra.mxu0 0
        %1423 = vmatprep.subr.bf16.mxu0 0
        %1424 = vmatpush1.bf16.msra.mxu0 0
        %1425 = vmatprep.subr.bf16.mxu0 0
        %1426 = vmatpush1.bf16.msra.mxu0 0
        %1427 = vmatprep.subr.bf16.mxu0 0
        %1428 = vmatpush1.bf16.msra.mxu0 0
        %1429 = vmatprep.mubr.bf16.mxu0 0
        %1430 = vmatmul.mubr.bf16.gmra.mrb[0].mxu0 %v1395
        %v1431 = vpop.f32.mrb[0].mxu0
        %v1432 = vadd.f32 %v1367, %v1431
        %v1433 = vpop.f32.mrb[0].mxu0
        %v1434 = vpop.f32.mrb[0].mxu0
        %v1435 = vpop.f32.mrb[0].mxu0
        %1436 = vdwg.mxu0
        %v1437 = vadd.f32 %v1251, %v1432
        %1438 = vst.msk [vmem:[%s613] sm:$0xff] %vm618, %v1437
        %s1439 = sand.u32 %s322, 1
        %s1440 = scalar_lea.sflag [#allocation4], %s1439
        %s1441 = sand.u32 %s322, 1
        %s1442 = smul.addr %s1441, 8
        %s1443 = scalar_lea.vmem [#allocation23], %s1442
        // Predicated region
        $region125: #{tpu_custom_call.1} parent=71 // pred_check
          %p1444 = pneg %p332
        $region126: #{tpu_custom_call.1} parent=71 // pred_check_branch
          %1446 = sbr.rel (%p1444) target = $region128
        $region127: #{tpu_custom_call.1} parent=71 // pred_region
          %s1448 = ssub.s32 128, 128
          %1449 = vsyncadd %s1440, %s1448
          %s1450 = smul.addr %s36, 128
          %s1451 = scalar_lea.hbm %s13, %s1450
          %s1453 = sshll.u32 %s1443, 4
          %s1454 = int_to_ptr.vmem [resolvable:$true] %s1453
          %1456 = dma.vmem_to_hbm [thread:$0]  %s1454, 128, %s1451, %s1440
        $region128: #{tpu_custom_call.1} parent=71 // pred_fallthru
          _
      $region72: #{tpu_custom_call.1} parent=5 // pred_fallthru
        _
      %p1457 = scmp.le.s32.totalorder 2, %s31
      // Predicated region
      $region129: #{tpu_custom_call.1} parent=5 // pred_check
        %p1458 = pneg %p1457
      $region130: #{tpu_custom_call.1} parent=5 // pred_check_branch
        %1460 = sbr.rel (%p1458) target = $region132
      $region131: #{tpu_custom_call.1} parent=5 // pred_region
        %s1461 = ssub.s32 %s31, 2
        // Predicated region
        $region133: #{tpu_custom_call.1} parent=131 // pred_check
          %p1462 = pneg %p338
        $region134: #{tpu_custom_call.1} parent=131 // pred_check_branch
          %1464 = sbr.rel (%p1462) target = $region136
        $region135: #{tpu_custom_call.1} parent=131 // pred_region
          %s1465 = sand.u32 %s323, 1
          %s1466 = scalar_lea.sflag [#allocation4], %s1465
          %s1467 = sand.u32 %s323, 1
          %s1468 = smul.addr %s1467, 8
          %s1469 = scalar_lea.vmem [#allocation23], %s1468
          %1470 = dma.done %s1466, 128
        $region136: #{tpu_custom_call.1} parent=131 // pred_fallthru
          _
      $region132: #{tpu_custom_call.1} parent=5 // pred_fallthru
        _
    $region6: #{tpu_custom_call.1} parent=1 // loop_footer
      %s35 = sadd.s32 1, %s31
    $region7: #{tpu_custom_call.1} parent=1 // loop_footer_branch
      %30 = sbr.rel target = $region3
    $region8: #{tpu_custom_call.1} parent=1 // loop_exit
      _
    %1471 = vsyncpa [#allocation3], 1
    %s1472 = scalar_lea.sflag [#allocation3], 1
    %1473 = vsyncpa %s1472, 1
    %1474 = vsyncpa [#allocation6], 1
    %1475 = vsyncpa [#allocation9], 1
    %1476 = vsyncpa [#allocation12], 1
    %1477 = vsyncpa [#allocation15], 1
    %1478 = vsyncpa [#allocation18], 1
    %1479 = vsyncpa [#allocation21], 1
    %1480 = vsyncpa [#allocation4], 1
    %s1481 = scalar_lea.sflag [#allocation4], 1
    %1482 = vsyncpa %s1481, 1

</llo_original>
